<compile_context>
chip_gen: v7x
topology: tpu7x:2x2x1
jax: 0.10.0
libtpu: 0.0.40
codegen_flags: <defaults>
</compile_context>

<pallas_src>
import jax
import jax.numpy as jnp
from jax.experimental import pallas as pl
from jax.experimental.pallas import tpu as pltpu


LN_EPS = 1e-5                       # torch.nn.LayerNorm default eps
_INV_SQRT2 = 0.7071067811865476


def _erf(x):
    # Abramowitz & Stegun 7.1.26 rational approximation, max abs error ~1.5e-7.
    a1, a2, a3, a4, a5 = (0.254829592, -0.284496736, 1.421413741,
                          -1.453152027, 1.061405429)
    p = 0.3275911
    ax = jnp.abs(x)
    t = 1.0 / (1.0 + p * ax)
    poly = ((((a5 * t + a4) * t + a3) * t + a2) * t + a1) * t
    y = 1.0 - poly * jnp.exp(-ax * ax)
    return jnp.where(x >= 0.0, y, -y)


def _gelu_exact(x):
    # PyTorch nn.GELU() default (approximate='none'): 0.5*x*(1+erf(x/sqrt(2)))
    return 0.5 * x * (1.0 + _erf(x * _INV_SQRT2))


def mlp_block_kernel(x_ref,            # (bm, D)  f32   row tile of tokens
                     g_ref, be_ref,    # (1, D)   f32   LayerNorm weight / bias
                     w1_ref, b1_ref,   # (D, M) bf16, (1, M) f32
                     w2_ref, b2_ref,   # (M, D) bf16, (1, D) f32
                     o_ref):           # (bm, D)  f32
    x = x_ref[...].astype(jnp.float32)

    # ---- LayerNorm over the lane (feature) dimension, f32 ----
    mean = jnp.mean(x, axis=-1, keepdims=True)
    xc = x - mean
    var = jnp.mean(xc * xc, axis=-1, keepdims=True)
    xn = xc * jax.lax.rsqrt(var + LN_EPS) * g_ref[...] + be_ref[...]

    # ---- Linear 1 (D -> M), MXU bf16 inputs, f32 accumulation ----
    h = jnp.dot(xn.astype(jnp.bfloat16), w1_ref[...],
                preferred_element_type=jnp.float32) + b1_ref[...]

    # ---- exact (erf) GELU in f32; (Dropout is identity at inference) ----
    h = _gelu_exact(h)

    # ---- Linear 2 (M -> D), MXU bf16 inputs, f32 accumulation ----
    y = jnp.dot(h.astype(jnp.bfloat16), w2_ref[...],
                preferred_element_type=jnp.float32) + b2_ref[...]

    # Lane-dense store: last dim D is a multiple of 128 -> unmasked vst.
    o_ref[...] = y.astype(o_ref.dtype)


def rtg_mlp_block(x, params, *, block_m=128):
    """x: (B, S, D) float32.  params: (gamma, beta, w1, b1, w2, b2).

    Computes  mlp(LayerNorm(x))  with  mlp = Linear(D,M) -> GELU -> Linear(M,D)
    (eval-mode: dropouts are identity).  Returns (B, S, D) float32.
    """
    gamma, beta, w1, b1, w2, b2 = params
    B, S, D = x.shape
    M = w1.shape[1]
    N = B * S

    bm = min(block_m, N)
    n_blocks = pl.cdiv(N, bm)
    n_pad = n_blocks * bm

    xf = x.reshape(N, D).astype(jnp.float32)        # free: contiguous reshape
    if n_pad != N:
        # zero rows are harmless through LN/MLP and are sliced off afterwards
        xf = jnp.pad(xf, ((0, n_pad - N), (0, 0)))

    gamma2 = gamma.reshape(1, D).astype(jnp.float32)
    beta2 = beta.reshape(1, D).astype(jnp.float32)
    w1b = w1.astype(jnp.bfloat16)                   # cast once in HBM
    w2b = w2.astype(jnp.bfloat16)
    b1r = b1.reshape(1, M).astype(jnp.float32)
    b2r = b2.reshape(1, D).astype(jnp.float32)

    # Explicit VMEM budget: double-buffered in/out tiles + bf16 weights
    # (double-buffered) + live f32 intermediates, with 2x margin, capped at
    # 64 MiB so the same choice is safe on v7x.
    vmem_est = (2 * 2 * bm * D * 4                  # x / out tiles (double-buffered)
                + 2 * 2 * (D * M + M * D)           # bf16 weights (double-buffered)
                + 6 * bm * max(D, M) * 4            # xn, h, y and temporaries (f32)
                + 4 * (2 * D + M) * 4)              # LN params + biases
    vmem_limit = int(min(max(2 * vmem_est, 8 << 20), 64 << 20))

    out = pl.pallas_call(
        mlp_block_kernel,
        out_shape=jax.ShapeDtypeStruct((n_pad, D), jnp.float32),
        grid_spec=pltpu.PrefetchScalarGridSpec(
            num_scalar_prefetch=0,
            grid=(n_blocks,),
            in_specs=[
                pl.BlockSpec((bm, D), lambda i: (i, 0)),   # x row tile
                pl.BlockSpec((1, D), lambda i: (0, 0)),    # LN gamma
                pl.BlockSpec((1, D), lambda i: (0, 0)),    # LN beta
                pl.BlockSpec((D, M), lambda i: (0, 0)),    # W1 (bf16)
                pl.BlockSpec((1, M), lambda i: (0, 0)),    # b1
                pl.BlockSpec((M, D), lambda i: (0, 0)),    # W2 (bf16)
                pl.BlockSpec((1, D), lambda i: (0, 0)),    # b2
            ],
            out_specs=pl.BlockSpec((bm, D), lambda i: (i, 0)),
        ),
        compiler_params=pltpu.CompilerParams(
            dimension_semantics=("parallel",),             # disjoint row tiles
            vmem_limit_bytes=vmem_limit,
        ),
    )(xf, gamma2, beta2, w1b, b1r, w2b, b2r)

    return out[:N].reshape(B, S, D)


# ---------------- pure-JAX f32 reference (for correctness check) ----------------
def rtg_mlp_block_ref(x, params):
    gamma, beta, w1, b1, w2, b2 = params
    x = x.astype(jnp.float32)
    mean = jnp.mean(x, axis=-1, keepdims=True)
    var = jnp.mean((x - mean) ** 2, axis=-1, keepdims=True)
    xn = (x - mean) * jax.lax.rsqrt(var + LN_EPS) * gamma + beta
    h = jax.nn.gelu(xn @ w1 + b1, approximate=False)       # exact erf GELU
    return h @ w2 + b2                                      # dropouts = identity


def init_params(key, embedding_dim, mlp_size):
    D, M = embedding_dim, mlp_size
    ks = jax.random.split(key, 6)
    gamma = 1.0 + 0.1 * jax.random.normal(ks[0], (D,), jnp.float32)
    beta = 0.1 * jax.random.normal(ks[1], (D,), jnp.float32)
    w1 = 0.05 * jax.random.normal(ks[2], (D, M), jnp.float32)
    b1 = 0.05 * jax.random.normal(ks[3], (M,), jnp.float32)
    w2 = 0.05 * jax.random.normal(ks[4], (M, D), jnp.float32)
    b2 = 0.05 * jax.random.normal(ks[5], (D,), jnp.float32)
    return (gamma, beta, w1, b1, w2, b2)


if __name__ == "__main__":
    # Small, lane-aligned shapes consistent with the module
    # (embedding_dim -> 4x mlp_size, both multiples of 128).
    B, S, D, M = 2, 128, 256, 1024
    key = jax.random.PRNGKey(0)
    kx, kp = jax.random.split(key)
    x = jax.random.normal(kx, (B, S, D), jnp.float32)
    params = init_params(kp, D, M)

    out = rtg_mlp_block(x, params)
    out = jax.block_until_ready(out)

    ref = rtg_mlp_block_ref(x, params)
    assert out.shape == (B, S, D)
    max_err = float(jnp.max(jnp.abs(out - ref)))
    # bf16 MXU inputs (f32 accumulation) vs f32 reference -> loosened tolerance.
    assert jnp.allclose(out, ref, rtol=5e-2, atol=5e-2), max_err

    print("KERNEL_OK")
</pallas_src>

<mosaic_0001>
module attributes {stable_mosaic.version = 11 : i64} {
  func.func @mlp_block_kernel(%arg0: i32, %arg1: memref<128x256xf32, #tpu.memory_space<vmem>>, %arg2: memref<1x256xf32, #tpu.memory_space<vmem>>, %arg3: memref<1x256xf32, #tpu.memory_space<vmem>>, %arg4: memref<256x1024xbf16, #tpu.memory_space<vmem>>, %arg5: memref<1x1024xf32, #tpu.memory_space<vmem>>, %arg6: memref<1024x256xbf16, #tpu.memory_space<vmem>>, %arg7: memref<1x256xf32, #tpu.memory_space<vmem>>, %arg8: memref<128x256xf32, #tpu.memory_space<vmem>>) attributes {dimension_semantics = [#tpu.dimension_semantics<parallel>], iteration_bounds = array<i64: 2>, scalar_prefetch = 0 : i64, scratch_operands = 0 : i64, tpu.core_type = #tpu.core_type<tc>, window_params = [{transform_indices = @transform_0, window_bounds = array<i64: 128, 256>}, {pipeline_mode = #tpu.pipeline_mode<synchronous>, transform_indices = @transform_1, window_bounds = array<i64: 1, 256>}, {pipeline_mode = #tpu.pipeline_mode<synchronous>, transform_indices = @transform_2, window_bounds = array<i64: 1, 256>}, {pipeline_mode = #tpu.pipeline_mode<synchronous>, transform_indices = @transform_3, window_bounds = array<i64: 256, 1024>}, {pipeline_mode = #tpu.pipeline_mode<synchronous>, transform_indices = @transform_4, window_bounds = array<i64: 1, 1024>}, {pipeline_mode = #tpu.pipeline_mode<synchronous>, transform_indices = @transform_5, window_bounds = array<i64: 1024, 256>}, {pipeline_mode = #tpu.pipeline_mode<synchronous>, transform_indices = @transform_6, window_bounds = array<i64: 1, 256>}, {transform_indices = @transform_7, window_bounds = array<i64: 128, 256>}]} {
    %c0 = arith.constant 0 : index
    %c0_0 = arith.constant 0 : index
    %0 = vector.load %arg1[%c0, %c0_0] : memref<128x256xf32, #tpu.memory_space<vmem>>, vector<128x256xf32>
    %cst = arith.constant dense<0.000000e+00> : vector<128xf32>
    %1 = vector.multi_reduction <add>, %0, %cst [1] : vector<128x256xf32> to vector<128xf32>
    %2 = vector.shape_cast %1 : vector<128xf32> to vector<128x1xf32>
    %cst_1 = arith.constant 2.560000e+02 : f32
    %3 = vector.broadcast %cst_1 : f32 to vector<128x1xf32>
    %4 = arith.divf %2, %3 : vector<128x1xf32>
    %5 = vector.broadcast %4 : vector<128x1xf32> to vector<128x256xf32>
    %6 = arith.subf %0, %5 : vector<128x256xf32>
    %7 = arith.mulf %6, %6 : vector<128x256xf32>
    %cst_2 = arith.constant dense<0.000000e+00> : vector<128xf32>
    %8 = vector.multi_reduction <add>, %7, %cst_2 [1] : vector<128x256xf32> to vector<128xf32>
    %9 = vector.shape_cast %8 : vector<128xf32> to vector<128x1xf32>
    %cst_3 = arith.constant 2.560000e+02 : f32
    %10 = vector.broadcast %cst_3 : f32 to vector<128x1xf32>
    %11 = arith.divf %9, %10 : vector<128x1xf32>
    %cst_4 = arith.constant 9.99999974E-6 : f32
    %12 = vector.broadcast %cst_4 : f32 to vector<128x1xf32>
    %13 = arith.addf %11, %12 : vector<128x1xf32>
    %14 = math.rsqrt %13 : vector<128x1xf32>
    %15 = vector.broadcast %14 : vector<128x1xf32> to vector<128x256xf32>
    %16 = arith.mulf %6, %15 : vector<128x256xf32>
    %c0_5 = arith.constant 0 : index
    %c0_6 = arith.constant 0 : index
    %17 = vector.load %arg2[%c0_5, %c0_6] : memref<1x256xf32, #tpu.memory_space<vmem>>, vector<1x256xf32>
    %18 = vector.broadcast %17 : vector<1x256xf32> to vector<128x256xf32>
    %19 = arith.mulf %16, %18 : vector<128x256xf32>
    %c0_7 = arith.constant 0 : index
    %c0_8 = arith.constant 0 : index
    %20 = vector.load %arg3[%c0_7, %c0_8] : memref<1x256xf32, #tpu.memory_space<vmem>>, vector<1x256xf32>
    %21 = vector.broadcast %20 : vector<1x256xf32> to vector<128x256xf32>
    %22 = arith.addf %19, %21 : vector<128x256xf32>
    %23 = arith.truncf %22 : vector<128x256xf32> to vector<128x256xbf16>
    %c0_9 = arith.constant 0 : index
    %c0_10 = arith.constant 0 : index
    %24 = vector.load %arg4[%c0_9, %c0_10] : memref<256x1024xbf16, #tpu.memory_space<vmem>>, vector<256x1024xbf16>
    %cst_11 = arith.constant dense<0.000000e+00> : vector<128x1024xf32>
    %25 = tpu.matmul %23, %24, %cst_11 {dimension_numbers = #tpu.dot_dimension_numbers<[1], [0], [0], [1], [0, 0, 1, 1], [], []>} : vector<128x256xbf16>, vector<256x1024xbf16>, vector<128x1024xf32> -> vector<128x1024xf32>
    %c0_12 = arith.constant 0 : index
    %c0_13 = arith.constant 0 : index
    %26 = vector.load %arg5[%c0_12, %c0_13] : memref<1x1024xf32, #tpu.memory_space<vmem>>, vector<1x1024xf32>
    %27 = vector.broadcast %26 : vector<1x1024xf32> to vector<128x1024xf32>
    %28 = arith.addf %25, %27 : vector<128x1024xf32>
    %cst_14 = arith.constant 5.000000e-01 : f32
    %29 = vector.broadcast %cst_14 : f32 to vector<128x1024xf32>
    %30 = arith.mulf %29, %28 : vector<128x1024xf32>
    %cst_15 = arith.constant 0.707106769 : f32
    %31 = vector.broadcast %cst_15 : f32 to vector<128x1024xf32>
    %32 = arith.mulf %28, %31 : vector<128x1024xf32>
    %33 = math.absf %32 : vector<128x1024xf32>
    %cst_16 = arith.constant 0.327591091 : f32
    %34 = vector.broadcast %cst_16 : f32 to vector<128x1024xf32>
    %35 = arith.mulf %34, %33 : vector<128x1024xf32>
    %cst_17 = arith.constant 1.000000e+00 : f32
    %36 = vector.broadcast %cst_17 : f32 to vector<128x1024xf32>
    %37 = arith.addf %36, %35 : vector<128x1024xf32>
    %cst_18 = arith.constant 1.000000e+00 : f32
    %38 = vector.broadcast %cst_18 : f32 to vector<128x1024xf32>
    %39 = arith.divf %38, %37 : vector<128x1024xf32>
    %cst_19 = arith.constant 1.06140542 : f32
    %40 = vector.broadcast %cst_19 : f32 to vector<128x1024xf32>
    %41 = arith.mulf %40, %39 : vector<128x1024xf32>
    %cst_20 = arith.constant -1.45315206 : f32
    %42 = vector.broadcast %cst_20 : f32 to vector<128x1024xf32>
    %43 = arith.addf %41, %42 : vector<128x1024xf32>
    %44 = arith.mulf %43, %39 : vector<128x1024xf32>
    %cst_21 = arith.constant 1.42141378 : f32
    %45 = vector.broadcast %cst_21 : f32 to vector<128x1024xf32>
    %46 = arith.addf %44, %45 : vector<128x1024xf32>
    %47 = arith.mulf %46, %39 : vector<128x1024xf32>
    %cst_22 = arith.constant -0.284496725 : f32
    %48 = vector.broadcast %cst_22 : f32 to vector<128x1024xf32>
    %49 = arith.addf %47, %48 : vector<128x1024xf32>
    %50 = arith.mulf %49, %39 : vector<128x1024xf32>
    %cst_23 = arith.constant 0.254829586 : f32
    %51 = vector.broadcast %cst_23 : f32 to vector<128x1024xf32>
    %52 = arith.addf %50, %51 : vector<128x1024xf32>
    %53 = arith.mulf %52, %39 : vector<128x1024xf32>
    %cst_24 = arith.constant 0.000000e+00 : f32
    %54 = vector.broadcast %cst_24 : f32 to vector<128x1024xf32>
    %55 = arith.subf %54, %33 : vector<128x1024xf32>
    %56 = arith.mulf %55, %33 : vector<128x1024xf32>
    %57 = math.exp %56 : vector<128x1024xf32>
    %58 = arith.mulf %53, %57 : vector<128x1024xf32>
    %cst_25 = arith.constant 1.000000e+00 : f32
    %59 = vector.broadcast %cst_25 : f32 to vector<128x1024xf32>
    %60 = arith.subf %59, %58 : vector<128x1024xf32>
    %cst_26 = arith.constant 0.000000e+00 : f32
    %61 = vector.broadcast %cst_26 : f32 to vector<128x1024xf32>
    %62 = arith.cmpf oge, %32, %61 : vector<128x1024xf32>
    %cst_27 = arith.constant 0.000000e+00 : f32
    %63 = vector.broadcast %cst_27 : f32 to vector<128x1024xf32>
    %64 = arith.subf %63, %60 : vector<128x1024xf32>
    %65 = arith.select %62, %60, %64 : vector<128x1024xi1>, vector<128x1024xf32>
    %cst_28 = arith.constant 1.000000e+00 : f32
    %66 = vector.broadcast %cst_28 : f32 to vector<128x1024xf32>
    %67 = arith.addf %66, %65 : vector<128x1024xf32>
    %68 = arith.mulf %30, %67 : vector<128x1024xf32>
    %69 = arith.truncf %68 : vector<128x1024xf32> to vector<128x1024xbf16>
    %c0_29 = arith.constant 0 : index
    %c0_30 = arith.constant 0 : index
    %70 = vector.load %arg6[%c0_29, %c0_30] : memref<1024x256xbf16, #tpu.memory_space<vmem>>, vector<1024x256xbf16>
    %cst_31 = arith.constant dense<0.000000e+00> : vector<128x256xf32>
    %71 = tpu.matmul %69, %70, %cst_31 {dimension_numbers = #tpu.dot_dimension_numbers<[1], [0], [0], [1], [0, 0, 1, 1], [], []>} : vector<128x1024xbf16>, vector<1024x256xbf16>, vector<128x256xf32> -> vector<128x256xf32>
    %c0_32 = arith.constant 0 : index
    %c0_33 = arith.constant 0 : index
    %72 = vector.load %arg7[%c0_32, %c0_33] : memref<1x256xf32, #tpu.memory_space<vmem>>, vector<1x256xf32>
    %73 = vector.broadcast %72 : vector<1x256xf32> to vector<128x256xf32>
    %74 = arith.addf %71, %73 : vector<128x256xf32>
    %c0_34 = arith.constant 0 : index
    %c0_35 = arith.constant 0 : index
    %75 = vector.load %arg8[%c0_34, %c0_35] : memref<128x256xf32, #tpu.memory_space<vmem>>, vector<128x256xf32>
    tpu.vector_store %arg8[%c0_34, %c0_35], %74 {strides = array<i32>} : memref<128x256xf32, #tpu.memory_space<vmem>>, vector<128x256xf32>,
    return
  }
  func.func @transform_0(%arg0: i32) -> (i32, i32) {
    %c0_i32 = arith.constant 0 : i32
    %c0_i32_0 = arith.constant 0 : i32
    return %arg0, %c0_i32 : i32, i32
  }
  func.func @transform_1(%arg0: i32) -> (i32, i32) {
    %c0_i32 = arith.constant 0 : i32
    %c0_i32_0 = arith.constant 0 : i32
    %c0_i32_1 = arith.constant 0 : i32
    return %c0_i32, %c0_i32_0 : i32, i32
  }
  func.func @transform_2(%arg0: i32) -> (i32, i32) {
    %c0_i32 = arith.constant 0 : i32
    %c0_i32_0 = arith.constant 0 : i32
    %c0_i32_1 = arith.constant 0 : i32
    return %c0_i32, %c0_i32_0 : i32, i32
  }
  func.func @transform_3(%arg0: i32) -> (i32, i32) {
    %c0_i32 = arith.constant 0 : i32
    %c0_i32_0 = arith.constant 0 : i32
    %c0_i32_1 = arith.constant 0 : i32
    return %c0_i32, %c0_i32_0 : i32, i32
  }
  func.func @transform_4(%arg0: i32) -> (i32, i32) {
    %c0_i32 = arith.constant 0 : i32
    %c0_i32_0 = arith.constant 0 : i32
    %c0_i32_1 = arith.constant 0 : i32
    return %c0_i32, %c0_i32_0 : i32, i32
  }
  func.func @transform_5(%arg0: i32) -> (i32, i32) {
    %c0_i32 = arith.constant 0 : i32
    %c0_i32_0 = arith.constant 0 : i32
    %c0_i32_1 = arith.constant 0 : i32
    return %c0_i32, %c0_i32_0 : i32, i32
  }
  func.func @transform_6(%arg0: i32) -> (i32, i32) {
    %c0_i32 = arith.constant 0 : i32
    %c0_i32_0 = arith.constant 0 : i32
    %c0_i32_1 = arith.constant 0 : i32
    return %c0_i32, %c0_i32_0 : i32, i32
  }
  func.func @transform_7(%arg0: i32) -> (i32, i32) {
    %c0_i32 = arith.constant 0 : i32
    %c0_i32_0 = arith.constant 0 : i32
    return %arg0, %c0_i32 : i32, i32
  }
}

</mosaic_0001>

<llo_original>
// kernel: tpu_custom_call.1
$region0: #{tpu_custom_call.1}
  #allocation0 [shape = 'u32[]', space=smem, size = 0x4, offset = 0x4, fixed_abs, tag = 'smem constant byte address 0x4 - core index']
  #allocation1 [shape = 'u32[144,128]{1,0:T(1,128)}', space=vmem, size = 0x12000, scoped, tag = 'internal scratch']
  %s0 = inlined_call_operand.hbm [shape: f32[256,256], index: 0, kind: input, shape index: {}]
  %s1 = inlined_call_operand.vmem [shape: f32[1,256], index: 1, kind: input, shape index: {}]
  %s2 = inlined_call_operand.vmem [shape: f32[1,256], index: 2, kind: input, shape index: {}]
  %s3 = inlined_call_operand.hbm [shape: bf16[256,1024], index: 3, kind: input, shape index: {}]
  %s4 = inlined_call_operand.vmem [shape: f32[1,1024], index: 4, kind: input, shape index: {}]
  %s5 = inlined_call_operand.hbm [shape: bf16[1024,256], index: 5, kind: input, shape index: {}]
  %s6 = inlined_call_operand.vmem [shape: f32[1,256], index: 6, kind: input, shape index: {}]
  %s7 = inlined_call_operand.hbm [shape: f32[256,256], index: 7, kind: output, shape index: {}]
  %s8 = sld [smem:[#allocation0]]
  $region73: #{tpu_custom_call.1} parent=0
    _
  %s10 = ssub.s32 1, %s8
  %s11 = scalar_select 0, %s10, %s8
  $region1: #{tpu_custom_call.1} parent=0
    #allocation2 [shape = 'u8[262144]{0}', space=vmem, size = 0x40000, scoped, tag = 'input window, operand 0']
    #allocation3 [shape = 's32[2]{0}', space=sflag, size = 0x8, scoped, tag = 'scoped memory for tpu_custom_call.1']
    #allocation4 [shape = 's32[2]{0}', space=sflag, size = 0x8, scoped, tag = 'scoped memory for tpu_custom_call.1']
    #allocation5 [shape = 'u8[524288]{0}', space=vmem, size = 0x80000, scoped, tag = 'input window, operand 3, single buffered']
    #allocation6 [shape = 's32[1]{0}', space=sflag, size = 0x4, scoped, tag = 'scoped memory for tpu_custom_call.1']
    #allocation7 [shape = 'u8[524288]{0}', space=vmem, size = 0x80000, scoped, tag = 'input window, operand 5, single buffered']
    #allocation8 [shape = 'u8[262144]{0}', space=vmem, size = 0x40000, scoped, tag = 'output window, operand 0']
    %12 = vsyncpa [#allocation3], 0
    %s13 = scalar_lea.sflag [#allocation3], 1
    %14 = vsyncpa %s13, 0
    %15 = vsyncpa [#allocation6], 0
    %16 = vsyncpa [#allocation4], 0
    %s17 = scalar_lea.sflag [#allocation4], 1
    %18 = vsyncpa %s17, 0
    loop: start=0, step=1, limit=4
    $region2: #{tpu_custom_call.1} parent=1 // loop_pre_header
      _
    $region3: #{tpu_custom_call.1} parent=1 // loop_header
      %s20 = sphi 0, %s24
      %p21 = scmp.ge.s32.totalorder %s20, 4
      %s30 = sphi 0, %s32
      %s33 = sphi 0, %s30
      %s34 = sphi 0, %s33
      %s50 = sphi 0, %s34
      %s54 = sphi 0, %s54
      %s56 = sphi 0, %s54
      %s57 = sphi 0, %s56
      %s71 = sphi 0, %s57
      %s75 = sphi 0, %s75
      %s77 = sphi 0, %s75
      %s78 = sphi 0, %s77
      %s92 = sphi 0, %s78
      %s96 = sphi 0, %s96
      %s98 = sphi 0, %s96
      %s99 = sphi 0, %s98
      %s113 = sphi 0, %s99
      %s117 = sphi 0, %s117
      %s119 = sphi 0, %s117
      %s120 = sphi 0, %s119
      %s134 = sphi 0, %s120
      %s138 = sphi 0, %s138
      %s140 = sphi 0, %s138
      %s141 = sphi 0, %s140
      %s155 = sphi 0, %s141
      %s159 = sphi 0, %s159
      %s161 = sphi 0, %s159
      %s162 = sphi 0, %s161
      %s176 = sphi 0, %s162
      %s182 = sphi 0, %s184
      %s185 = sphi 0, %s182
      %s186 = sphi 0, %s185
      %s202 = sphi 0, %s186
    $region4: #{tpu_custom_call.1} parent=1 // loop_header_branch
      %23 = sbr.rel (%p21) target = $region8
    $region5: #{tpu_custom_call.1} parent=1 // loop_body
      %s25 = ssub.s32 %s20, 1
      %s26 = ssub.s32 %s20, 2
      %s27 = sadd.s32 %s20, 1
      %s28 = ssub.s32 %s20, %s27
      %p29 = scmp.eq.s32.totalorder %s28, 0
      %s31 = sadd.s32 %s30, 1
      %s32 = scalar_select %p29, %s30, %s31
      %p35 = pneg %p29
      %p36 = scmp.eq.s32.totalorder %s20, 1
      %p37 = por %p35, %p36
      %p38 = scmp.ne.s32.totalorder %s30, %s33
      %p39 = scmp.eq.s32.totalorder %s20, 0
      %p40 = por %p38, %p39
      %p41 = scmp.ne.s32.totalorder %s30, %s33
      %p42 = scmp.eq.s32.totalorder %s25, 1
      %p43 = por %p41, %p42
      %p44 = scmp.ne.s32.totalorder %s33, %s34
      %p45 = scmp.eq.s32.totalorder %s25, 0
      %p46 = por %p44, %p45
      %p47 = scmp.ne.s32.totalorder %s33, %s34
      %p48 = scmp.eq.s32.totalorder %s26, 1
      %p49 = por %p47, %p48
      %p51 = scmp.ne.s32.totalorder %s34, %s50
      %p52 = scmp.eq.s32.totalorder %s26, 0
      %p53 = por %p51, %p52
      %s55 = sadd.s32 %s54, 1
      %p58 = scmp.eq.s32.totalorder %s20, 1
      %p59 = scmp.ne.s32.totalorder %s54, %s56
      %p60 = scmp.eq.s32.totalorder %s20, 0
      %p61 = por %p59, %p60
      %p62 = scmp.ne.s32.totalorder %s54, %s56
      %p63 = scmp.eq.s32.totalorder %s25, 1
      %p64 = por %p62, %p63
      %p65 = scmp.ne.s32.totalorder %s56, %s57
      %p66 = scmp.eq.s32.totalorder %s25, 0
      %p67 = por %p65, %p66
      %p68 = scmp.ne.s32.totalorder %s56, %s57
      %p69 = scmp.eq.s32.totalorder %s26, 1
      %p70 = por %p68, %p69
      %p72 = scmp.ne.s32.totalorder %s57, %s71
      %p73 = scmp.eq.s32.totalorder %s26, 0
      %p74 = por %p72, %p73
      %s76 = sadd.s32 %s75, 1
      %p79 = scmp.eq.s32.totalorder %s20, 1
      %p80 = scmp.ne.s32.totalorder %s75, %s77
      %p81 = scmp.eq.s32.totalorder %s20, 0
      %p82 = por %p80, %p81
      %p83 = scmp.ne.s32.totalorder %s75, %s77
      %p84 = scmp.eq.s32.totalorder %s25, 1
      %p85 = por %p83, %p84
      %p86 = scmp.ne.s32.totalorder %s77, %s78
      %p87 = scmp.eq.s32.totalorder %s25, 0
      %p88 = por %p86, %p87
      %p89 = scmp.ne.s32.totalorder %s77, %s78
      %p90 = scmp.eq.s32.totalorder %s26, 1
      %p91 = por %p89, %p90
      %p93 = scmp.ne.s32.totalorder %s78, %s92
      %p94 = scmp.eq.s32.totalorder %s26, 0
      %p95 = por %p93, %p94
      %s97 = sadd.s32 %s96, 1
      %p100 = scmp.eq.s32.totalorder %s20, 1
      %p101 = scmp.ne.s32.totalorder %s96, %s98
      %p102 = scmp.eq.s32.totalorder %s20, 0
      %p103 = por %p101, %p102
      %p104 = scmp.ne.s32.totalorder %s96, %s98
      %p105 = scmp.eq.s32.totalorder %s25, 1
      %p106 = por %p104, %p105
      %p107 = scmp.ne.s32.totalorder %s98, %s99
      %p108 = scmp.eq.s32.totalorder %s25, 0
      %p109 = por %p107, %p108
      %p110 = scmp.ne.s32.totalorder %s98, %s99
      %p111 = scmp.eq.s32.totalorder %s26, 1
      %p112 = por %p110, %p111
      %p114 = scmp.ne.s32.totalorder %s99, %s113
      %p115 = scmp.eq.s32.totalorder %s26, 0
      %p116 = por %p114, %p115
      %s118 = sadd.s32 %s117, 1
      %p121 = scmp.eq.s32.totalorder %s20, 1
      %p122 = scmp.ne.s32.totalorder %s117, %s119
      %p123 = scmp.eq.s32.totalorder %s20, 0
      %p124 = por %p122, %p123
      %p125 = scmp.ne.s32.totalorder %s117, %s119
      %p126 = scmp.eq.s32.totalorder %s25, 1
      %p127 = por %p125, %p126
      %p128 = scmp.ne.s32.totalorder %s119, %s120
      %p129 = scmp.eq.s32.totalorder %s25, 0
      %p130 = por %p128, %p129
      %p131 = scmp.ne.s32.totalorder %s119, %s120
      %p132 = scmp.eq.s32.totalorder %s26, 1
      %p133 = por %p131, %p132
      %p135 = scmp.ne.s32.totalorder %s120, %s134
      %p136 = scmp.eq.s32.totalorder %s26, 0
      %p137 = por %p135, %p136
      %s139 = sadd.s32 %s138, 1
      %p142 = scmp.eq.s32.totalorder %s20, 1
      %p143 = scmp.ne.s32.totalorder %s138, %s140
      %p144 = scmp.eq.s32.totalorder %s20, 0
      %p145 = por %p143, %p144
      %p146 = scmp.ne.s32.totalorder %s138, %s140
      %p147 = scmp.eq.s32.totalorder %s25, 1
      %p148 = por %p146, %p147
      %p149 = scmp.ne.s32.totalorder %s140, %s141
      %p150 = scmp.eq.s32.totalorder %s25, 0
      %p151 = por %p149, %p150
      %p152 = scmp.ne.s32.totalorder %s140, %s141
      %p153 = scmp.eq.s32.totalorder %s26, 1
      %p154 = por %p152, %p153
      %p156 = scmp.ne.s32.totalorder %s141, %s155
      %p157 = scmp.eq.s32.totalorder %s26, 0
      %p158 = por %p156, %p157
      %s160 = sadd.s32 %s159, 1
      %p163 = scmp.eq.s32.totalorder %s20, 1
      %p164 = scmp.ne.s32.totalorder %s159, %s161
      %p165 = scmp.eq.s32.totalorder %s20, 0
      %p166 = por %p164, %p165
      %p167 = scmp.ne.s32.totalorder %s159, %s161
      %p168 = scmp.eq.s32.totalorder %s25, 1
      %p169 = por %p167, %p168
      %p170 = scmp.ne.s32.totalorder %s161, %s162
      %p171 = scmp.eq.s32.totalorder %s25, 0
      %p172 = por %p170, %p171
      %p173 = scmp.ne.s32.totalorder %s161, %s162
      %p174 = scmp.eq.s32.totalorder %s26, 1
      %p175 = por %p173, %p174
      %p177 = scmp.ne.s32.totalorder %s162, %s176
      %p178 = scmp.eq.s32.totalorder %s26, 0
      %p179 = por %p177, %p178
      %s180 = ssub.s32 %s20, %s27
      %p181 = scmp.eq.s32.totalorder %s180, 0
      %s183 = sadd.s32 %s182, 1
      %s184 = scalar_select %p181, %s182, %s183
      %p187 = pneg %p181
      %p188 = scmp.eq.s32.totalorder %s20, 1
      %p189 = por %p187, %p188
      %p190 = scmp.ne.s32.totalorder %s182, %s185
      %p191 = scmp.eq.s32.totalorder %s20, 0
      %p192 = por %p190, %p191
      %p193 = scmp.ne.s32.totalorder %s182, %s185
      %p194 = scmp.eq.s32.totalorder %s25, 1
      %p195 = por %p193, %p194
      %p196 = scmp.ne.s32.totalorder %s185, %s186
      %p197 = scmp.eq.s32.totalorder %s25, 0
      %p198 = por %p196, %p197
      %p199 = scmp.ne.s32.totalorder %s185, %s186
      %p200 = scmp.eq.s32.totalorder %s26, 1
      %p201 = por %p199, %p200
      %p203 = scmp.ne.s32.totalorder %s186, %s202
      %p204 = scmp.eq.s32.totalorder %s26, 0
      %p205 = por %p203, %p204
      %p206 = scmp.le.s32.totalorder 1, %s20
      %p207 = scmp.lt.s32.totalorder %s20, 3
      %p208 = pnand %p206, %p207
      %p209 = pneg %p208
      // Predicated region
      $region9: #{tpu_custom_call.1} parent=5 // pred_check
        _
      $region10: #{tpu_custom_call.1} parent=5 // pred_check_branch
        %211 = sbr.rel (%p208) target = $region12
      $region11: #{tpu_custom_call.1} parent=5 // pred_region
        %s212 = ssub.s32 %s20, 1
        // Predicated region
        $region13: #{tpu_custom_call.1} parent=11 // pred_check
          %p213 = pneg %p67
        $region14: #{tpu_custom_call.1} parent=11 // pred_check_branch
          %215 = sbr.rel (%p213) target = $region16
        $region15: #{tpu_custom_call.1} parent=11 // pred_region
          _
        $region16: #{tpu_custom_call.1} parent=11 // pred_fallthru
          _
        // Predicated region
        $region17: #{tpu_custom_call.1} parent=11 // pred_check
          %p216 = pneg %p88
        $region18: #{tpu_custom_call.1} parent=11 // pred_check_branch
          %218 = sbr.rel (%p216) target = $region20
        $region19: #{tpu_custom_call.1} parent=11 // pred_region
          _
        $region20: #{tpu_custom_call.1} parent=11 // pred_fallthru
          _
        // Predicated region
        $region21: #{tpu_custom_call.1} parent=11 // pred_check
          %p219 = pneg %p109
        $region22: #{tpu_custom_call.1} parent=11 // pred_check_branch
          %221 = sbr.rel (%p219) target = $region24
        $region23: #{tpu_custom_call.1} parent=11 // pred_region
          %s223 = ssub.s32 16384, 16384
          %224 = vsyncadd [#allocation6], %s223
          %s225 = sshll.u32 [#allocation5], 4
          %s226 = int_to_ptr.vmem [resolvable:$true] %s225
          %231 = dma.hbm_to_vmem [thread:$0]  %s3, 16384, %s226, [#allocation6], 512, 512, 32
        $region24: #{tpu_custom_call.1} parent=11 // pred_fallthru
          _
        // Predicated region
        $region25: #{tpu_custom_call.1} parent=11 // pred_check
          %p232 = pneg %p130
        $region26: #{tpu_custom_call.1} parent=11 // pred_check_branch
          %234 = sbr.rel (%p232) target = $region28
        $region27: #{tpu_custom_call.1} parent=11 // pred_region
          _
        $region28: #{tpu_custom_call.1} parent=11 // pred_fallthru
          _
        // Predicated region
        $region29: #{tpu_custom_call.1} parent=11 // pred_check
          %p235 = pneg %p151
        $region30: #{tpu_custom_call.1} parent=11 // pred_check_branch
          %237 = sbr.rel (%p235) target = $region32
        $region31: #{tpu_custom_call.1} parent=11 // pred_region
          %s239 = ssub.s32 16384, 16384
          %240 = vsyncadd [#allocation6], %s239
          %s241 = sshll.u32 [#allocation7], 4
          %s242 = int_to_ptr.vmem [resolvable:$true] %s241
          %247 = dma.hbm_to_vmem [thread:$0]  %s5, 16384, %s242, [#allocation6], 128, 128, 8
        $region32: #{tpu_custom_call.1} parent=11 // pred_fallthru
          _
        // Predicated region
        $region33: #{tpu_custom_call.1} parent=11 // pred_check
          %p248 = pneg %p172
        $region34: #{tpu_custom_call.1} parent=11 // pred_check_branch
          %250 = sbr.rel (%p248) target = $region36
        $region35: #{tpu_custom_call.1} parent=11 // pred_region
          _
        $region36: #{tpu_custom_call.1} parent=11 // pred_fallthru
          _
      $region12: #{tpu_custom_call.1} parent=5 // pred_fallthru
        _
      %p251 = scmp.lt.s32.totalorder %s20, 2
      // Predicated region
      $region37: #{tpu_custom_call.1} parent=5 // pred_check
        %p252 = pneg %p251
      $region38: #{tpu_custom_call.1} parent=5 // pred_check_branch
        %254 = sbr.rel (%p252) target = $region40
      $region39: #{tpu_custom_call.1} parent=5 // pred_region
        // Predicated region
        $region41: #{tpu_custom_call.1} parent=39 // pred_check
          %p255 = pneg %p40
        $region42: #{tpu_custom_call.1} parent=39 // pred_check_branch
          %257 = sbr.rel (%p255) target = $region44
        $region43: #{tpu_custom_call.1} parent=39 // pred_region
          %s258 = sand.u32 %s30, 1
          %s259 = scalar_lea.sflag [#allocation3], %s258
          %s260 = sand.u32 %s30, 1
          %s261 = smul.addr %s260, 256
          %s262 = scalar_lea.vmem [#allocation2], %s261
          %s263 = smul.u32 16, %s20
          %s265 = ssub.s32 4096, 4096
          %266 = vsyncadd %s259, %s265
          %s267 = smul.addr %s263, 2
          %s268 = smul.addr %s267, 128
          %s269 = scalar_lea.hbm %s0, %s268
          %s270 = sshll.u32 %s262, 4
          %s271 = int_to_ptr.vmem [resolvable:$true] %s270
          %276 = dma.hbm_to_vmem [thread:$0]  %s269, 4096, %s271, %s259, 256, 256, 16
        $region44: #{tpu_custom_call.1} parent=39 // pred_fallthru
          _
      $region40: #{tpu_custom_call.1} parent=5 // pred_fallthru
        _
      %p277 = scmp.le.s32.totalorder 1, %s20
      %p278 = scmp.lt.s32.totalorder %s20, 3
      %p279 = pnand %p277, %p278
      %p280 = pneg %p279
      // Predicated region
      $region45: #{tpu_custom_call.1} parent=5 // pred_check
        _
      $region46: #{tpu_custom_call.1} parent=5 // pred_check_branch
        %282 = sbr.rel (%p279) target = $region48
      $region47: #{tpu_custom_call.1} parent=5 // pred_region
        %s283 = ssub.s32 %s20, 1
        %s284 = sand.u32 %s33, 1
        %s285 = scalar_lea.sflag [#allocation3], %s284
        %s286 = sand.u32 %s33, 1
        %s287 = smul.addr %s286, 256
        %s288 = scalar_lea.vmem [#allocation2], %s287
        // Predicated region
        $region49: #{tpu_custom_call.1} parent=47 // pred_check
          %p289 = pneg %p46
        $region50: #{tpu_custom_call.1} parent=47 // pred_check_branch
          %291 = sbr.rel (%p289) target = $region52
        $region51: #{tpu_custom_call.1} parent=47 // pred_region
          %292 = dma.done %s285, 4096
        $region52: #{tpu_custom_call.1} parent=47 // pred_fallthru
          _
        // Predicated region
        $region53: #{tpu_custom_call.1} parent=47 // pred_check
          %p293 = pneg %p109
        $region54: #{tpu_custom_call.1} parent=47 // pred_check_branch
          %295 = sbr.rel (%p293) target = $region56
        $region55: #{tpu_custom_call.1} parent=47 // pred_region
          %296 = dma.done [#allocation6], 16384
        $region56: #{tpu_custom_call.1} parent=47 // pred_fallthru
          _
        // Predicated region
        $region57: #{tpu_custom_call.1} parent=47 // pred_check
          %p297 = pneg %p151
        $region58: #{tpu_custom_call.1} parent=47 // pred_check_branch
          %299 = sbr.rel (%p297) target = $region60
        $region59: #{tpu_custom_call.1} parent=47 // pred_region
          %300 = dma.done [#allocation6], 16384
        $region60: #{tpu_custom_call.1} parent=47 // pred_fallthru
          _
        %s301 = sand.u32 %s33, 1
        %s302 = scalar_lea.sflag [#allocation3], %s301
        %s303 = sand.u32 %s33, 1
        %s304 = smul.addr %s303, 256
        %s305 = scalar_lea.vmem [#allocation2], %s304
        %p306 = pneg %p46
        %p307 = pneg %p43
        %p308 = pneg %p67
        %p309 = pneg %p64
        %p310 = pneg %p88
        %p311 = pneg %p85
        %p312 = pneg %p109
        %p313 = pneg %p106
        %p314 = pneg %p130
        %p315 = pneg %p127
        %p316 = pneg %p151
        %p317 = pneg %p148
        %p318 = pneg %p172
        %p319 = pneg %p169
        %p320 = pneg %p198
        %p321 = pneg %p195
        %s322 = sand.u32 %s185, 1
        %s323 = scalar_lea.sflag [#allocation4], %s322
        %s324 = sand.u32 %s185, 1
        %s325 = smul.addr %s324, 256
        %s326 = scalar_lea.vmem [#allocation8], %s325
        %s327 = smul.u32 16, %s25
        %s328 = smul.u32 16, %s25
        %v329 = vld [vmem:[%s288] sm:$0xff]
        %v330 = vld [vmem:[%s288 + $0x8] sm:$0xff]
        %v331 = vld [vmem:[%s288 + $0x10] sm:$0xff]
        %v332 = vld [vmem:[%s288 + $0x18] sm:$0xff]
        %v333 = vld [vmem:[%s288 + $0x20] sm:$0xff]
        %v334 = vld [vmem:[%s288 + $0x28] sm:$0xff]
        %v335 = vld [vmem:[%s288 + $0x30] sm:$0xff]
        %v336 = vld [vmem:[%s288 + $0x38] sm:$0xff]
        %v337 = vld [vmem:[%s288 + $0x40] sm:$0xff]
        %v338 = vld [vmem:[%s288 + $0x48] sm:$0xff]
        %v339 = vld [vmem:[%s288 + $0x50] sm:$0xff]
        %v340 = vld [vmem:[%s288 + $0x58] sm:$0xff]
        %v341 = vld [vmem:[%s288 + $0x60] sm:$0xff]
        %v342 = vld [vmem:[%s288 + $0x68] sm:$0xff]
        %v343 = vld [vmem:[%s288 + $0x70] sm:$0xff]
        %v344 = vld [vmem:[%s288 + $0x78] sm:$0xff]
        %v345 = vld [vmem:[%s288 + $0x80] sm:$0xff]
        %v346 = vld [vmem:[%s288 + $0x88] sm:$0xff]
        %v347 = vld [vmem:[%s288 + $0x90] sm:$0xff]
        %v348 = vld [vmem:[%s288 + $0x98] sm:$0xff]
        %v349 = vld [vmem:[%s288 + $0xa0] sm:$0xff]
        %v350 = vld [vmem:[%s288 + $0xa8] sm:$0xff]
        %v351 = vld [vmem:[%s288 + $0xb0] sm:$0xff]
        %v352 = vld [vmem:[%s288 + $0xb8] sm:$0xff]
        %v353 = vld [vmem:[%s288 + $0xc0] sm:$0xff]
        %v354 = vld [vmem:[%s288 + $0xc8] sm:$0xff]
        %v355 = vld [vmem:[%s288 + $0xd0] sm:$0xff]
        %v356 = vld [vmem:[%s288 + $0xd8] sm:$0xff]
        %v357 = vld [vmem:[%s288 + $0xe0] sm:$0xff]
        %v358 = vld [vmem:[%s288 + $0xe8] sm:$0xff]
        %v359 = vld [vmem:[%s288 + $0xf0] sm:$0xff]
        %v360 = vld [vmem:[%s288 + $0xf8] sm:$0xff]
        %v361 = vadd.f32 %v329, %v330
        %362 = vadd.xlane.f32.xlu0 %v361
        %v363 = vpop.xlane.xlu0 %362
        %v364 = vadd.f32 %v331, %v332
        %365 = vadd.xlane.f32.xlu0 %v364
        %v366 = vpop.xlane.xlu0 %365
        %v367 = vadd.f32 %v333, %v334
        %368 = vadd.xlane.f32.xlu0 %v367
        %v369 = vpop.xlane.xlu0 %368
        %v370 = vadd.f32 %v335, %v336
        %371 = vadd.xlane.f32.xlu0 %v370
        %v372 = vpop.xlane.xlu0 %371
        %v373 = vadd.f32 %v337, %v338
        %374 = vadd.xlane.f32.xlu0 %v373
        %v375 = vpop.xlane.xlu0 %374
        %v376 = vadd.f32 %v339, %v340
        %377 = vadd.xlane.f32.xlu0 %v376
        %v378 = vpop.xlane.xlu0 %377
        %v379 = vadd.f32 %v341, %v342
        %380 = vadd.xlane.f32.xlu0 %v379
        %v381 = vpop.xlane.xlu0 %380
        %v382 = vadd.f32 %v343, %v344
        %383 = vadd.xlane.f32.xlu0 %v382
        %v384 = vpop.xlane.xlu0 %383
        %v385 = vadd.f32 %v345, %v346
        %386 = vadd.xlane.f32.xlu0 %v385
        %v387 = vpop.xlane.xlu0 %386
        %v388 = vadd.f32 %v347, %v348
        %389 = vadd.xlane.f32.xlu0 %v388
        %v390 = vpop.xlane.xlu0 %389
        %v391 = vadd.f32 %v349, %v350
        %392 = vadd.xlane.f32.xlu0 %v391
        %v393 = vpop.xlane.xlu0 %392
        %v394 = vadd.f32 %v351, %v352
        %395 = vadd.xlane.f32.xlu0 %v394
        %v396 = vpop.xlane.xlu0 %395
        %v397 = vadd.f32 %v353, %v354
        %398 = vadd.xlane.f32.xlu0 %v397
        %v399 = vpop.xlane.xlu0 %398
        %v400 = vadd.f32 %v355, %v356
        %401 = vadd.xlane.f32.xlu0 %v400
        %v402 = vpop.xlane.xlu0 %401
        %v403 = vadd.f32 %v357, %v358
        %404 = vadd.xlane.f32.xlu0 %v403
        %v405 = vpop.xlane.xlu0 %404
        %v406 = vadd.f32 %v359, %v360
        %407 = vadd.xlane.f32.xlu0 %v406
        %v408 = vpop.xlane.xlu0 %407
        %v409 = vrcp.pop 256.0
        %v410 = vmul.f32 %v363, %v409
        %v411 = vmul.f32 %v366, %v409
        %v412 = vmul.f32 %v369, %v409
        %v413 = vmul.f32 %v372, %v409
        %v414 = vmul.f32 %v375, %v409
        %v415 = vmul.f32 %v378, %v409
        %v416 = vmul.f32 %v381, %v409
        %v417 = vmul.f32 %v384, %v409
        %v418 = vmul.f32 %v387, %v409
        %v419 = vmul.f32 %v390, %v409
        %v420 = vmul.f32 %v393, %v409
        %v421 = vmul.f32 %v396, %v409
        %v422 = vmul.f32 %v399, %v409
        %v423 = vmul.f32 %v402, %v409
        %v424 = vmul.f32 %v405, %v409
        %v425 = vmul.f32 %v408, %v409
        %v426 = vsub.f32 %v329, %v410
        %v427 = vsub.f32 %v330, %v410
        %v428 = vsub.f32 %v331, %v411
        %v429 = vsub.f32 %v332, %v411
        %v430 = vsub.f32 %v333, %v412
        %v431 = vsub.f32 %v334, %v412
        %v432 = vsub.f32 %v335, %v413
        %v433 = vsub.f32 %v336, %v413
        %v434 = vsub.f32 %v337, %v414
        %v435 = vsub.f32 %v338, %v414
        %v436 = vsub.f32 %v339, %v415
        %v437 = vsub.f32 %v340, %v415
        %v438 = vsub.f32 %v341, %v416
        %v439 = vsub.f32 %v342, %v416
        %v440 = vsub.f32 %v343, %v417
        %v441 = vsub.f32 %v344, %v417
        %v442 = vsub.f32 %v345, %v418
        %v443 = vsub.f32 %v346, %v418
        %v444 = vsub.f32 %v347, %v419
        %v445 = vsub.f32 %v348, %v419
        %v446 = vsub.f32 %v349, %v420
        %v447 = vsub.f32 %v350, %v420
        %v448 = vsub.f32 %v351, %v421
        %v449 = vsub.f32 %v352, %v421
        %v450 = vsub.f32 %v353, %v422
        %v451 = vsub.f32 %v354, %v422
        %v452 = vsub.f32 %v355, %v423
        %v453 = vsub.f32 %v356, %v423
        %v454 = vsub.f32 %v357, %v424
        %v455 = vsub.f32 %v358, %v424
        %v456 = vsub.f32 %v359, %v425
        %v457 = vsub.f32 %v360, %v425
        %v458 = vmul.f32 %v426, %v426
        %v459 = vmul.f32 %v427, %v427
        %v460 = vmul.f32 %v428, %v428
        %v461 = vmul.f32 %v429, %v429
        %v462 = vmul.f32 %v430, %v430
        %v463 = vmul.f32 %v431, %v431
        %v464 = vmul.f32 %v432, %v432
        %v465 = vmul.f32 %v433, %v433
        %v466 = vmul.f32 %v434, %v434
        %v467 = vmul.f32 %v435, %v435
        %v468 = vmul.f32 %v436, %v436
        %v469 = vmul.f32 %v437, %v437
        %v470 = vmul.f32 %v438, %v438
        %v471 = vmul.f32 %v439, %v439
        %v472 = vmul.f32 %v440, %v440
        %v473 = vmul.f32 %v441, %v441
        %v474 = vmul.f32 %v442, %v442
        %v475 = vmul.f32 %v443, %v443
        %v476 = vmul.f32 %v444, %v444
        %v477 = vmul.f32 %v445, %v445
        %v478 = vmul.f32 %v446, %v446
        %v479 = vmul.f32 %v447, %v447
        %v480 = vmul.f32 %v448, %v448
        %v481 = vmul.f32 %v449, %v449
        %v482 = vmul.f32 %v450, %v450
        %v483 = vmul.f32 %v451, %v451
        %v484 = vmul.f32 %v452, %v452
        %v485 = vmul.f32 %v453, %v453
        %v486 = vmul.f32 %v454, %v454
        %v487 = vmul.f32 %v455, %v455
        %v488 = vmul.f32 %v456, %v456
        %v489 = vmul.f32 %v457, %v457
        %v490 = vadd.f32 %v458, %v459
        %491 = vadd.xlane.f32.xlu0 %v490
        %v492 = vpop.xlane.xlu0 %491
        %v493 = vadd.f32 %v460, %v461
        %494 = vadd.xlane.f32.xlu0 %v493
        %v495 = vpop.xlane.xlu0 %494
        %v496 = vadd.f32 %v462, %v463
        %497 = vadd.xlane.f32.xlu0 %v496
        %v498 = vpop.xlane.xlu0 %497
        %v499 = vadd.f32 %v464, %v465
        %500 = vadd.xlane.f32.xlu0 %v499
        %v501 = vpop.xlane.xlu0 %500
        %v502 = vadd.f32 %v466, %v467
        %503 = vadd.xlane.f32.xlu0 %v502
        %v504 = vpop.xlane.xlu0 %503
        %v505 = vadd.f32 %v468, %v469
        %506 = vadd.xlane.f32.xlu0 %v505
        %v507 = vpop.xlane.xlu0 %506
        %v508 = vadd.f32 %v470, %v471
        %509 = vadd.xlane.f32.xlu0 %v508
        %v510 = vpop.xlane.xlu0 %509
        %v511 = vadd.f32 %v472, %v473
        %512 = vadd.xlane.f32.xlu0 %v511
        %v513 = vpop.xlane.xlu0 %512
        %v514 = vadd.f32 %v474, %v475
        %515 = vadd.xlane.f32.xlu0 %v514
        %v516 = vpop.xlane.xlu0 %515
        %v517 = vadd.f32 %v476, %v477
        %518 = vadd.xlane.f32.xlu0 %v517
        %v519 = vpop.xlane.xlu0 %518
        %v520 = vadd.f32 %v478, %v479
        %521 = vadd.xlane.f32.xlu0 %v520
        %v522 = vpop.xlane.xlu0 %521
        %v523 = vadd.f32 %v480, %v481
        %524 = vadd.xlane.f32.xlu0 %v523
        %v525 = vpop.xlane.xlu0 %524
        %v526 = vadd.f32 %v482, %v483
        %527 = vadd.xlane.f32.xlu0 %v526
        %v528 = vpop.xlane.xlu0 %527
        %v529 = vadd.f32 %v484, %v485
        %530 = vadd.xlane.f32.xlu0 %v529
        %v531 = vpop.xlane.xlu0 %530
        %v532 = vadd.f32 %v486, %v487
        %533 = vadd.xlane.f32.xlu0 %v532
        %v534 = vpop.xlane.xlu0 %533
        %v535 = vadd.f32 %v488, %v489
        %536 = vadd.xlane.f32.xlu0 %v535
        %v537 = vpop.xlane.xlu0 %536
        %v538 = vmul.f32 %v492, %v409
        %v539 = vmul.f32 %v495, %v409
        %v540 = vmul.f32 %v498, %v409
        %v541 = vmul.f32 %v501, %v409
        %v542 = vmul.f32 %v504, %v409
        %v543 = vmul.f32 %v507, %v409
        %v544 = vmul.f32 %v510, %v409
        %v545 = vmul.f32 %v513, %v409
        %v546 = vmul.f32 %v516, %v409
        %v547 = vmul.f32 %v519, %v409
        %v548 = vmul.f32 %v522, %v409
        %v549 = vmul.f32 %v525, %v409
        %v550 = vmul.f32 %v528, %v409
        %v551 = vmul.f32 %v531, %v409
        %v552 = vmul.f32 %v534, %v409
        %v553 = vmul.f32 %v537, %v409
        %v554 = vadd.f32 %v538, 1e-05
        %v555 = vadd.f32 %v539, 1e-05
        %v556 = vadd.f32 %v540, 1e-05
        %v557 = vadd.f32 %v541, 1e-05
        %v558 = vadd.f32 %v542, 1e-05
        %v559 = vadd.f32 %v543, 1e-05
        %v560 = vadd.f32 %v544, 1e-05
        %v561 = vadd.f32 %v545, 1e-05
        %v562 = vadd.f32 %v546, 1e-05
        %v563 = vadd.f32 %v547, 1e-05
        %v564 = vadd.f32 %v548, 1e-05
        %v565 = vadd.f32 %v549, 1e-05
        %v566 = vadd.f32 %v550, 1e-05
        %v567 = vadd.f32 %v551, 1e-05
        %v568 = vadd.f32 %v552, 1e-05
        %v569 = vadd.f32 %v553, 1e-05
        %v570 = vrsqrt.pop %v554
        %v571 = vrsqrt.pop %v555
        %v572 = vrsqrt.pop %v556
        %v573 = vrsqrt.pop %v557
        %v574 = vrsqrt.pop %v558
        %v575 = vrsqrt.pop %v559
        %v576 = vrsqrt.pop %v560
        %v577 = vrsqrt.pop %v561
        %v578 = vrsqrt.pop %v562
        %v579 = vrsqrt.pop %v563
        %v580 = vrsqrt.pop %v564
        %v581 = vrsqrt.pop %v565
        %v582 = vrsqrt.pop %v566
        %v583 = vrsqrt.pop %v567
        %v584 = vrsqrt.pop %v568
        %v585 = vrsqrt.pop %v569
        %v586 = vmul.f32 %v426, %v570
        %v587 = vmul.f32 %v427, %v570
        %v588 = vmul.f32 %v428, %v571
        %v589 = vmul.f32 %v429, %v571
        %v590 = vmul.f32 %v430, %v572
        %v591 = vmul.f32 %v431, %v572
        %v592 = vmul.f32 %v432, %v573
        %v593 = vmul.f32 %v433, %v573
        %v594 = vmul.f32 %v434, %v574
        %v595 = vmul.f32 %v435, %v574
        %v596 = vmul.f32 %v436, %v575
        %v597 = vmul.f32 %v437, %v575
        %v598 = vmul.f32 %v438, %v576
        %v599 = vmul.f32 %v439, %v576
        %v600 = vmul.f32 %v440, %v577
        %v601 = vmul.f32 %v441, %v577
        %v602 = vmul.f32 %v442, %v578
        %v603 = vmul.f32 %v443, %v578
        %v604 = vmul.f32 %v444, %v579
        %v605 = vmul.f32 %v445, %v579
        %v606 = vmul.f32 %v446, %v580
        %v607 = vmul.f32 %v447, %v580
        %v608 = vmul.f32 %v448, %v581
        %v609 = vmul.f32 %v449, %v581
        %v610 = vmul.f32 %v450, %v582
        %v611 = vmul.f32 %v451, %v582
        %v612 = vmul.f32 %v452, %v583
        %v613 = vmul.f32 %v453, %v583
        %v614 = vmul.f32 %v454, %v584
        %v615 = vmul.f32 %v455, %v584
        %v616 = vmul.f32 %v456, %v585
        %v617 = vmul.f32 %v457, %v585
        %v618 = vld [vmem:[%s1] sm:$0x3]
        %v620 = vlaneseq
        %v621 = vshrl.u32 %v620, 7
        %v622 = vsub.s32 0, %v621
        %v623 = vrot.slane %v618, %v622
        %v624 = vlaneseq
        %v625 = vshrl.u32 %v624, 7
        %v626 = vsub.s32 1, %v625
        %v627 = vrot.slane %v618, %v626
        %v630 = vmul.f32 %v586, %v623
        %v631 = vmul.f32 %v587, %v627
        %v632 = vmul.f32 %v588, %v623
        %v633 = vmul.f32 %v589, %v627
        %v634 = vmul.f32 %v590, %v623
        %v635 = vmul.f32 %v591, %v627
        %v636 = vmul.f32 %v592, %v623
        %v637 = vmul.f32 %v593, %v627
        %v638 = vmul.f32 %v594, %v623
        %v639 = vmul.f32 %v595, %v627
        %v640 = vmul.f32 %v596, %v623
        %v641 = vmul.f32 %v597, %v627
        %v642 = vmul.f32 %v598, %v623
        %v643 = vmul.f32 %v599, %v627
        %v644 = vmul.f32 %v600, %v623
        %v645 = vmul.f32 %v601, %v627
        %v646 = vmul.f32 %v602, %v623
        %v647 = vmul.f32 %v603, %v627
        %v648 = vmul.f32 %v604, %v623
        %v649 = vmul.f32 %v605, %v627
        %v650 = vmul.f32 %v606, %v623
        %v651 = vmul.f32 %v607, %v627
        %v652 = vmul.f32 %v608, %v623
        %v653 = vmul.f32 %v609, %v627
        %v654 = vmul.f32 %v610, %v623
        %v655 = vmul.f32 %v611, %v627
        %v656 = vmul.f32 %v612, %v623
        %v657 = vmul.f32 %v613, %v627
        %v658 = vmul.f32 %v614, %v623
        %v659 = vmul.f32 %v615, %v627
        %v660 = vmul.f32 %v616, %v623
        %v661 = vmul.f32 %v617, %v627
        %v662 = vld [vmem:[%s2] sm:$0x3]
        %v664 = vlaneseq
        %v665 = vshrl.u32 %v664, 7
        %v666 = vsub.s32 0, %v665
        %v667 = vrot.slane %v662, %v666
        %v668 = vlaneseq
        %v669 = vshrl.u32 %v668, 7
        %v670 = vsub.s32 1, %v669
        %v671 = vrot.slane %v662, %v670
        %v674 = vadd.f32 %v630, %v667
        %v675 = vadd.f32 %v631, %v671
        %v676 = vadd.f32 %v632, %v667
        %v677 = vadd.f32 %v633, %v671
        %v678 = vadd.f32 %v634, %v667
        %v679 = vadd.f32 %v635, %v671
        %v680 = vadd.f32 %v636, %v667
        %v681 = vadd.f32 %v637, %v671
        %v682 = vadd.f32 %v638, %v667
        %v683 = vadd.f32 %v639, %v671
        %v684 = vadd.f32 %v640, %v667
        %v685 = vadd.f32 %v641, %v671
        %v686 = vadd.f32 %v642, %v667
        %v687 = vadd.f32 %v643, %v671
        %v688 = vadd.f32 %v644, %v667
        %v689 = vadd.f32 %v645, %v671
        %v690 = vadd.f32 %v646, %v667
        %v691 = vadd.f32 %v647, %v671
        %v692 = vadd.f32 %v648, %v667
        %v693 = vadd.f32 %v649, %v671
        %v694 = vadd.f32 %v650, %v667
        %v695 = vadd.f32 %v651, %v671
        %v696 = vadd.f32 %v652, %v667
        %v697 = vadd.f32 %v653, %v671
        %v698 = vadd.f32 %v654, %v667
        %v699 = vadd.f32 %v655, %v671
        %v700 = vadd.f32 %v656, %v667
        %v701 = vadd.f32 %v657, %v671
        %v702 = vadd.f32 %v658, %v667
        %v703 = vadd.f32 %v659, %v671
        %v704 = vadd.f32 %v660, %v667
        %v705 = vadd.f32 %v661, %v671
        %v706 = vpack.c.bf16 %v676, %v674
        %v707 = vpack.c.bf16 %v677, %v675
        %v708 = vpack.c.bf16 %v680, %v678
        %v709 = vpack.c.bf16 %v681, %v679
        %v710 = vpack.c.bf16 %v684, %v682
        %v711 = vpack.c.bf16 %v685, %v683
        %v712 = vpack.c.bf16 %v688, %v686
        %v713 = vpack.c.bf16 %v689, %v687
        %v714 = vpack.c.bf16 %v692, %v690
        %v715 = vpack.c.bf16 %v693, %v691
        %v716 = vpack.c.bf16 %v696, %v694
        %v717 = vpack.c.bf16 %v697, %v695
        %v718 = vpack.c.bf16 %v700, %v698
        %v719 = vpack.c.bf16 %v701, %v699
        %v720 = vpack.c.bf16 %v704, %v702
        %v721 = vpack.c.bf16 %v705, %v703
        %v722 = vld [vmem:[#allocation5] sm:$0xff]
        %v723 = vld [vmem:[#allocation5 + $0x8] sm:$0xff]
        %v724 = vld [vmem:[#allocation5 + $0x10] sm:$0xff]
        %v725 = vld [vmem:[#allocation5 + $0x18] sm:$0xff]
        %v726 = vld [vmem:[#allocation5 + $0x20] sm:$0xff]
        %v727 = vld [vmem:[#allocation5 + $0x28] sm:$0xff]
        %v728 = vld [vmem:[#allocation5 + $0x30] sm:$0xff]
        %v729 = vld [vmem:[#allocation5 + $0x38] sm:$0xff]
        %v730 = vld [vmem:[#allocation5 + $0x40] sm:$0xff]
        %v731 = vld [vmem:[#allocation5 + $0x48] sm:$0xff]
        %v732 = vld [vmem:[#allocation5 + $0x50] sm:$0xff]
        %v733 = vld [vmem:[#allocation5 + $0x58] sm:$0xff]
        %v734 = vld [vmem:[#allocation5 + $0x60] sm:$0xff]
        %v735 = vld [vmem:[#allocation5 + $0x68] sm:$0xff]
        %v736 = vld [vmem:[#allocation5 + $0x70] sm:$0xff]
        %v737 = vld [vmem:[#allocation5 + $0x78] sm:$0xff]
        %v738 = vld [vmem:[#allocation5 + $0x80] sm:$0xff]
        %v739 = vld [vmem:[#allocation5 + $0x88] sm:$0xff]
        %v740 = vld [vmem:[#allocation5 + $0x90] sm:$0xff]
        %v741 = vld [vmem:[#allocation5 + $0x98] sm:$0xff]
        %v742 = vld [vmem:[#allocation5 + $0xa0] sm:$0xff]
        %v743 = vld [vmem:[#allocation5 + $0xa8] sm:$0xff]
        %v744 = vld [vmem:[#allocation5 + $0xb0] sm:$0xff]
        %v745 = vld [vmem:[#allocation5 + $0xb8] sm:$0xff]
        %v746 = vld [vmem:[#allocation5 + $0xc0] sm:$0xff]
        %v747 = vld [vmem:[#allocation5 + $0xc8] sm:$0xff]
        %v748 = vld [vmem:[#allocation5 + $0xd0] sm:$0xff]
        %v749 = vld [vmem:[#allocation5 + $0xd8] sm:$0xff]
        %v750 = vld [vmem:[#allocation5 + $0xe0] sm:$0xff]
        %v751 = vld [vmem:[#allocation5 + $0xe8] sm:$0xff]
        %v752 = vld [vmem:[#allocation5 + $0xf0] sm:$0xff]
        %v753 = vld [vmem:[#allocation5 + $0xf8] sm:$0xff]
        %v754 = vld [vmem:[#allocation5 + $0x100] sm:$0xff]
        %v755 = vld [vmem:[#allocation5 + $0x108] sm:$0xff]
        %v756 = vld [vmem:[#allocation5 + $0x110] sm:$0xff]
        %v757 = vld [vmem:[#allocation5 + $0x118] sm:$0xff]
        %v758 = vld [vmem:[#allocation5 + $0x120] sm:$0xff]
        %v759 = vld [vmem:[#allocation5 + $0x128] sm:$0xff]
        %v760 = vld [vmem:[#allocation5 + $0x130] sm:$0xff]
        %v761 = vld [vmem:[#allocation5 + $0x138] sm:$0xff]
        %v762 = vld [vmem:[#allocation5 + $0x140] sm:$0xff]
        %v763 = vld [vmem:[#allocation5 + $0x148] sm:$0xff]
        %v764 = vld [vmem:[#allocation5 + $0x150] sm:$0xff]
        %v765 = vld [vmem:[#allocation5 + $0x158] sm:$0xff]
        %v766 = vld [vmem:[#allocation5 + $0x160] sm:$0xff]
        %v767 = vld [vmem:[#allocation5 + $0x168] sm:$0xff]
        %v768 = vld [vmem:[#allocation5 + $0x170] sm:$0xff]
        %v769 = vld [vmem:[#allocation5 + $0x178] sm:$0xff]
        %v770 = vld [vmem:[#allocation5 + $0x180] sm:$0xff]
        %v771 = vld [vmem:[#allocation5 + $0x188] sm:$0xff]
        %v772 = vld [vmem:[#allocation5 + $0x190] sm:$0xff]
        %v773 = vld [vmem:[#allocation5 + $0x198] sm:$0xff]
        %v774 = vld [vmem:[#allocation5 + $0x1a0] sm:$0xff]
        %v775 = vld [vmem:[#allocation5 + $0x1a8] sm:$0xff]
        %v776 = vld [vmem:[#allocation5 + $0x1b0] sm:$0xff]
        %v777 = vld [vmem:[#allocation5 + $0x1b8] sm:$0xff]
        %v778 = vld [vmem:[#allocation5 + $0x1c0] sm:$0xff]
        %v779 = vld [vmem:[#allocation5 + $0x1c8] sm:$0xff]
        %v780 = vld [vmem:[#allocation5 + $0x1d0] sm:$0xff]
        %v781 = vld [vmem:[#allocation5 + $0x1d8] sm:$0xff]
        %v782 = vld [vmem:[#allocation5 + $0x1e0] sm:$0xff]
        %v783 = vld [vmem:[#allocation5 + $0x1e8] sm:$0xff]
        %v784 = vld [vmem:[#allocation5 + $0x1f0] sm:$0xff]
        %v785 = vld [vmem:[#allocation5 + $0x1f8] sm:$0xff]
        %v786 = vld [vmem:[#allocation5 + $0x200] sm:$0xff]
        %v787 = vld [vmem:[#allocation5 + $0x208] sm:$0xff]
        %v788 = vld [vmem:[#allocation5 + $0x210] sm:$0xff]
        %v789 = vld [vmem:[#allocation5 + $0x218] sm:$0xff]
        %v790 = vld [vmem:[#allocation5 + $0x220] sm:$0xff]
        %v791 = vld [vmem:[#allocation5 + $0x228] sm:$0xff]
        %v792 = vld [vmem:[#allocation5 + $0x230] sm:$0xff]
        %v793 = vld [vmem:[#allocation5 + $0x238] sm:$0xff]
        %v794 = vld [vmem:[#allocation5 + $0x240] sm:$0xff]
        %v795 = vld [vmem:[#allocation5 + $0x248] sm:$0xff]
        %v796 = vld [vmem:[#allocation5 + $0x250] sm:$0xff]
        %v797 = vld [vmem:[#allocation5 + $0x258] sm:$0xff]
        %v798 = vld [vmem:[#allocation5 + $0x260] sm:$0xff]
        %v799 = vld [vmem:[#allocation5 + $0x268] sm:$0xff]
        %v800 = vld [vmem:[#allocation5 + $0x270] sm:$0xff]
        %v801 = vld [vmem:[#allocation5 + $0x278] sm:$0xff]
        %v802 = vld [vmem:[#allocation5 + $0x280] sm:$0xff]
        %v803 = vld [vmem:[#allocation5 + $0x288] sm:$0xff]
        %v804 = vld [vmem:[#allocation5 + $0x290] sm:$0xff]
        %v805 = vld [vmem:[#allocation5 + $0x298] sm:$0xff]
        %v806 = vld [vmem:[#allocation5 + $0x2a0] sm:$0xff]
        %v807 = vld [vmem:[#allocation5 + $0x2a8] sm:$0xff]
        %v808 = vld [vmem:[#allocation5 + $0x2b0] sm:$0xff]
        %v809 = vld [vmem:[#allocation5 + $0x2b8] sm:$0xff]
        %v810 = vld [vmem:[#allocation5 + $0x2c0] sm:$0xff]
        %v811 = vld [vmem:[#allocation5 + $0x2c8] sm:$0xff]
        %v812 = vld [vmem:[#allocation5 + $0x2d0] sm:$0xff]
        %v813 = vld [vmem:[#allocation5 + $0x2d8] sm:$0xff]
        %v814 = vld [vmem:[#allocation5 + $0x2e0] sm:$0xff]
        %v815 = vld [vmem:[#allocation5 + $0x2e8] sm:$0xff]
        %v816 = vld [vmem:[#allocation5 + $0x2f0] sm:$0xff]
        %v817 = vld [vmem:[#allocation5 + $0x2f8] sm:$0xff]
        %v818 = vld [vmem:[#allocation5 + $0x300] sm:$0xff]
        %v819 = vld [vmem:[#allocation5 + $0x308] sm:$0xff]
        %v820 = vld [vmem:[#allocation5 + $0x310] sm:$0xff]
        %v821 = vld [vmem:[#allocation5 + $0x318] sm:$0xff]
        %v822 = vld [vmem:[#allocation5 + $0x320] sm:$0xff]
        %v823 = vld [vmem:[#allocation5 + $0x328] sm:$0xff]
        %v824 = vld [vmem:[#allocation5 + $0x330] sm:$0xff]
        %v825 = vld [vmem:[#allocation5 + $0x338] sm:$0xff]
        %v826 = vld [vmem:[#allocation5 + $0x340] sm:$0xff]
        %v827 = vld [vmem:[#allocation5 + $0x348] sm:$0xff]
        %v828 = vld [vmem:[#allocation5 + $0x350] sm:$0xff]
        %v829 = vld [vmem:[#allocation5 + $0x358] sm:$0xff]
        %v830 = vld [vmem:[#allocation5 + $0x360] sm:$0xff]
        %v831 = vld [vmem:[#allocation5 + $0x368] sm:$0xff]
        %v832 = vld [vmem:[#allocation5 + $0x370] sm:$0xff]
        %v833 = vld [vmem:[#allocation5 + $0x378] sm:$0xff]
        %v834 = vld [vmem:[#allocation5 + $0x380] sm:$0xff]
        %v835 = vld [vmem:[#allocation5 + $0x388] sm:$0xff]
        %v836 = vld [vmem:[#allocation5 + $0x390] sm:$0xff]
        %v837 = vld [vmem:[#allocation5 + $0x398] sm:$0xff]
        %v838 = vld [vmem:[#allocation5 + $0x3a0] sm:$0xff]
        %v839 = vld [vmem:[#allocation5 + $0x3a8] sm:$0xff]
        %v840 = vld [vmem:[#allocation5 + $0x3b0] sm:$0xff]
        %v841 = vld [vmem:[#allocation5 + $0x3b8] sm:$0xff]
        %v842 = vld [vmem:[#allocation5 + $0x3c0] sm:$0xff]
        %v843 = vld [vmem:[#allocation5 + $0x3c8] sm:$0xff]
        %v844 = vld [vmem:[#allocation5 + $0x3d0] sm:$0xff]
        %v845 = vld [vmem:[#allocation5 + $0x3d8] sm:$0xff]
        %v846 = vld [vmem:[#allocation5 + $0x3e0] sm:$0xff]
        %v847 = vld [vmem:[#allocation5 + $0x3e8] sm:$0xff]
        %v848 = vld [vmem:[#allocation5 + $0x3f0] sm:$0xff]
        %v849 = vld [vmem:[#allocation5 + $0x3f8] sm:$0xff]
        %v850 = vld [vmem:[%s4] sm:$0xff]
        %v852 = vlaneseq
        %v853 = vshrl.u32 %v852, 7
        %v854 = vsub.s32 0, %v853
        %v855 = vrot.slane %v850, %v854
        %v856 = vlaneseq
        %v857 = vshrl.u32 %v856, 7
        %v858 = vsub.s32 1, %v857
        %v859 = vrot.slane %v850, %v858
        %v860 = vlaneseq
        %v861 = vshrl.u32 %v860, 7
        %v862 = vsub.s32 2, %v861
        %v863 = vrot.slane %v850, %v862
        %v864 = vlaneseq
        %v865 = vshrl.u32 %v864, 7
        %v866 = vsub.s32 3, %v865
        %v867 = vrot.slane %v850, %v866
        %v868 = vlaneseq
        %v869 = vshrl.u32 %v868, 7
        %v870 = vsub.s32 4, %v869
        %v871 = vrot.slane %v850, %v870
        %v872 = vlaneseq
        %v873 = vshrl.u32 %v872, 7
        %v874 = vsub.s32 5, %v873
        %v875 = vrot.slane %v850, %v874
        %v876 = vlaneseq
        %v877 = vshrl.u32 %v876, 7
        %v878 = vsub.s32 6, %v877
        %v879 = vrot.slane %v850, %v878
        %v880 = vlaneseq
        %v881 = vshrl.u32 %v880, 7
        %v882 = vsub.s32 7, %v881
        %v883 = vrot.slane %v850, %v882
        %v1020 = vunpack.c.l.b16 %v722
        %v1021 = vunpack.c.h.b16 %v722
        %v1022 = vunpack.c.l.b16 %v723
        %v1023 = vunpack.c.h.b16 %v723
        %v1024 = vunpack.c.l.b16 %v724
        %v1025 = vunpack.c.h.b16 %v724
        %v1026 = vunpack.c.l.b16 %v725
        %v1027 = vunpack.c.h.b16 %v725
        %v1028 = vunpack.c.l.b16 %v726
        %v1029 = vunpack.c.h.b16 %v726
        %v1030 = vunpack.c.l.b16 %v727
        %v1031 = vunpack.c.h.b16 %v727
        %v1032 = vunpack.c.l.b16 %v728
        %v1033 = vunpack.c.h.b16 %v728
        %v1034 = vunpack.c.l.b16 %v729
        %v1035 = vunpack.c.h.b16 %v729
        %v1036 = vunpack.c.l.b16 %v730
        %v1037 = vunpack.c.h.b16 %v730
        %v1038 = vunpack.c.l.b16 %v731
        %v1039 = vunpack.c.h.b16 %v731
        %v1040 = vunpack.c.l.b16 %v732
        %v1041 = vunpack.c.h.b16 %v732
        %v1042 = vunpack.c.l.b16 %v733
        %v1043 = vunpack.c.h.b16 %v733
        %v1044 = vunpack.c.l.b16 %v734
        %v1045 = vunpack.c.h.b16 %v734
        %v1046 = vunpack.c.l.b16 %v735
        %v1047 = vunpack.c.h.b16 %v735
        %v1048 = vunpack.c.l.b16 %v736
        %v1049 = vunpack.c.h.b16 %v736
        %v1050 = vunpack.c.l.b16 %v737
        %v1051 = vunpack.c.h.b16 %v737
        %v1052 = vunpack.c.l.b16 %v738
        %v1053 = vunpack.c.h.b16 %v738
        %v1054 = vunpack.c.l.b16 %v739
        %v1055 = vunpack.c.h.b16 %v739
        %v1056 = vunpack.c.l.b16 %v740
        %v1057 = vunpack.c.h.b16 %v740
        %v1058 = vunpack.c.l.b16 %v741
        %v1059 = vunpack.c.h.b16 %v741
        %v1060 = vunpack.c.l.b16 %v742
        %v1061 = vunpack.c.h.b16 %v742
        %v1062 = vunpack.c.l.b16 %v743
        %v1063 = vunpack.c.h.b16 %v743
        %v1064 = vunpack.c.l.b16 %v744
        %v1065 = vunpack.c.h.b16 %v744
        %v1066 = vunpack.c.l.b16 %v745
        %v1067 = vunpack.c.h.b16 %v745
        %v1068 = vunpack.c.l.b16 %v746
        %v1069 = vunpack.c.h.b16 %v746
        %v1070 = vunpack.c.l.b16 %v747
        %v1071 = vunpack.c.h.b16 %v747
        %v1072 = vunpack.c.l.b16 %v748
        %v1073 = vunpack.c.h.b16 %v748
        %v1074 = vunpack.c.l.b16 %v749
        %v1075 = vunpack.c.h.b16 %v749
        %v1076 = vunpack.c.l.b16 %v750
        %v1077 = vunpack.c.h.b16 %v750
        %v1078 = vunpack.c.l.b16 %v751
        %v1079 = vunpack.c.h.b16 %v751
        %v1080 = vunpack.c.l.b16 %v752
        %v1081 = vunpack.c.h.b16 %v752
        %v1082 = vunpack.c.l.b16 %v753
        %v1083 = vunpack.c.h.b16 %v753
        %v1084 = vunpack.c.l.b16 %v754
        %v1085 = vunpack.c.h.b16 %v754
        %v1086 = vunpack.c.l.b16 %v755
        %v1087 = vunpack.c.h.b16 %v755
        %v1088 = vunpack.c.l.b16 %v756
        %v1089 = vunpack.c.h.b16 %v756
        %v1090 = vunpack.c.l.b16 %v757
        %v1091 = vunpack.c.h.b16 %v757
        %v1092 = vunpack.c.l.b16 %v758
        %v1093 = vunpack.c.h.b16 %v758
        %v1094 = vunpack.c.l.b16 %v759
        %v1095 = vunpack.c.h.b16 %v759
        %v1096 = vunpack.c.l.b16 %v760
        %v1097 = vunpack.c.h.b16 %v760
        %v1098 = vunpack.c.l.b16 %v761
        %v1099 = vunpack.c.h.b16 %v761
        %v1100 = vunpack.c.l.b16 %v762
        %v1101 = vunpack.c.h.b16 %v762
        %v1102 = vunpack.c.l.b16 %v763
        %v1103 = vunpack.c.h.b16 %v763
        %v1104 = vunpack.c.l.b16 %v764
        %v1105 = vunpack.c.h.b16 %v764
        %v1106 = vunpack.c.l.b16 %v765
        %v1107 = vunpack.c.h.b16 %v765
        %v1108 = vunpack.c.l.b16 %v766
        %v1109 = vunpack.c.h.b16 %v766
        %v1110 = vunpack.c.l.b16 %v767
        %v1111 = vunpack.c.h.b16 %v767
        %v1112 = vunpack.c.l.b16 %v768
        %v1113 = vunpack.c.h.b16 %v768
        %v1114 = vunpack.c.l.b16 %v769
        %v1115 = vunpack.c.h.b16 %v769
        %v1116 = vunpack.c.l.b16 %v770
        %v1117 = vunpack.c.h.b16 %v770
        %v1118 = vunpack.c.l.b16 %v771
        %v1119 = vunpack.c.h.b16 %v771
        %v1120 = vunpack.c.l.b16 %v772
        %v1121 = vunpack.c.h.b16 %v772
        %v1122 = vunpack.c.l.b16 %v773
        %v1123 = vunpack.c.h.b16 %v773
        %v1124 = vunpack.c.l.b16 %v774
        %v1125 = vunpack.c.h.b16 %v774
        %v1126 = vunpack.c.l.b16 %v775
        %v1127 = vunpack.c.h.b16 %v775
        %v1128 = vunpack.c.l.b16 %v776
        %v1129 = vunpack.c.h.b16 %v776
        %v1130 = vunpack.c.l.b16 %v777
        %v1131 = vunpack.c.h.b16 %v777
        %v1132 = vunpack.c.l.b16 %v778
        %v1133 = vunpack.c.h.b16 %v778
        %v1134 = vunpack.c.l.b16 %v779
        %v1135 = vunpack.c.h.b16 %v779
        %v1136 = vunpack.c.l.b16 %v780
        %v1137 = vunpack.c.h.b16 %v780
        %v1138 = vunpack.c.l.b16 %v781
        %v1139 = vunpack.c.h.b16 %v781
        %v1140 = vunpack.c.l.b16 %v782
        %v1141 = vunpack.c.h.b16 %v782
        %v1142 = vunpack.c.l.b16 %v783
        %v1143 = vunpack.c.h.b16 %v783
        %v1144 = vunpack.c.l.b16 %v784
        %v1145 = vunpack.c.h.b16 %v784
        %v1146 = vunpack.c.l.b16 %v785
        %v1147 = vunpack.c.h.b16 %v785
        %v1148 = vunpack.c.l.b16 %v786
        %v1149 = vunpack.c.h.b16 %v786
        %v1150 = vunpack.c.l.b16 %v787
        %v1151 = vunpack.c.h.b16 %v787
        %v1152 = vunpack.c.l.b16 %v788
        %v1153 = vunpack.c.h.b16 %v788
        %v1154 = vunpack.c.l.b16 %v789
        %v1155 = vunpack.c.h.b16 %v789
        %v1156 = vunpack.c.l.b16 %v790
        %v1157 = vunpack.c.h.b16 %v790
        %v1158 = vunpack.c.l.b16 %v791
        %v1159 = vunpack.c.h.b16 %v791
        %v1160 = vunpack.c.l.b16 %v792
        %v1161 = vunpack.c.h.b16 %v792
        %v1162 = vunpack.c.l.b16 %v793
        %v1163 = vunpack.c.h.b16 %v793
        %v1164 = vunpack.c.l.b16 %v794
        %v1165 = vunpack.c.h.b16 %v794
        %v1166 = vunpack.c.l.b16 %v795
        %v1167 = vunpack.c.h.b16 %v795
        %v1168 = vunpack.c.l.b16 %v796
        %v1169 = vunpack.c.h.b16 %v796
        %v1170 = vunpack.c.l.b16 %v797
        %v1171 = vunpack.c.h.b16 %v797
        %v1172 = vunpack.c.l.b16 %v798
        %v1173 = vunpack.c.h.b16 %v798
        %v1174 = vunpack.c.l.b16 %v799
        %v1175 = vunpack.c.h.b16 %v799
        %v1176 = vunpack.c.l.b16 %v800
        %v1177 = vunpack.c.h.b16 %v800
        %v1178 = vunpack.c.l.b16 %v801
        %v1179 = vunpack.c.h.b16 %v801
        %v1180 = vunpack.c.l.b16 %v802
        %v1181 = vunpack.c.h.b16 %v802
        %v1182 = vunpack.c.l.b16 %v803
        %v1183 = vunpack.c.h.b16 %v803
        %v1184 = vunpack.c.l.b16 %v804
        %v1185 = vunpack.c.h.b16 %v804
        %v1186 = vunpack.c.l.b16 %v805
        %v1187 = vunpack.c.h.b16 %v805
        %v1188 = vunpack.c.l.b16 %v806
        %v1189 = vunpack.c.h.b16 %v806
        %v1190 = vunpack.c.l.b16 %v807
        %v1191 = vunpack.c.h.b16 %v807
        %v1192 = vunpack.c.l.b16 %v808
        %v1193 = vunpack.c.h.b16 %v808
        %v1194 = vunpack.c.l.b16 %v809
        %v1195 = vunpack.c.h.b16 %v809
        %v1196 = vunpack.c.l.b16 %v810
        %v1197 = vunpack.c.h.b16 %v810
        %v1198 = vunpack.c.l.b16 %v811
        %v1199 = vunpack.c.h.b16 %v811
        %v1200 = vunpack.c.l.b16 %v812
        %v1201 = vunpack.c.h.b16 %v812
        %v1202 = vunpack.c.l.b16 %v813
        %v1203 = vunpack.c.h.b16 %v813
        %v1204 = vunpack.c.l.b16 %v814
        %v1205 = vunpack.c.h.b16 %v814
        %v1206 = vunpack.c.l.b16 %v815
        %v1207 = vunpack.c.h.b16 %v815
        %v1208 = vunpack.c.l.b16 %v816
        %v1209 = vunpack.c.h.b16 %v816
        %v1210 = vunpack.c.l.b16 %v817
        %v1211 = vunpack.c.h.b16 %v817
        %v1212 = vunpack.c.l.b16 %v818
        %v1213 = vunpack.c.h.b16 %v818
        %v1214 = vunpack.c.l.b16 %v819
        %v1215 = vunpack.c.h.b16 %v819
        %v1216 = vunpack.c.l.b16 %v820
        %v1217 = vunpack.c.h.b16 %v820
        %v1218 = vunpack.c.l.b16 %v821
        %v1219 = vunpack.c.h.b16 %v821
        %v1220 = vunpack.c.l.b16 %v822
        %v1221 = vunpack.c.h.b16 %v822
        %v1222 = vunpack.c.l.b16 %v823
        %v1223 = vunpack.c.h.b16 %v823
        %v1224 = vunpack.c.l.b16 %v824
        %v1225 = vunpack.c.h.b16 %v824
        %v1226 = vunpack.c.l.b16 %v825
        %v1227 = vunpack.c.h.b16 %v825
        %v1228 = vunpack.c.l.b16 %v826
        %v1229 = vunpack.c.h.b16 %v826
        %v1230 = vunpack.c.l.b16 %v827
        %v1231 = vunpack.c.h.b16 %v827
        %v1232 = vunpack.c.l.b16 %v828
        %v1233 = vunpack.c.h.b16 %v828
        %v1234 = vunpack.c.l.b16 %v829
        %v1235 = vunpack.c.h.b16 %v829
        %v1236 = vunpack.c.l.b16 %v830
        %v1237 = vunpack.c.h.b16 %v830
        %v1238 = vunpack.c.l.b16 %v831
        %v1239 = vunpack.c.h.b16 %v831
        %v1240 = vunpack.c.l.b16 %v832
        %v1241 = vunpack.c.h.b16 %v832
        %v1242 = vunpack.c.l.b16 %v833
        %v1243 = vunpack.c.h.b16 %v833
        %v1244 = vunpack.c.l.b16 %v834
        %v1245 = vunpack.c.h.b16 %v834
        %v1246 = vunpack.c.l.b16 %v835
        %v1247 = vunpack.c.h.b16 %v835
        %v1248 = vunpack.c.l.b16 %v836
        %v1249 = vunpack.c.h.b16 %v836
        %v1250 = vunpack.c.l.b16 %v837
        %v1251 = vunpack.c.h.b16 %v837
        %v1252 = vunpack.c.l.b16 %v838
        %v1253 = vunpack.c.h.b16 %v838
        %v1254 = vunpack.c.l.b16 %v839
        %v1255 = vunpack.c.h.b16 %v839
        %v1256 = vunpack.c.l.b16 %v840
        %v1257 = vunpack.c.h.b16 %v840
        %v1258 = vunpack.c.l.b16 %v841
        %v1259 = vunpack.c.h.b16 %v841
        %v1260 = vunpack.c.l.b16 %v842
        %v1261 = vunpack.c.h.b16 %v842
        %v1262 = vunpack.c.l.b16 %v843
        %v1263 = vunpack.c.h.b16 %v843
        %v1264 = vunpack.c.l.b16 %v844
        %v1265 = vunpack.c.h.b16 %v844
        %v1266 = vunpack.c.l.b16 %v845
        %v1267 = vunpack.c.h.b16 %v845
        %v1268 = vunpack.c.l.b16 %v846
        %v1269 = vunpack.c.h.b16 %v846
        %v1270 = vunpack.c.l.b16 %v847
        %v1271 = vunpack.c.h.b16 %v847
        %v1272 = vunpack.c.l.b16 %v848
        %v1273 = vunpack.c.h.b16 %v848
        %v1274 = vunpack.c.l.b16 %v849
        %v1275 = vunpack.c.h.b16 %v849
        %v1276 = vpack.c.b16 %v1028, %v1020
        %v1277 = vpack.c.b16 %v1029, %v1021
        %v1278 = vpack.c.b16 %v1030, %v1022
        %v1279 = vpack.c.b16 %v1031, %v1023
        %v1280 = vpack.c.b16 %v1032, %v1024
        %v1281 = vpack.c.b16 %v1033, %v1025
        %v1282 = vpack.c.b16 %v1034, %v1026
        %v1283 = vpack.c.b16 %v1035, %v1027
        %v1284 = vpack.c.b16 %v1044, %v1036
        %v1285 = vpack.c.b16 %v1045, %v1037
        %v1286 = vpack.c.b16 %v1046, %v1038
        %v1287 = vpack.c.b16 %v1047, %v1039
        %v1288 = vpack.c.b16 %v1048, %v1040
        %v1289 = vpack.c.b16 %v1049, %v1041
        %v1290 = vpack.c.b16 %v1050, %v1042
        %v1291 = vpack.c.b16 %v1051, %v1043
        %v1292 = vpack.c.b16 %v1060, %v1052
        %v1293 = vpack.c.b16 %v1061, %v1053
        %v1294 = vpack.c.b16 %v1062, %v1054
        %v1295 = vpack.c.b16 %v1063, %v1055
        %v1296 = vpack.c.b16 %v1064, %v1056
        %v1297 = vpack.c.b16 %v1065, %v1057
        %v1298 = vpack.c.b16 %v1066, %v1058
        %v1299 = vpack.c.b16 %v1067, %v1059
        %v1300 = vpack.c.b16 %v1076, %v1068
        %v1301 = vpack.c.b16 %v1077, %v1069
        %v1302 = vpack.c.b16 %v1078, %v1070
        %v1303 = vpack.c.b16 %v1079, %v1071
        %v1304 = vpack.c.b16 %v1080, %v1072
        %v1305 = vpack.c.b16 %v1081, %v1073
        %v1306 = vpack.c.b16 %v1082, %v1074
        %v1307 = vpack.c.b16 %v1083, %v1075
        %v1308 = vpack.c.b16 %v1092, %v1084
        %v1309 = vpack.c.b16 %v1093, %v1085
        %v1310 = vpack.c.b16 %v1094, %v1086
        %v1311 = vpack.c.b16 %v1095, %v1087
        %v1312 = vpack.c.b16 %v1096, %v1088
        %v1313 = vpack.c.b16 %v1097, %v1089
        %v1314 = vpack.c.b16 %v1098, %v1090
        %v1315 = vpack.c.b16 %v1099, %v1091
        %v1316 = vpack.c.b16 %v1108, %v1100
        %v1317 = vpack.c.b16 %v1109, %v1101
        %v1318 = vpack.c.b16 %v1110, %v1102
        %v1319 = vpack.c.b16 %v1111, %v1103
        %v1320 = vpack.c.b16 %v1112, %v1104
        %v1321 = vpack.c.b16 %v1113, %v1105
        %v1322 = vpack.c.b16 %v1114, %v1106
        %v1323 = vpack.c.b16 %v1115, %v1107
        %v1324 = vpack.c.b16 %v1124, %v1116
        %v1325 = vpack.c.b16 %v1125, %v1117
        %v1326 = vpack.c.b16 %v1126, %v1118
        %v1327 = vpack.c.b16 %v1127, %v1119
        %v1328 = vpack.c.b16 %v1128, %v1120
        %v1329 = vpack.c.b16 %v1129, %v1121
        %v1330 = vpack.c.b16 %v1130, %v1122
        %v1331 = vpack.c.b16 %v1131, %v1123
        %v1332 = vpack.c.b16 %v1140, %v1132
        %v1333 = vpack.c.b16 %v1141, %v1133
        %v1334 = vpack.c.b16 %v1142, %v1134
        %v1335 = vpack.c.b16 %v1143, %v1135
        %v1336 = vpack.c.b16 %v1144, %v1136
        %v1337 = vpack.c.b16 %v1145, %v1137
        %v1338 = vpack.c.b16 %v1146, %v1138
        %v1339 = vpack.c.b16 %v1147, %v1139
        %v1340 = vpack.c.b16 %v1156, %v1148
        %v1341 = vpack.c.b16 %v1157, %v1149
        %v1342 = vpack.c.b16 %v1158, %v1150
        %v1343 = vpack.c.b16 %v1159, %v1151
        %v1344 = vpack.c.b16 %v1160, %v1152
        %v1345 = vpack.c.b16 %v1161, %v1153
        %v1346 = vpack.c.b16 %v1162, %v1154
        %v1347 = vpack.c.b16 %v1163, %v1155
        %v1348 = vpack.c.b16 %v1172, %v1164
        %v1349 = vpack.c.b16 %v1173, %v1165
        %v1350 = vpack.c.b16 %v1174, %v1166
        %v1351 = vpack.c.b16 %v1175, %v1167
        %v1352 = vpack.c.b16 %v1176, %v1168
        %v1353 = vpack.c.b16 %v1177, %v1169
        %v1354 = vpack.c.b16 %v1178, %v1170
        %v1355 = vpack.c.b16 %v1179, %v1171
        %v1356 = vpack.c.b16 %v1188, %v1180
        %v1357 = vpack.c.b16 %v1189, %v1181
        %v1358 = vpack.c.b16 %v1190, %v1182
        %v1359 = vpack.c.b16 %v1191, %v1183
        %v1360 = vpack.c.b16 %v1192, %v1184
        %v1361 = vpack.c.b16 %v1193, %v1185
        %v1362 = vpack.c.b16 %v1194, %v1186
        %v1363 = vpack.c.b16 %v1195, %v1187
        %v1364 = vpack.c.b16 %v1204, %v1196
        %v1365 = vpack.c.b16 %v1205, %v1197
        %v1366 = vpack.c.b16 %v1206, %v1198
        %v1367 = vpack.c.b16 %v1207, %v1199
        %v1368 = vpack.c.b16 %v1208, %v1200
        %v1369 = vpack.c.b16 %v1209, %v1201
        %v1370 = vpack.c.b16 %v1210, %v1202
        %v1371 = vpack.c.b16 %v1211, %v1203
        %v1372 = vpack.c.b16 %v1220, %v1212
        %v1373 = vpack.c.b16 %v1221, %v1213
        %v1374 = vpack.c.b16 %v1222, %v1214
        %v1375 = vpack.c.b16 %v1223, %v1215
        %v1376 = vpack.c.b16 %v1224, %v1216
        %v1377 = vpack.c.b16 %v1225, %v1217
        %v1378 = vpack.c.b16 %v1226, %v1218
        %v1379 = vpack.c.b16 %v1227, %v1219
        %v1380 = vpack.c.b16 %v1236, %v1228
        %v1381 = vpack.c.b16 %v1237, %v1229
        %v1382 = vpack.c.b16 %v1238, %v1230
        %v1383 = vpack.c.b16 %v1239, %v1231
        %v1384 = vpack.c.b16 %v1240, %v1232
        %v1385 = vpack.c.b16 %v1241, %v1233
        %v1386 = vpack.c.b16 %v1242, %v1234
        %v1387 = vpack.c.b16 %v1243, %v1235
        %v1388 = vpack.c.b16 %v1252, %v1244
        %v1389 = vpack.c.b16 %v1253, %v1245
        %v1390 = vpack.c.b16 %v1254, %v1246
        %v1391 = vpack.c.b16 %v1255, %v1247
        %v1392 = vpack.c.b16 %v1256, %v1248
        %v1393 = vpack.c.b16 %v1257, %v1249
        %v1394 = vpack.c.b16 %v1258, %v1250
        %v1395 = vpack.c.b16 %v1259, %v1251
        %v1396 = vpack.c.b16 %v1268, %v1260
        %v1397 = vpack.c.b16 %v1269, %v1261
        %v1398 = vpack.c.b16 %v1270, %v1262
        %v1399 = vpack.c.b16 %v1271, %v1263
        %v1400 = vpack.c.b16 %v1272, %v1264
        %v1401 = vpack.c.b16 %v1273, %v1265
        %v1402 = vpack.c.b16 %v1274, %v1266
        %v1403 = vpack.c.b16 %v1275, %v1267
        %1532 = vmatprep.subr.bf16.mxu0 %v1277
        %1533 = vmatpush1.bf16.msra.mxu0 %v1276
        %1534 = vmatprep.subr.bf16.mxu0 %v1285
        %1535 = vmatpush1.bf16.msra.mxu0 %v1284
        %1536 = vmatprep.subr.bf16.mxu0 %v1293
        %1537 = vmatpush1.bf16.msra.mxu0 %v1292
        %1538 = vmatprep.subr.bf16.mxu0 %v1301
        %1539 = vmatpush1.bf16.msra.mxu0 %v1300
        %1540 = vmatprep.subr.bf16.mxu0 %v1309
        %1541 = vmatpush1.bf16.msra.mxu0 %v1308
        %1542 = vmatprep.subr.bf16.mxu0 %v1317
        %1543 = vmatpush1.bf16.msra.mxu0 %v1316
        %1544 = vmatprep.subr.bf16.mxu0 %v1325
        %1545 = vmatpush1.bf16.msra.mxu0 %v1324
        %1546 = vmatprep.subr.bf16.mxu0 %v1333
        %1547 = vmatpush1.bf16.msra.mxu0 %v1332
        %1548 = vmatprep.subr.bf16.mxu0 %v1341
        %1549 = vmatpush1.bf16.msra.mxu0 %v1340
        %1550 = vmatprep.subr.bf16.mxu0 %v1349
        %1551 = vmatpush1.bf16.msra.mxu0 %v1348
        %1552 = vmatprep.subr.bf16.mxu0 %v1357
        %1553 = vmatpush1.bf16.msra.mxu0 %v1356
        %1554 = vmatprep.subr.bf16.mxu0 %v1365
        %1555 = vmatpush1.bf16.msra.mxu0 %v1364
        %1556 = vmatprep.subr.bf16.mxu0 %v1373
        %1557 = vmatpush1.bf16.msra.mxu0 %v1372
        %1558 = vmatprep.subr.bf16.mxu0 %v1381
        %1559 = vmatpush1.bf16.msra.mxu0 %v1380
        %1560 = vmatprep.subr.bf16.mxu0 %v1389
        %1561 = vmatpush1.bf16.msra.mxu0 %v1388
        %1562 = vmatprep.subr.bf16.mxu0 %v1397
        %1563 = vmatpush1.bf16.msra.mxu0 %v1396
        %1564 = vmatprep.mubr.bf16.mxu0 %v707
        %1565 = vmatmul.mubr.bf16.gmra.mrb[0].mxu0 %v706
        %v1566 = vpop.f32.mrb[0].mxu0
        %v1567 = vadd.f32 %v855, %v1566
        %v1568 = vpop.f32.mrb[0].mxu0
        %v1569 = vadd.f32 %v859, %v1568
        %v1570 = vpop.f32.mrb[0].mxu0
        %v1571 = vadd.f32 %v855, %v1570
        %v1572 = vpop.f32.mrb[0].mxu0
        %v1573 = vadd.f32 %v859, %v1572
        %1574 = vmatprep.mubr.bf16.mxu0 %v709
        %1575 = vmatmul.mubr.bf16.gmra.mrb[0].mxu0 %v708
        %v1576 = vpop.f32.mrb[0].mxu0
        %v1577 = vadd.f32 %v855, %v1576
        %v1578 = vpop.f32.mrb[0].mxu0
        %v1579 = vadd.f32 %v859, %v1578
        %v1580 = vpop.f32.mrb[0].mxu0
        %v1581 = vadd.f32 %v855, %v1580
        %v1582 = vpop.f32.mrb[0].mxu0
        %v1583 = vadd.f32 %v859, %v1582
        %1584 = vmatprep.mubr.bf16.mxu0 %v711
        %1585 = vmatmul.mubr.bf16.gmra.mrb[0].mxu0 %v710
        %v1586 = vpop.f32.mrb[0].mxu0
        %v1587 = vadd.f32 %v855, %v1586
        %v1588 = vpop.f32.mrb[0].mxu0
        %v1589 = vadd.f32 %v859, %v1588
        %v1590 = vpop.f32.mrb[0].mxu0
        %v1591 = vadd.f32 %v855, %v1590
        %v1592 = vpop.f32.mrb[0].mxu0
        %v1593 = vadd.f32 %v859, %v1592
        %1594 = vmatprep.mubr.bf16.mxu0 %v713
        %1595 = vmatmul.mubr.bf16.gmra.mrb[0].mxu0 %v712
        %v1596 = vpop.f32.mrb[0].mxu0
        %v1597 = vadd.f32 %v855, %v1596
        %v1598 = vpop.f32.mrb[0].mxu0
        %v1599 = vadd.f32 %v859, %v1598
        %v1600 = vpop.f32.mrb[0].mxu0
        %v1601 = vadd.f32 %v855, %v1600
        %v1602 = vpop.f32.mrb[0].mxu0
        %v1603 = vadd.f32 %v859, %v1602
        %1604 = vmatprep.mubr.bf16.mxu0 %v715
        %1605 = vmatmul.mubr.bf16.gmra.mrb[0].mxu0 %v714
        %v1606 = vpop.f32.mrb[0].mxu0
        %v1607 = vadd.f32 %v855, %v1606
        %v1608 = vpop.f32.mrb[0].mxu0
        %v1609 = vadd.f32 %v859, %v1608
        %v1610 = vpop.f32.mrb[0].mxu0
        %v1611 = vadd.f32 %v855, %v1610
        %v1612 = vpop.f32.mrb[0].mxu0
        %v1613 = vadd.f32 %v859, %v1612
        %1614 = vmatprep.mubr.bf16.mxu0 %v717
        %1615 = vmatmul.mubr.bf16.gmra.mrb[0].mxu0 %v716
        %v1616 = vpop.f32.mrb[0].mxu0
        %v1617 = vadd.f32 %v855, %v1616
        %v1618 = vpop.f32.mrb[0].mxu0
        %v1619 = vadd.f32 %v859, %v1618
        %v1620 = vpop.f32.mrb[0].mxu0
        %v1621 = vadd.f32 %v855, %v1620
        %v1622 = vpop.f32.mrb[0].mxu0
        %v1623 = vadd.f32 %v859, %v1622
        %1624 = vmatprep.mubr.bf16.mxu0 %v719
        %1625 = vmatmul.mubr.bf16.gmra.mrb[0].mxu0 %v718
        %v1626 = vpop.f32.mrb[0].mxu0
        %v1627 = vadd.f32 %v855, %v1626
        %v1628 = vpop.f32.mrb[0].mxu0
        %v1629 = vadd.f32 %v859, %v1628
        %v1630 = vpop.f32.mrb[0].mxu0
        %v1631 = vadd.f32 %v855, %v1630
        %v1632 = vpop.f32.mrb[0].mxu0
        %v1633 = vadd.f32 %v859, %v1632
        %1634 = vmatprep.mubr.bf16.mxu0 %v721
        %1635 = vmatmul.mubr.bf16.gmra.mrb[0].mxu0 %v720
        %v1636 = vpop.f32.mrb[0].mxu0
        %v1637 = vadd.f32 %v855, %v1636
        %v1638 = vpop.f32.mrb[0].mxu0
        %v1639 = vadd.f32 %v859, %v1638
        %v1640 = vpop.f32.mrb[0].mxu0
        %v1641 = vadd.f32 %v855, %v1640
        %v1642 = vpop.f32.mrb[0].mxu0
        %v1643 = vadd.f32 %v859, %v1642
        %1644 = vdwg.mxu0
        %1645 = vmatprep.subr.bf16.mxu0 %v1279
        %1646 = vmatpush1.bf16.msra.mxu0 %v1278
        %1647 = vmatprep.subr.bf16.mxu0 %v1287
        %1648 = vmatpush1.bf16.msra.mxu0 %v1286
        %1649 = vmatprep.subr.bf16.mxu0 %v1295
        %1650 = vmatpush1.bf16.msra.mxu0 %v1294
        %1651 = vmatprep.subr.bf16.mxu0 %v1303
        %1652 = vmatpush1.bf16.msra.mxu0 %v1302
        %1653 = vmatprep.subr.bf16.mxu0 %v1311
        %1654 = vmatpush1.bf16.msra.mxu0 %v1310
        %1655 = vmatprep.subr.bf16.mxu0 %v1319
        %1656 = vmatpush1.bf16.msra.mxu0 %v1318
        %1657 = vmatprep.subr.bf16.mxu0 %v1327
        %1658 = vmatpush1.bf16.msra.mxu0 %v1326
        %1659 = vmatprep.subr.bf16.mxu0 %v1335
        %1660 = vmatpush1.bf16.msra.mxu0 %v1334
        %1661 = vmatprep.subr.bf16.mxu0 %v1343
        %1662 = vmatpush1.bf16.msra.mxu0 %v1342
        %1663 = vmatprep.subr.bf16.mxu0 %v1351
        %1664 = vmatpush1.bf16.msra.mxu0 %v1350
        %1665 = vmatprep.subr.bf16.mxu0 %v1359
        %1666 = vmatpush1.bf16.msra.mxu0 %v1358
        %1667 = vmatprep.subr.bf16.mxu0 %v1367
        %1668 = vmatpush1.bf16.msra.mxu0 %v1366
        %1669 = vmatprep.subr.bf16.mxu0 %v1375
        %1670 = vmatpush1.bf16.msra.mxu0 %v1374
        %1671 = vmatprep.subr.bf16.mxu0 %v1383
        %1672 = vmatpush1.bf16.msra.mxu0 %v1382
        %1673 = vmatprep.subr.bf16.mxu0 %v1391
        %1674 = vmatpush1.bf16.msra.mxu0 %v1390
        %1675 = vmatprep.subr.bf16.mxu0 %v1399
        %1676 = vmatpush1.bf16.msra.mxu0 %v1398
        %1677 = vmatprep.mubr.bf16.mxu0 %v707
        %1678 = vmatmul.mubr.bf16.gmra.mrb[0].mxu0 %v706
        %v1679 = vpop.f32.mrb[0].mxu0
        %v1680 = vadd.f32 %v863, %v1679
        %v1681 = vpop.f32.mrb[0].mxu0
        %v1682 = vadd.f32 %v867, %v1681
        %v1683 = vpop.f32.mrb[0].mxu0
        %v1684 = vadd.f32 %v863, %v1683
        %v1685 = vpop.f32.mrb[0].mxu0
        %v1686 = vadd.f32 %v867, %v1685
        %1687 = vmatprep.mubr.bf16.mxu0 %v709
        %1688 = vmatmul.mubr.bf16.gmra.mrb[0].mxu0 %v708
        %v1689 = vpop.f32.mrb[0].mxu0
        %v1690 = vadd.f32 %v863, %v1689
        %v1691 = vpop.f32.mrb[0].mxu0
        %v1692 = vadd.f32 %v867, %v1691
        %v1693 = vpop.f32.mrb[0].mxu0
        %v1694 = vadd.f32 %v863, %v1693
        %v1695 = vpop.f32.mrb[0].mxu0
        %v1696 = vadd.f32 %v867, %v1695
        %1697 = vmatprep.mubr.bf16.mxu0 %v711
        %1698 = vmatmul.mubr.bf16.gmra.mrb[0].mxu0 %v710
        %v1699 = vpop.f32.mrb[0].mxu0
        %v1700 = vadd.f32 %v863, %v1699
        %v1701 = vpop.f32.mrb[0].mxu0
        %v1702 = vadd.f32 %v867, %v1701
        %v1703 = vpop.f32.mrb[0].mxu0
        %v1704 = vadd.f32 %v863, %v1703
        %v1705 = vpop.f32.mrb[0].mxu0
        %v1706 = vadd.f32 %v867, %v1705
        %1707 = vmatprep.mubr.bf16.mxu0 %v713
        %1708 = vmatmul.mubr.bf16.gmra.mrb[0].mxu0 %v712
        %v1709 = vpop.f32.mrb[0].mxu0
        %v1710 = vadd.f32 %v863, %v1709
        %v1711 = vpop.f32.mrb[0].mxu0
        %v1712 = vadd.f32 %v867, %v1711
        %v1713 = vpop.f32.mrb[0].mxu0
        %v1714 = vadd.f32 %v863, %v1713
        %v1715 = vpop.f32.mrb[0].mxu0
        %v1716 = vadd.f32 %v867, %v1715
        %1717 = vmatprep.mubr.bf16.mxu0 %v715
        %1718 = vmatmul.mubr.bf16.gmra.mrb[0].mxu0 %v714
        %v1719 = vpop.f32.mrb[0].mxu0
        %v1720 = vadd.f32 %v863, %v1719
        %v1721 = vpop.f32.mrb[0].mxu0
        %v1722 = vadd.f32 %v867, %v1721
        %v1723 = vpop.f32.mrb[0].mxu0
        %v1724 = vadd.f32 %v863, %v1723
        %v1725 = vpop.f32.mrb[0].mxu0
        %v1726 = vadd.f32 %v867, %v1725
        %1727 = vmatprep.mubr.bf16.mxu0 %v717
        %1728 = vmatmul.mubr.bf16.gmra.mrb[0].mxu0 %v716
        %v1729 = vpop.f32.mrb[0].mxu0
        %v1730 = vadd.f32 %v863, %v1729
        %v1731 = vpop.f32.mrb[0].mxu0
        %v1732 = vadd.f32 %v867, %v1731
        %v1733 = vpop.f32.mrb[0].mxu0
        %v1734 = vadd.f32 %v863, %v1733
        %v1735 = vpop.f32.mrb[0].mxu0
        %v1736 = vadd.f32 %v867, %v1735
        %1737 = vmatprep.mubr.bf16.mxu0 %v719
        %1738 = vmatmul.mubr.bf16.gmra.mrb[0].mxu0 %v718
        %v1739 = vpop.f32.mrb[0].mxu0
        %v1740 = vadd.f32 %v863, %v1739
        %v1741 = vpop.f32.mrb[0].mxu0
        %v1742 = vadd.f32 %v867, %v1741
        %v1743 = vpop.f32.mrb[0].mxu0
        %v1744 = vadd.f32 %v863, %v1743
        %v1745 = vpop.f32.mrb[0].mxu0
        %v1746 = vadd.f32 %v867, %v1745
        %1747 = vmatprep.mubr.bf16.mxu0 %v721
        %1748 = vmatmul.mubr.bf16.gmra.mrb[0].mxu0 %v720
        %v1749 = vpop.f32.mrb[0].mxu0
        %v1750 = vadd.f32 %v863, %v1749
        %v1751 = vpop.f32.mrb[0].mxu0
        %v1752 = vadd.f32 %v867, %v1751
        %v1753 = vpop.f32.mrb[0].mxu0
        %v1754 = vadd.f32 %v863, %v1753
        %v1755 = vpop.f32.mrb[0].mxu0
        %v1756 = vadd.f32 %v867, %v1755
        %1757 = vdwg.mxu0
        %1758 = vmatprep.subr.bf16.mxu0 %v1281
        %1759 = vmatpush1.bf16.msra.mxu0 %v1280
        %1760 = vmatprep.subr.bf16.mxu0 %v1289
        %1761 = vmatpush1.bf16.msra.mxu0 %v1288
        %1762 = vmatprep.subr.bf16.mxu0 %v1297
        %1763 = vmatpush1.bf16.msra.mxu0 %v1296
        %1764 = vmatprep.subr.bf16.mxu0 %v1305
        %1765 = vmatpush1.bf16.msra.mxu0 %v1304
        %1766 = vmatprep.subr.bf16.mxu0 %v1313
        %1767 = vmatpush1.bf16.msra.mxu0 %v1312
        %1768 = vmatprep.subr.bf16.mxu0 %v1321
        %1769 = vmatpush1.bf16.msra.mxu0 %v1320
        %1770 = vmatprep.subr.bf16.mxu0 %v1329
        %1771 = vmatpush1.bf16.msra.mxu0 %v1328
        %1772 = vmatprep.subr.bf16.mxu0 %v1337
        %1773 = vmatpush1.bf16.msra.mxu0 %v1336
        %1774 = vmatprep.subr.bf16.mxu0 %v1345
        %1775 = vmatpush1.bf16.msra.mxu0 %v1344
        %1776 = vmatprep.subr.bf16.mxu0 %v1353
        %1777 = vmatpush1.bf16.msra.mxu0 %v1352
        %1778 = vmatprep.subr.bf16.mxu0 %v1361
        %1779 = vmatpush1.bf16.msra.mxu0 %v1360
        %1780 = vmatprep.subr.bf16.mxu0 %v1369
        %1781 = vmatpush1.bf16.msra.mxu0 %v1368
        %1782 = vmatprep.subr.bf16.mxu0 %v1377
        %1783 = vmatpush1.bf16.msra.mxu0 %v1376
        %1784 = vmatprep.subr.bf16.mxu0 %v1385
        %1785 = vmatpush1.bf16.msra.mxu0 %v1384
        %1786 = vmatprep.subr.bf16.mxu0 %v1393
        %1787 = vmatpush1.bf16.msra.mxu0 %v1392
        %1788 = vmatprep.subr.bf16.mxu0 %v1401
        %1789 = vmatpush1.bf16.msra.mxu0 %v1400
        %1790 = vmatprep.mubr.bf16.mxu0 %v707
        %1791 = vmatmul.mubr.bf16.gmra.mrb[0].mxu0 %v706
        %v1792 = vpop.f32.mrb[0].mxu0
        %v1793 = vadd.f32 %v871, %v1792
        %v1794 = vpop.f32.mrb[0].mxu0
        %v1795 = vadd.f32 %v875, %v1794
        %v1796 = vpop.f32.mrb[0].mxu0
        %v1797 = vadd.f32 %v871, %v1796
        %v1798 = vpop.f32.mrb[0].mxu0
        %v1799 = vadd.f32 %v875, %v1798
        %1800 = vmatprep.mubr.bf16.mxu0 %v709
        %1801 = vmatmul.mubr.bf16.gmra.mrb[0].mxu0 %v708
        %v1802 = vpop.f32.mrb[0].mxu0
        %v1803 = vadd.f32 %v871, %v1802
        %v1804 = vpop.f32.mrb[0].mxu0
        %v1805 = vadd.f32 %v875, %v1804
        %v1806 = vpop.f32.mrb[0].mxu0
        %v1807 = vadd.f32 %v871, %v1806
        %v1808 = vpop.f32.mrb[0].mxu0
        %v1809 = vadd.f32 %v875, %v1808
        %1810 = vmatprep.mubr.bf16.mxu0 %v711
        %1811 = vmatmul.mubr.bf16.gmra.mrb[0].mxu0 %v710
        %v1812 = vpop.f32.mrb[0].mxu0
        %v1813 = vadd.f32 %v871, %v1812
        %v1814 = vpop.f32.mrb[0].mxu0
        %v1815 = vadd.f32 %v875, %v1814
        %v1816 = vpop.f32.mrb[0].mxu0
        %v1817 = vadd.f32 %v871, %v1816
        %v1818 = vpop.f32.mrb[0].mxu0
        %v1819 = vadd.f32 %v875, %v1818
        %1820 = vmatprep.mubr.bf16.mxu0 %v713
        %1821 = vmatmul.mubr.bf16.gmra.mrb[0].mxu0 %v712
        %v1822 = vpop.f32.mrb[0].mxu0
        %v1823 = vadd.f32 %v871, %v1822
        %v1824 = vpop.f32.mrb[0].mxu0
        %v1825 = vadd.f32 %v875, %v1824
        %v1826 = vpop.f32.mrb[0].mxu0
        %v1827 = vadd.f32 %v871, %v1826
        %v1828 = vpop.f32.mrb[0].mxu0
        %v1829 = vadd.f32 %v875, %v1828
        %1830 = vmatprep.mubr.bf16.mxu0 %v715
        %1831 = vmatmul.mubr.bf16.gmra.mrb[0].mxu0 %v714
        %v1832 = vpop.f32.mrb[0].mxu0
        %v1833 = vadd.f32 %v871, %v1832
        %v1834 = vpop.f32.mrb[0].mxu0
        %v1835 = vadd.f32 %v875, %v1834
        %v1836 = vpop.f32.mrb[0].mxu0
        %v1837 = vadd.f32 %v871, %v1836
        %v1838 = vpop.f32.mrb[0].mxu0
        %v1839 = vadd.f32 %v875, %v1838
        %1840 = vmatprep.mubr.bf16.mxu0 %v717
        %1841 = vmatmul.mubr.bf16.gmra.mrb[0].mxu0 %v716
        %v1842 = vpop.f32.mrb[0].mxu0
        %v1843 = vadd.f32 %v871, %v1842
        %v1844 = vpop.f32.mrb[0].mxu0
        %v1845 = vadd.f32 %v875, %v1844
        %v1846 = vpop.f32.mrb[0].mxu0
        %v1847 = vadd.f32 %v871, %v1846
        %v1848 = vpop.f32.mrb[0].mxu0
        %v1849 = vadd.f32 %v875, %v1848
        %1850 = vmatprep.mubr.bf16.mxu0 %v719
        %1851 = vmatmul.mubr.bf16.gmra.mrb[0].mxu0 %v718
        %v1852 = vpop.f32.mrb[0].mxu0
        %v1853 = vadd.f32 %v871, %v1852
        %v1854 = vpop.f32.mrb[0].mxu0
        %v1855 = vadd.f32 %v875, %v1854
        %v1856 = vpop.f32.mrb[0].mxu0
        %v1857 = vadd.f32 %v871, %v1856
        %v1858 = vpop.f32.mrb[0].mxu0
        %v1859 = vadd.f32 %v875, %v1858
        %1860 = vmatprep.mubr.bf16.mxu0 %v721
        %1861 = vmatmul.mubr.bf16.gmra.mrb[0].mxu0 %v720
        %v1862 = vpop.f32.mrb[0].mxu0
        %v1863 = vadd.f32 %v871, %v1862
        %v1864 = vpop.f32.mrb[0].mxu0
        %v1865 = vadd.f32 %v875, %v1864
        %v1866 = vpop.f32.mrb[0].mxu0
        %v1867 = vadd.f32 %v871, %v1866
        %v1868 = vpop.f32.mrb[0].mxu0
        %v1869 = vadd.f32 %v875, %v1868
        %1870 = vdwg.mxu0
        %1871 = vmatprep.subr.bf16.mxu0 %v1283
        %1872 = vmatpush1.bf16.msra.mxu0 %v1282
        %1873 = vmatprep.subr.bf16.mxu0 %v1291
        %1874 = vmatpush1.bf16.msra.mxu0 %v1290
        %1875 = vmatprep.subr.bf16.mxu0 %v1299
        %1876 = vmatpush1.bf16.msra.mxu0 %v1298
        %1877 = vmatprep.subr.bf16.mxu0 %v1307
        %1878 = vmatpush1.bf16.msra.mxu0 %v1306
        %1879 = vmatprep.subr.bf16.mxu0 %v1315
        %1880 = vmatpush1.bf16.msra.mxu0 %v1314
        %1881 = vmatprep.subr.bf16.mxu0 %v1323
        %1882 = vmatpush1.bf16.msra.mxu0 %v1322
        %1883 = vmatprep.subr.bf16.mxu0 %v1331
        %1884 = vmatpush1.bf16.msra.mxu0 %v1330
        %1885 = vmatprep.subr.bf16.mxu0 %v1339
        %1886 = vmatpush1.bf16.msra.mxu0 %v1338
        %1887 = vmatprep.subr.bf16.mxu0 %v1347
        %1888 = vmatpush1.bf16.msra.mxu0 %v1346
        %1889 = vmatprep.subr.bf16.mxu0 %v1355
        %1890 = vmatpush1.bf16.msra.mxu0 %v1354
        %1891 = vmatprep.subr.bf16.mxu0 %v1363
        %1892 = vmatpush1.bf16.msra.mxu0 %v1362
        %1893 = vmatprep.subr.bf16.mxu0 %v1371
        %1894 = vmatpush1.bf16.msra.mxu0 %v1370
        %1895 = vmatprep.subr.bf16.mxu0 %v1379
        %1896 = vmatpush1.bf16.msra.mxu0 %v1378
        %1897 = vmatprep.subr.bf16.mxu0 %v1387
        %1898 = vmatpush1.bf16.msra.mxu0 %v1386
        %1899 = vmatprep.subr.bf16.mxu0 %v1395
        %1900 = vmatpush1.bf16.msra.mxu0 %v1394
        %1901 = vmatprep.subr.bf16.mxu0 %v1403
        %1902 = vmatpush1.bf16.msra.mxu0 %v1402
        %1903 = vmatprep.mubr.bf16.mxu0 %v707
        %1904 = vmatmul.mubr.bf16.gmra.mrb[0].mxu0 %v706
        %v1905 = vpop.f32.mrb[0].mxu0
        %v1906 = vadd.f32 %v879, %v1905
        %v1907 = vpop.f32.mrb[0].mxu0
        %v1908 = vadd.f32 %v883, %v1907
        %v1909 = vpop.f32.mrb[0].mxu0
        %v1910 = vadd.f32 %v879, %v1909
        %v1911 = vpop.f32.mrb[0].mxu0
        %v1912 = vadd.f32 %v883, %v1911
        %1913 = vmatprep.mubr.bf16.mxu0 %v709
        %1914 = vmatmul.mubr.bf16.gmra.mrb[0].mxu0 %v708
        %v1915 = vpop.f32.mrb[0].mxu0
        %v1916 = vadd.f32 %v879, %v1915
        %v1917 = vpop.f32.mrb[0].mxu0
        %v1918 = vadd.f32 %v883, %v1917
        %v1919 = vpop.f32.mrb[0].mxu0
        %v1920 = vadd.f32 %v879, %v1919
        %v1921 = vpop.f32.mrb[0].mxu0
        %v1922 = vadd.f32 %v883, %v1921
        %1923 = vmatprep.mubr.bf16.mxu0 %v711
        %1924 = vmatmul.mubr.bf16.gmra.mrb[0].mxu0 %v710
        %v1925 = vpop.f32.mrb[0].mxu0
        %v1926 = vadd.f32 %v879, %v1925
        %v1927 = vpop.f32.mrb[0].mxu0
        %v1928 = vadd.f32 %v883, %v1927
        %v1929 = vpop.f32.mrb[0].mxu0
        %v1930 = vadd.f32 %v879, %v1929
        %v1931 = vpop.f32.mrb[0].mxu0
        %v1932 = vadd.f32 %v883, %v1931
        %1933 = vmatprep.mubr.bf16.mxu0 %v713
        %1934 = vmatmul.mubr.bf16.gmra.mrb[0].mxu0 %v712
        %v1935 = vpop.f32.mrb[0].mxu0
        %v1936 = vadd.f32 %v879, %v1935
        %v1937 = vpop.f32.mrb[0].mxu0
        %v1938 = vadd.f32 %v883, %v1937
        %v1939 = vpop.f32.mrb[0].mxu0
        %v1940 = vadd.f32 %v879, %v1939
        %v1941 = vpop.f32.mrb[0].mxu0
        %v1942 = vadd.f32 %v883, %v1941
        %1943 = vmatprep.mubr.bf16.mxu0 %v715
        %1944 = vmatmul.mubr.bf16.gmra.mrb[0].mxu0 %v714
        %v1945 = vpop.f32.mrb[0].mxu0
        %v1946 = vadd.f32 %v879, %v1945
        %v1947 = vpop.f32.mrb[0].mxu0
        %v1948 = vadd.f32 %v883, %v1947
        %v1949 = vpop.f32.mrb[0].mxu0
        %v1950 = vadd.f32 %v879, %v1949
        %v1951 = vpop.f32.mrb[0].mxu0
        %v1952 = vadd.f32 %v883, %v1951
        %1953 = vmatprep.mubr.bf16.mxu0 %v717
        %1954 = vmatmul.mubr.bf16.gmra.mrb[0].mxu0 %v716
        %v1955 = vpop.f32.mrb[0].mxu0
        %v1956 = vadd.f32 %v879, %v1955
        %v1957 = vpop.f32.mrb[0].mxu0
        %v1958 = vadd.f32 %v883, %v1957
        %v1959 = vpop.f32.mrb[0].mxu0
        %v1960 = vadd.f32 %v879, %v1959
        %v1961 = vpop.f32.mrb[0].mxu0
        %v1962 = vadd.f32 %v883, %v1961
        %1963 = vmatprep.mubr.bf16.mxu0 %v719
        %1964 = vmatmul.mubr.bf16.gmra.mrb[0].mxu0 %v718
        %v1965 = vpop.f32.mrb[0].mxu0
        %v1966 = vadd.f32 %v879, %v1965
        %v1967 = vpop.f32.mrb[0].mxu0
        %v1968 = vadd.f32 %v883, %v1967
        %v1969 = vpop.f32.mrb[0].mxu0
        %v1970 = vadd.f32 %v879, %v1969
        %v1971 = vpop.f32.mrb[0].mxu0
        %v1972 = vadd.f32 %v883, %v1971
        %1973 = vmatprep.mubr.bf16.mxu0 %v721
        %1974 = vmatmul.mubr.bf16.gmra.mrb[0].mxu0 %v720
        %v1975 = vpop.f32.mrb[0].mxu0
        %v1976 = vadd.f32 %v879, %v1975
        %v1977 = vpop.f32.mrb[0].mxu0
        %v1978 = vadd.f32 %v883, %v1977
        %v1979 = vpop.f32.mrb[0].mxu0
        %v1980 = vadd.f32 %v879, %v1979
        %v1981 = vpop.f32.mrb[0].mxu0
        %v1982 = vadd.f32 %v883, %v1981
        %1983 = vdwg.mxu0
        %v1984 = vmul.f32 %v1567, 0.5
        %v1985 = vmul.f32 %v1569, 0.5
        %v1986 = vmul.f32 %v1680, 0.5
        %v1987 = vmul.f32 %v1682, 0.5
        %v1988 = vmul.f32 %v1793, 0.5
        %v1989 = vmul.f32 %v1795, 0.5
        %v1990 = vmul.f32 %v1906, 0.5
        %v1991 = vmul.f32 %v1908, 0.5
        %v1992 = vmul.f32 %v1571, 0.5
        %v1993 = vmul.f32 %v1573, 0.5
        %v1994 = vmul.f32 %v1684, 0.5
        %v1995 = vmul.f32 %v1686, 0.5
        %v1996 = vmul.f32 %v1797, 0.5
        %v1997 = vmul.f32 %v1799, 0.5
        %v1998 = vmul.f32 %v1910, 0.5
        %v1999 = vmul.f32 %v1912, 0.5
        %v2000 = vmul.f32 %v1577, 0.5
        %v2001 = vmul.f32 %v1579, 0.5
        %v2002 = vmul.f32 %v1690, 0.5
        %v2003 = vmul.f32 %v1692, 0.5
        %v2004 = vmul.f32 %v1803, 0.5
        %v2005 = vmul.f32 %v1805, 0.5
        %v2006 = vmul.f32 %v1916, 0.5
        %v2007 = vmul.f32 %v1918, 0.5
        %v2008 = vmul.f32 %v1581, 0.5
        %v2009 = vmul.f32 %v1583, 0.5
        %v2010 = vmul.f32 %v1694, 0.5
        %v2011 = vmul.f32 %v1696, 0.5
        %v2012 = vmul.f32 %v1807, 0.5
        %v2013 = vmul.f32 %v1809, 0.5
        %v2014 = vmul.f32 %v1920, 0.5
        %v2015 = vmul.f32 %v1922, 0.5
        %v2016 = vmul.f32 %v1587, 0.5
        %v2017 = vmul.f32 %v1589, 0.5
        %v2018 = vmul.f32 %v1700, 0.5
        %v2019 = vmul.f32 %v1702, 0.5
        %v2020 = vmul.f32 %v1813, 0.5
        %v2021 = vmul.f32 %v1815, 0.5
        %v2022 = vmul.f32 %v1926, 0.5
        %v2023 = vmul.f32 %v1928, 0.5
        %v2024 = vmul.f32 %v1591, 0.5
        %v2025 = vmul.f32 %v1593, 0.5
        %v2026 = vmul.f32 %v1704, 0.5
        %v2027 = vmul.f32 %v1706, 0.5
        %v2028 = vmul.f32 %v1817, 0.5
        %v2029 = vmul.f32 %v1819, 0.5
        %v2030 = vmul.f32 %v1930, 0.5
        %v2031 = vmul.f32 %v1932, 0.5
        %v2032 = vmul.f32 %v1597, 0.5
        %v2033 = vmul.f32 %v1599, 0.5
        %v2034 = vmul.f32 %v1710, 0.5
        %v2035 = vmul.f32 %v1712, 0.5
        %v2036 = vmul.f32 %v1823, 0.5
        %v2037 = vmul.f32 %v1825, 0.5
        %v2038 = vmul.f32 %v1936, 0.5
        %v2039 = vmul.f32 %v1938, 0.5
        %v2040 = vmul.f32 %v1601, 0.5
        %v2041 = vmul.f32 %v1603, 0.5
        %v2042 = vmul.f32 %v1714, 0.5
        %v2043 = vmul.f32 %v1716, 0.5
        %v2044 = vmul.f32 %v1827, 0.5
        %v2045 = vmul.f32 %v1829, 0.5
        %v2046 = vmul.f32 %v1940, 0.5
        %v2047 = vmul.f32 %v1942, 0.5
        %v2048 = vmul.f32 %v1607, 0.5
        %v2049 = vmul.f32 %v1609, 0.5
        %v2050 = vmul.f32 %v1720, 0.5
        %v2051 = vmul.f32 %v1722, 0.5
        %v2052 = vmul.f32 %v1833, 0.5
        %v2053 = vmul.f32 %v1835, 0.5
        %v2054 = vmul.f32 %v1946, 0.5
        %v2055 = vmul.f32 %v1948, 0.5
        %v2056 = vmul.f32 %v1611, 0.5
        %v2057 = vmul.f32 %v1613, 0.5
        %v2058 = vmul.f32 %v1724, 0.5
        %v2059 = vmul.f32 %v1726, 0.5
        %v2060 = vmul.f32 %v1837, 0.5
        %v2061 = vmul.f32 %v1839, 0.5
        %v2062 = vmul.f32 %v1950, 0.5
        %v2063 = vmul.f32 %v1952, 0.5
        %v2064 = vmul.f32 %v1617, 0.5
        %v2065 = vmul.f32 %v1619, 0.5
        %v2066 = vmul.f32 %v1730, 0.5
        %v2067 = vmul.f32 %v1732, 0.5
        %v2068 = vmul.f32 %v1843, 0.5
        %v2069 = vmul.f32 %v1845, 0.5
        %v2070 = vmul.f32 %v1956, 0.5
        %v2071 = vmul.f32 %v1958, 0.5
        %v2072 = vmul.f32 %v1621, 0.5
        %v2073 = vmul.f32 %v1623, 0.5
        %v2074 = vmul.f32 %v1734, 0.5
        %v2075 = vmul.f32 %v1736, 0.5
        %v2076 = vmul.f32 %v1847, 0.5
        %v2077 = vmul.f32 %v1849, 0.5
        %v2078 = vmul.f32 %v1960, 0.5
        %v2079 = vmul.f32 %v1962, 0.5
        %v2080 = vmul.f32 %v1627, 0.5
        %v2081 = vmul.f32 %v1629, 0.5
        %v2082 = vmul.f32 %v1740, 0.5
        %v2083 = vmul.f32 %v1742, 0.5
        %v2084 = vmul.f32 %v1853, 0.5
        %v2085 = vmul.f32 %v1855, 0.5
        %v2086 = vmul.f32 %v1966, 0.5
        %v2087 = vmul.f32 %v1968, 0.5
        %v2088 = vmul.f32 %v1631, 0.5
        %v2089 = vmul.f32 %v1633, 0.5
        %v2090 = vmul.f32 %v1744, 0.5
        %v2091 = vmul.f32 %v1746, 0.5
        %v2092 = vmul.f32 %v1857, 0.5
        %v2093 = vmul.f32 %v1859, 0.5
        %v2094 = vmul.f32 %v1970, 0.5
        %v2095 = vmul.f32 %v1972, 0.5
        %v2096 = vmul.f32 %v1637, 0.5
        %v2097 = vmul.f32 %v1639, 0.5
        %v2098 = vmul.f32 %v1750, 0.5
        %v2099 = vmul.f32 %v1752, 0.5
        %v2100 = vmul.f32 %v1863, 0.5
        %v2101 = vmul.f32 %v1865, 0.5
        %v2102 = vmul.f32 %v1976, 0.5
        %v2103 = vmul.f32 %v1978, 0.5
        %v2104 = vmul.f32 %v1641, 0.5
        %v2105 = vmul.f32 %v1643, 0.5
        %v2106 = vmul.f32 %v1754, 0.5
        %v2107 = vmul.f32 %v1756, 0.5
        %v2108 = vmul.f32 %v1867, 0.5
        %v2109 = vmul.f32 %v1869, 0.5
        %v2110 = vmul.f32 %v1980, 0.5
        %v2111 = vmul.f32 %v1982, 0.5
        %v2112 = vmul.f32 %v1567, 0.70710677
        %v2113 = vmul.f32 %v1569, 0.70710677
        %v2114 = vmul.f32 %v1680, 0.70710677
        %v2115 = vmul.f32 %v1682, 0.70710677
        %v2116 = vmul.f32 %v1793, 0.70710677
        %v2117 = vmul.f32 %v1795, 0.70710677
        %v2118 = vmul.f32 %v1906, 0.70710677
        %v2119 = vmul.f32 %v1908, 0.70710677
        %v2120 = vmul.f32 %v1571, 0.70710677
        %v2121 = vmul.f32 %v1573, 0.70710677
        %v2122 = vmul.f32 %v1684, 0.70710677
        %v2123 = vmul.f32 %v1686, 0.70710677
        %v2124 = vmul.f32 %v1797, 0.70710677
        %v2125 = vmul.f32 %v1799, 0.70710677
        %v2126 = vmul.f32 %v1910, 0.70710677
        %v2127 = vmul.f32 %v1912, 0.70710677
        %v2128 = vmul.f32 %v1577, 0.70710677
        %v2129 = vmul.f32 %v1579, 0.70710677
        %v2130 = vmul.f32 %v1690, 0.70710677
        %v2131 = vmul.f32 %v1692, 0.70710677
        %v2132 = vmul.f32 %v1803, 0.70710677
        %v2133 = vmul.f32 %v1805, 0.70710677
        %v2134 = vmul.f32 %v1916, 0.70710677
        %v2135 = vmul.f32 %v1918, 0.70710677
        %v2136 = vmul.f32 %v1581, 0.70710677
        %v2137 = vmul.f32 %v1583, 0.70710677
        %v2138 = vmul.f32 %v1694, 0.70710677
        %v2139 = vmul.f32 %v1696, 0.70710677
        %v2140 = vmul.f32 %v1807, 0.70710677
        %v2141 = vmul.f32 %v1809, 0.70710677
        %v2142 = vmul.f32 %v1920, 0.70710677
        %v2143 = vmul.f32 %v1922, 0.70710677
        %v2144 = vmul.f32 %v1587, 0.70710677
        %v2145 = vmul.f32 %v1589, 0.70710677
        %v2146 = vmul.f32 %v1700, 0.70710677
        %v2147 = vmul.f32 %v1702, 0.70710677
        %v2148 = vmul.f32 %v1813, 0.70710677
        %v2149 = vmul.f32 %v1815, 0.70710677
        %v2150 = vmul.f32 %v1926, 0.70710677
        %v2151 = vmul.f32 %v1928, 0.70710677
        %v2152 = vmul.f32 %v1591, 0.70710677
        %v2153 = vmul.f32 %v1593, 0.70710677
        %v2154 = vmul.f32 %v1704, 0.70710677
        %v2155 = vmul.f32 %v1706, 0.70710677
        %v2156 = vmul.f32 %v1817, 0.70710677
        %v2157 = vmul.f32 %v1819, 0.70710677
        %v2158 = vmul.f32 %v1930, 0.70710677
        %v2159 = vmul.f32 %v1932, 0.70710677
        %v2160 = vmul.f32 %v1597, 0.70710677
        %v2161 = vmul.f32 %v1599, 0.70710677
        %v2162 = vmul.f32 %v1710, 0.70710677
        %v2163 = vmul.f32 %v1712, 0.70710677
        %v2164 = vmul.f32 %v1823, 0.70710677
        %v2165 = vmul.f32 %v1825, 0.70710677
        %v2166 = vmul.f32 %v1936, 0.70710677
        %v2167 = vmul.f32 %v1938, 0.70710677
        %v2168 = vmul.f32 %v1601, 0.70710677
        %v2169 = vmul.f32 %v1603, 0.70710677
        %v2170 = vmul.f32 %v1714, 0.70710677
        %v2171 = vmul.f32 %v1716, 0.70710677
        %v2172 = vmul.f32 %v1827, 0.70710677
        %v2173 = vmul.f32 %v1829, 0.70710677
        %v2174 = vmul.f32 %v1940, 0.70710677
        %v2175 = vmul.f32 %v1942, 0.70710677
        %v2176 = vmul.f32 %v1607, 0.70710677
        %v2177 = vmul.f32 %v1609, 0.70710677
        %v2178 = vmul.f32 %v1720, 0.70710677
        %v2179 = vmul.f32 %v1722, 0.70710677
        %v2180 = vmul.f32 %v1833, 0.70710677
        %v2181 = vmul.f32 %v1835, 0.70710677
        %v2182 = vmul.f32 %v1946, 0.70710677
        %v2183 = vmul.f32 %v1948, 0.70710677
        %v2184 = vmul.f32 %v1611, 0.70710677
        %v2185 = vmul.f32 %v1613, 0.70710677
        %v2186 = vmul.f32 %v1724, 0.70710677
        %v2187 = vmul.f32 %v1726, 0.70710677
        %v2188 = vmul.f32 %v1837, 0.70710677
        %v2189 = vmul.f32 %v1839, 0.70710677
        %v2190 = vmul.f32 %v1950, 0.70710677
        %v2191 = vmul.f32 %v1952, 0.70710677
        %v2192 = vmul.f32 %v1617, 0.70710677
        %v2193 = vmul.f32 %v1619, 0.70710677
        %v2194 = vmul.f32 %v1730, 0.70710677
        %v2195 = vmul.f32 %v1732, 0.70710677
        %v2196 = vmul.f32 %v1843, 0.70710677
        %v2197 = vmul.f32 %v1845, 0.70710677
        %v2198 = vmul.f32 %v1956, 0.70710677
        %v2199 = vmul.f32 %v1958, 0.70710677
        %v2200 = vmul.f32 %v1621, 0.70710677
        %v2201 = vmul.f32 %v1623, 0.70710677
        %v2202 = vmul.f32 %v1734, 0.70710677
        %v2203 = vmul.f32 %v1736, 0.70710677
        %v2204 = vmul.f32 %v1847, 0.70710677
        %v2205 = vmul.f32 %v1849, 0.70710677
        %v2206 = vmul.f32 %v1960, 0.70710677
        %v2207 = vmul.f32 %v1962, 0.70710677
        %v2208 = vmul.f32 %v1627, 0.70710677
        %v2209 = vmul.f32 %v1629, 0.70710677
        %v2210 = vmul.f32 %v1740, 0.70710677
        %v2211 = vmul.f32 %v1742, 0.70710677
        %v2212 = vmul.f32 %v1853, 0.70710677
        %v2213 = vmul.f32 %v1855, 0.70710677
        %v2214 = vmul.f32 %v1966, 0.70710677
        %v2215 = vmul.f32 %v1968, 0.70710677
        %v2216 = vmul.f32 %v1631, 0.70710677
        %v2217 = vmul.f32 %v1633, 0.70710677
        %v2218 = vmul.f32 %v1744, 0.70710677
        %v2219 = vmul.f32 %v1746, 0.70710677
        %v2220 = vmul.f32 %v1857, 0.70710677
        %v2221 = vmul.f32 %v1859, 0.70710677
        %v2222 = vmul.f32 %v1970, 0.70710677
        %v2223 = vmul.f32 %v1972, 0.70710677
        %v2224 = vmul.f32 %v1637, 0.70710677
        %v2225 = vmul.f32 %v1639, 0.70710677
        %v2226 = vmul.f32 %v1750, 0.70710677
        %v2227 = vmul.f32 %v1752, 0.70710677
        %v2228 = vmul.f32 %v1863, 0.70710677
        %v2229 = vmul.f32 %v1865, 0.70710677
        %v2230 = vmul.f32 %v1976, 0.70710677
        %v2231 = vmul.f32 %v1978, 0.70710677
        %v2232 = vmul.f32 %v1641, 0.70710677
        %v2233 = vmul.f32 %v1643, 0.70710677
        %v2234 = vmul.f32 %v1754, 0.70710677
        %v2235 = vmul.f32 %v1756, 0.70710677
        %v2236 = vmul.f32 %v1867, 0.70710677
        %v2237 = vmul.f32 %v1869, 0.70710677
        %v2238 = vmul.f32 %v1980, 0.70710677
        %v2239 = vmul.f32 %v1982, 0.70710677
        %v2240 = vand.u32 2147483647, %v2112
        %v2241 = vand.u32 2147483647, %v2113
        %v2242 = vand.u32 2147483647, %v2114
        %v2243 = vand.u32 2147483647, %v2115
        %v2244 = vand.u32 2147483647, %v2116
        %v2245 = vand.u32 2147483647, %v2117
        %v2246 = vand.u32 2147483647, %v2118
        %v2247 = vand.u32 2147483647, %v2119
        %v2248 = vand.u32 2147483647, %v2120
        %v2249 = vand.u32 2147483647, %v2121
        %v2250 = vand.u32 2147483647, %v2122
        %v2251 = vand.u32 2147483647, %v2123
        %v2252 = vand.u32 2147483647, %v2124
        %v2253 = vand.u32 2147483647, %v2125
        %v2254 = vand.u32 2147483647, %v2126
        %v2255 = vand.u32 2147483647, %v2127
        %v2256 = vand.u32 2147483647, %v2128
        %v2257 = vand.u32 2147483647, %v2129
        %v2258 = vand.u32 2147483647, %v2130
        %v2259 = vand.u32 2147483647, %v2131
        %v2260 = vand.u32 2147483647, %v2132
        %v2261 = vand.u32 2147483647, %v2133
        %v2262 = vand.u32 2147483647, %v2134
        %v2263 = vand.u32 2147483647, %v2135
        %v2264 = vand.u32 2147483647, %v2136
        %v2265 = vand.u32 2147483647, %v2137
        %v2266 = vand.u32 2147483647, %v2138
        %v2267 = vand.u32 2147483647, %v2139
        %v2268 = vand.u32 2147483647, %v2140
        %v2269 = vand.u32 2147483647, %v2141
        %v2270 = vand.u32 2147483647, %v2142
        %v2271 = vand.u32 2147483647, %v2143
        %v2272 = vand.u32 2147483647, %v2144
        %v2273 = vand.u32 2147483647, %v2145
        %v2274 = vand.u32 2147483647, %v2146
        %v2275 = vand.u32 2147483647, %v2147
        %v2276 = vand.u32 2147483647, %v2148
        %v2277 = vand.u32 2147483647, %v2149
        %v2278 = vand.u32 2147483647, %v2150
        %v2279 = vand.u32 2147483647, %v2151
        %v2280 = vand.u32 2147483647, %v2152
        %v2281 = vand.u32 2147483647, %v2153
        %v2282 = vand.u32 2147483647, %v2154
        %v2283 = vand.u32 2147483647, %v2155
        %v2284 = vand.u32 2147483647, %v2156
        %v2285 = vand.u32 2147483647, %v2157
        %v2286 = vand.u32 2147483647, %v2158
        %v2287 = vand.u32 2147483647, %v2159
        %v2288 = vand.u32 2147483647, %v2160
        %v2289 = vand.u32 2147483647, %v2161
        %v2290 = vand.u32 2147483647, %v2162
        %v2291 = vand.u32 2147483647, %v2163
        %v2292 = vand.u32 2147483647, %v2164
        %v2293 = vand.u32 2147483647, %v2165
        %v2294 = vand.u32 2147483647, %v2166
        %v2295 = vand.u32 2147483647, %v2167
        %v2296 = vand.u32 2147483647, %v2168
        %v2297 = vand.u32 2147483647, %v2169
        %v2298 = vand.u32 2147483647, %v2170
        %v2299 = vand.u32 2147483647, %v2171
        %v2300 = vand.u32 2147483647, %v2172
        %v2301 = vand.u32 2147483647, %v2173
        %v2302 = vand.u32 2147483647, %v2174
        %v2303 = vand.u32 2147483647, %v2175
        %v2304 = vand.u32 2147483647, %v2176
        %v2305 = vand.u32 2147483647, %v2177
        %v2306 = vand.u32 2147483647, %v2178
        %v2307 = vand.u32 2147483647, %v2179
        %v2308 = vand.u32 2147483647, %v2180
        %v2309 = vand.u32 2147483647, %v2181
        %v2310 = vand.u32 2147483647, %v2182
        %v2311 = vand.u32 2147483647, %v2183
        %v2312 = vand.u32 2147483647, %v2184
        %v2313 = vand.u32 2147483647, %v2185
        %v2314 = vand.u32 2147483647, %v2186
        %v2315 = vand.u32 2147483647, %v2187
        %v2316 = vand.u32 2147483647, %v2188
        %v2317 = vand.u32 2147483647, %v2189
        %v2318 = vand.u32 2147483647, %v2190
        %v2319 = vand.u32 2147483647, %v2191
        %v2320 = vand.u32 2147483647, %v2192
        %v2321 = vand.u32 2147483647, %v2193
        %v2322 = vand.u32 2147483647, %v2194
        %v2323 = vand.u32 2147483647, %v2195
        %v2324 = vand.u32 2147483647, %v2196
        %v2325 = vand.u32 2147483647, %v2197
        %v2326 = vand.u32 2147483647, %v2198
        %v2327 = vand.u32 2147483647, %v2199
        %v2328 = vand.u32 2147483647, %v2200
        %v2329 = vand.u32 2147483647, %v2201
        %v2330 = vand.u32 2147483647, %v2202
        %v2331 = vand.u32 2147483647, %v2203
        %v2332 = vand.u32 2147483647, %v2204
        %v2333 = vand.u32 2147483647, %v2205
        %v2334 = vand.u32 2147483647, %v2206
        %v2335 = vand.u32 2147483647, %v2207
        %v2336 = vand.u32 2147483647, %v2208
        %v2337 = vand.u32 2147483647, %v2209
        %v2338 = vand.u32 2147483647, %v2210
        %v2339 = vand.u32 2147483647, %v2211
        %v2340 = vand.u32 2147483647, %v2212
        %v2341 = vand.u32 2147483647, %v2213
        %v2342 = vand.u32 2147483647, %v2214
        %v2343 = vand.u32 2147483647, %v2215
        %v2344 = vand.u32 2147483647, %v2216
        %v2345 = vand.u32 2147483647, %v2217
        %v2346 = vand.u32 2147483647, %v2218
        %v2347 = vand.u32 2147483647, %v2219
        %v2348 = vand.u32 2147483647, %v2220
        %v2349 = vand.u32 2147483647, %v2221
        %v2350 = vand.u32 2147483647, %v2222
        %v2351 = vand.u32 2147483647, %v2223
        %v2352 = vand.u32 2147483647, %v2224
        %v2353 = vand.u32 2147483647, %v2225
        %v2354 = vand.u32 2147483647, %v2226
        %v2355 = vand.u32 2147483647, %v2227
        %v2356 = vand.u32 2147483647, %v2228
        %v2357 = vand.u32 2147483647, %v2229
        %v2358 = vand.u32 2147483647, %v2230
        %v2359 = vand.u32 2147483647, %v2231
        %v2360 = vand.u32 2147483647, %v2232
        %v2361 = vand.u32 2147483647, %v2233
        %v2362 = vand.u32 2147483647, %v2234
        %v2363 = vand.u32 2147483647, %v2235
        %v2364 = vand.u32 2147483647, %v2236
        %v2365 = vand.u32 2147483647, %v2237
        %v2366 = vand.u32 2147483647, %v2238
        %v2367 = vand.u32 2147483647, %v2239
        %v2368 = vmul.f32 %v2240, 0.3275911
        %v2369 = vmul.f32 %v2241, 0.3275911
        %v2370 = vmul.f32 %v2242, 0.3275911
        %v2371 = vmul.f32 %v2243, 0.3275911
        %v2372 = vmul.f32 %v2244, 0.3275911
        %v2373 = vmul.f32 %v2245, 0.3275911
        %v2374 = vmul.f32 %v2246, 0.3275911
        %v2375 = vmul.f32 %v2247, 0.3275911
        %v2376 = vmul.f32 %v2248, 0.3275911
        %v2377 = vmul.f32 %v2249, 0.3275911
        %v2378 = vmul.f32 %v2250, 0.3275911
        %v2379 = vmul.f32 %v2251, 0.3275911
        %v2380 = vmul.f32 %v2252, 0.3275911
        %v2381 = vmul.f32 %v2253, 0.3275911
        %v2382 = vmul.f32 %v2254, 0.3275911
        %v2383 = vmul.f32 %v2255, 0.3275911
        %v2384 = vmul.f32 %v2256, 0.3275911
        %v2385 = vmul.f32 %v2257, 0.3275911
        %v2386 = vmul.f32 %v2258, 0.3275911
        %v2387 = vmul.f32 %v2259, 0.3275911
        %v2388 = vmul.f32 %v2260, 0.3275911
        %v2389 = vmul.f32 %v2261, 0.3275911
        %v2390 = vmul.f32 %v2262, 0.3275911
        %v2391 = vmul.f32 %v2263, 0.3275911
        %v2392 = vmul.f32 %v2264, 0.3275911
        %v2393 = vmul.f32 %v2265, 0.3275911
        %v2394 = vmul.f32 %v2266, 0.3275911
        %v2395 = vmul.f32 %v2267, 0.3275911
        %v2396 = vmul.f32 %v2268, 0.3275911
        %v2397 = vmul.f32 %v2269, 0.3275911
        %v2398 = vmul.f32 %v2270, 0.3275911
        %v2399 = vmul.f32 %v2271, 0.3275911
        %v2400 = vmul.f32 %v2272, 0.3275911
        %v2401 = vmul.f32 %v2273, 0.3275911
        %v2402 = vmul.f32 %v2274, 0.3275911
        %v2403 = vmul.f32 %v2275, 0.3275911
        %v2404 = vmul.f32 %v2276, 0.3275911
        %v2405 = vmul.f32 %v2277, 0.3275911
        %v2406 = vmul.f32 %v2278, 0.3275911
        %v2407 = vmul.f32 %v2279, 0.3275911
        %v2408 = vmul.f32 %v2280, 0.3275911
        %v2409 = vmul.f32 %v2281, 0.3275911
        %v2410 = vmul.f32 %v2282, 0.3275911
        %v2411 = vmul.f32 %v2283, 0.3275911
        %v2412 = vmul.f32 %v2284, 0.3275911
        %v2413 = vmul.f32 %v2285, 0.3275911
        %v2414 = vmul.f32 %v2286, 0.3275911
        %v2415 = vmul.f32 %v2287, 0.3275911
        %v2416 = vmul.f32 %v2288, 0.3275911
        %v2417 = vmul.f32 %v2289, 0.3275911
        %v2418 = vmul.f32 %v2290, 0.3275911
        %v2419 = vmul.f32 %v2291, 0.3275911
        %v2420 = vmul.f32 %v2292, 0.3275911
        %v2421 = vmul.f32 %v2293, 0.3275911
        %v2422 = vmul.f32 %v2294, 0.3275911
        %v2423 = vmul.f32 %v2295, 0.3275911
        %v2424 = vmul.f32 %v2296, 0.3275911
        %v2425 = vmul.f32 %v2297, 0.3275911
        %v2426 = vmul.f32 %v2298, 0.3275911
        %v2427 = vmul.f32 %v2299, 0.3275911
        %v2428 = vmul.f32 %v2300, 0.3275911
        %v2429 = vmul.f32 %v2301, 0.3275911
        %v2430 = vmul.f32 %v2302, 0.3275911
        %v2431 = vmul.f32 %v2303, 0.3275911
        %v2432 = vmul.f32 %v2304, 0.3275911
        %v2433 = vmul.f32 %v2305, 0.3275911
        %v2434 = vmul.f32 %v2306, 0.3275911
        %v2435 = vmul.f32 %v2307, 0.3275911
        %v2436 = vmul.f32 %v2308, 0.3275911
        %v2437 = vmul.f32 %v2309, 0.3275911
        %v2438 = vmul.f32 %v2310, 0.3275911
        %v2439 = vmul.f32 %v2311, 0.3275911
        %v2440 = vmul.f32 %v2312, 0.3275911
        %v2441 = vmul.f32 %v2313, 0.3275911
        %v2442 = vmul.f32 %v2314, 0.3275911
        %v2443 = vmul.f32 %v2315, 0.3275911
        %v2444 = vmul.f32 %v2316, 0.3275911
        %v2445 = vmul.f32 %v2317, 0.3275911
        %v2446 = vmul.f32 %v2318, 0.3275911
        %v2447 = vmul.f32 %v2319, 0.3275911
        %v2448 = vmul.f32 %v2320, 0.3275911
        %v2449 = vmul.f32 %v2321, 0.3275911
        %v2450 = vmul.f32 %v2322, 0.3275911
        %v2451 = vmul.f32 %v2323, 0.3275911
        %v2452 = vmul.f32 %v2324, 0.3275911
        %v2453 = vmul.f32 %v2325, 0.3275911
        %v2454 = vmul.f32 %v2326, 0.3275911
        %v2455 = vmul.f32 %v2327, 0.3275911
        %v2456 = vmul.f32 %v2328, 0.3275911
        %v2457 = vmul.f32 %v2329, 0.3275911
        %v2458 = vmul.f32 %v2330, 0.3275911
        %v2459 = vmul.f32 %v2331, 0.3275911
        %v2460 = vmul.f32 %v2332, 0.3275911
        %v2461 = vmul.f32 %v2333, 0.3275911
        %v2462 = vmul.f32 %v2334, 0.3275911
        %v2463 = vmul.f32 %v2335, 0.3275911
        %v2464 = vmul.f32 %v2336, 0.3275911
        %v2465 = vmul.f32 %v2337, 0.3275911
        %v2466 = vmul.f32 %v2338, 0.3275911
        %v2467 = vmul.f32 %v2339, 0.3275911
        %v2468 = vmul.f32 %v2340, 0.3275911
        %v2469 = vmul.f32 %v2341, 0.3275911
        %v2470 = vmul.f32 %v2342, 0.3275911
        %v2471 = vmul.f32 %v2343, 0.3275911
        %v2472 = vmul.f32 %v2344, 0.3275911
        %v2473 = vmul.f32 %v2345, 0.3275911
        %v2474 = vmul.f32 %v2346, 0.3275911
        %v2475 = vmul.f32 %v2347, 0.3275911
        %v2476 = vmul.f32 %v2348, 0.3275911
        %v2477 = vmul.f32 %v2349, 0.3275911
        %v2478 = vmul.f32 %v2350, 0.3275911
        %v2479 = vmul.f32 %v2351, 0.3275911
        %v2480 = vmul.f32 %v2352, 0.3275911
        %v2481 = vmul.f32 %v2353, 0.3275911
        %v2482 = vmul.f32 %v2354, 0.3275911
        %v2483 = vmul.f32 %v2355, 0.3275911
        %v2484 = vmul.f32 %v2356, 0.3275911
        %v2485 = vmul.f32 %v2357, 0.3275911
        %v2486 = vmul.f32 %v2358, 0.3275911
        %v2487 = vmul.f32 %v2359, 0.3275911
        %v2488 = vmul.f32 %v2360, 0.3275911
        %v2489 = vmul.f32 %v2361, 0.3275911
        %v2490 = vmul.f32 %v2362, 0.3275911
        %v2491 = vmul.f32 %v2363, 0.3275911
        %v2492 = vmul.f32 %v2364, 0.3275911
        %v2493 = vmul.f32 %v2365, 0.3275911
        %v2494 = vmul.f32 %v2366, 0.3275911
        %v2495 = vmul.f32 %v2367, 0.3275911
        %v2496 = vadd.f32 %v2368, 1.0
        %v2497 = vadd.f32 %v2369, 1.0
        %v2498 = vadd.f32 %v2370, 1.0
        %v2499 = vadd.f32 %v2371, 1.0
        %v2500 = vadd.f32 %v2372, 1.0
        %v2501 = vadd.f32 %v2373, 1.0
        %v2502 = vadd.f32 %v2374, 1.0
        %v2503 = vadd.f32 %v2375, 1.0
        %v2504 = vadd.f32 %v2376, 1.0
        %v2505 = vadd.f32 %v2377, 1.0
        %v2506 = vadd.f32 %v2378, 1.0
        %v2507 = vadd.f32 %v2379, 1.0
        %v2508 = vadd.f32 %v2380, 1.0
        %v2509 = vadd.f32 %v2381, 1.0
        %v2510 = vadd.f32 %v2382, 1.0
        %v2511 = vadd.f32 %v2383, 1.0
        %v2512 = vadd.f32 %v2384, 1.0
        %v2513 = vadd.f32 %v2385, 1.0
        %v2514 = vadd.f32 %v2386, 1.0
        %v2515 = vadd.f32 %v2387, 1.0
        %v2516 = vadd.f32 %v2388, 1.0
        %v2517 = vadd.f32 %v2389, 1.0
        %v2518 = vadd.f32 %v2390, 1.0
        %v2519 = vadd.f32 %v2391, 1.0
        %v2520 = vadd.f32 %v2392, 1.0
        %v2521 = vadd.f32 %v2393, 1.0
        %v2522 = vadd.f32 %v2394, 1.0
        %v2523 = vadd.f32 %v2395, 1.0
        %v2524 = vadd.f32 %v2396, 1.0
        %v2525 = vadd.f32 %v2397, 1.0
        %v2526 = vadd.f32 %v2398, 1.0
        %v2527 = vadd.f32 %v2399, 1.0
        %v2528 = vadd.f32 %v2400, 1.0
        %v2529 = vadd.f32 %v2401, 1.0
        %v2530 = vadd.f32 %v2402, 1.0
        %v2531 = vadd.f32 %v2403, 1.0
        %v2532 = vadd.f32 %v2404, 1.0
        %v2533 = vadd.f32 %v2405, 1.0
        %v2534 = vadd.f32 %v2406, 1.0
        %v2535 = vadd.f32 %v2407, 1.0
        %v2536 = vadd.f32 %v2408, 1.0
        %v2537 = vadd.f32 %v2409, 1.0
        %v2538 = vadd.f32 %v2410, 1.0
        %v2539 = vadd.f32 %v2411, 1.0
        %v2540 = vadd.f32 %v2412, 1.0
        %v2541 = vadd.f32 %v2413, 1.0
        %v2542 = vadd.f32 %v2414, 1.0
        %v2543 = vadd.f32 %v2415, 1.0
        %v2544 = vadd.f32 %v2416, 1.0
        %v2545 = vadd.f32 %v2417, 1.0
        %v2546 = vadd.f32 %v2418, 1.0
        %v2547 = vadd.f32 %v2419, 1.0
        %v2548 = vadd.f32 %v2420, 1.0
        %v2549 = vadd.f32 %v2421, 1.0
        %v2550 = vadd.f32 %v2422, 1.0
        %v2551 = vadd.f32 %v2423, 1.0
        %v2552 = vadd.f32 %v2424, 1.0
        %v2553 = vadd.f32 %v2425, 1.0
        %v2554 = vadd.f32 %v2426, 1.0
        %v2555 = vadd.f32 %v2427, 1.0
        %v2556 = vadd.f32 %v2428, 1.0
        %v2557 = vadd.f32 %v2429, 1.0
        %v2558 = vadd.f32 %v2430, 1.0
        %v2559 = vadd.f32 %v2431, 1.0
        %v2560 = vadd.f32 %v2432, 1.0
        %v2561 = vadd.f32 %v2433, 1.0
        %v2562 = vadd.f32 %v2434, 1.0
        %v2563 = vadd.f32 %v2435, 1.0
        %v2564 = vadd.f32 %v2436, 1.0
        %v2565 = vadd.f32 %v2437, 1.0
        %v2566 = vadd.f32 %v2438, 1.0
        %v2567 = vadd.f32 %v2439, 1.0
        %v2568 = vadd.f32 %v2440, 1.0
        %v2569 = vadd.f32 %v2441, 1.0
        %v2570 = vadd.f32 %v2442, 1.0
        %v2571 = vadd.f32 %v2443, 1.0
        %v2572 = vadd.f32 %v2444, 1.0
        %v2573 = vadd.f32 %v2445, 1.0
        %v2574 = vadd.f32 %v2446, 1.0
        %v2575 = vadd.f32 %v2447, 1.0
        %v2576 = vadd.f32 %v2448, 1.0
        %v2577 = vadd.f32 %v2449, 1.0
        %v2578 = vadd.f32 %v2450, 1.0
        %v2579 = vadd.f32 %v2451, 1.0
        %v2580 = vadd.f32 %v2452, 1.0
        %v2581 = vadd.f32 %v2453, 1.0
        %v2582 = vadd.f32 %v2454, 1.0
        %v2583 = vadd.f32 %v2455, 1.0
        %v2584 = vadd.f32 %v2456, 1.0
        %v2585 = vadd.f32 %v2457, 1.0
        %v2586 = vadd.f32 %v2458, 1.0
        %v2587 = vadd.f32 %v2459, 1.0
        %v2588 = vadd.f32 %v2460, 1.0
        %v2589 = vadd.f32 %v2461, 1.0
        %v2590 = vadd.f32 %v2462, 1.0
        %v2591 = vadd.f32 %v2463, 1.0
        %v2592 = vadd.f32 %v2464, 1.0
        %v2593 = vadd.f32 %v2465, 1.0
        %v2594 = vadd.f32 %v2466, 1.0
        %v2595 = vadd.f32 %v2467, 1.0
        %v2596 = vadd.f32 %v2468, 1.0
        %v2597 = vadd.f32 %v2469, 1.0
        %v2598 = vadd.f32 %v2470, 1.0
        %v2599 = vadd.f32 %v2471, 1.0
        %v2600 = vadd.f32 %v2472, 1.0
        %v2601 = vadd.f32 %v2473, 1.0
        %v2602 = vadd.f32 %v2474, 1.0
        %v2603 = vadd.f32 %v2475, 1.0
        %v2604 = vadd.f32 %v2476, 1.0
        %v2605 = vadd.f32 %v2477, 1.0
        %v2606 = vadd.f32 %v2478, 1.0
        %v2607 = vadd.f32 %v2479, 1.0
        %v2608 = vadd.f32 %v2480, 1.0
        %v2609 = vadd.f32 %v2481, 1.0
        %v2610 = vadd.f32 %v2482, 1.0
        %v2611 = vadd.f32 %v2483, 1.0
        %v2612 = vadd.f32 %v2484, 1.0
        %v2613 = vadd.f32 %v2485, 1.0
        %v2614 = vadd.f32 %v2486, 1.0
        %v2615 = vadd.f32 %v2487, 1.0
        %v2616 = vadd.f32 %v2488, 1.0
        %v2617 = vadd.f32 %v2489, 1.0
        %v2618 = vadd.f32 %v2490, 1.0
        %v2619 = vadd.f32 %v2491, 1.0
        %v2620 = vadd.f32 %v2492, 1.0
        %v2621 = vadd.f32 %v2493, 1.0
        %v2622 = vadd.f32 %v2494, 1.0
        %v2623 = vadd.f32 %v2495, 1.0
        %v2624 = vrcp.pop %v2496
        %v2625 = vmul.f32 1.0, %v2624
        %v2626 = vrcp.pop %v2497
        %v2627 = vmul.f32 1.0, %v2626
        %v2628 = vrcp.pop %v2498
        %v2629 = vmul.f32 1.0, %v2628
        %v2630 = vrcp.pop %v2499
        %v2631 = vmul.f32 1.0, %v2630
        %v2632 = vrcp.pop %v2500
        %v2633 = vmul.f32 1.0, %v2632
        %v2634 = vrcp.pop %v2501
        %v2635 = vmul.f32 1.0, %v2634
        %v2636 = vrcp.pop %v2502
        %v2637 = vmul.f32 1.0, %v2636
        %v2638 = vrcp.pop %v2503
        %v2639 = vmul.f32 1.0, %v2638
        %v2640 = vrcp.pop %v2504
        %v2641 = vmul.f32 1.0, %v2640
        %v2642 = vrcp.pop %v2505
        %v2643 = vmul.f32 1.0, %v2642
        %v2644 = vrcp.pop %v2506
        %v2645 = vmul.f32 1.0, %v2644
        %v2646 = vrcp.pop %v2507
        %v2647 = vmul.f32 1.0, %v2646
        %v2648 = vrcp.pop %v2508
        %v2649 = vmul.f32 1.0, %v2648
        %v2650 = vrcp.pop %v2509
        %v2651 = vmul.f32 1.0, %v2650
        %v2652 = vrcp.pop %v2510
        %v2653 = vmul.f32 1.0, %v2652
        %v2654 = vrcp.pop %v2511
        %v2655 = vmul.f32 1.0, %v2654
        %v2656 = vrcp.pop %v2512
        %v2657 = vmul.f32 1.0, %v2656
        %v2658 = vrcp.pop %v2513
        %v2659 = vmul.f32 1.0, %v2658
        %v2660 = vrcp.pop %v2514
        %v2661 = vmul.f32 1.0, %v2660
        %v2662 = vrcp.pop %v2515
        %v2663 = vmul.f32 1.0, %v2662
        %v2664 = vrcp.pop %v2516
        %v2665 = vmul.f32 1.0, %v2664
        %v2666 = vrcp.pop %v2517
        %v2667 = vmul.f32 1.0, %v2666
        %v2668 = vrcp.pop %v2518
        %v2669 = vmul.f32 1.0, %v2668
        %v2670 = vrcp.pop %v2519
        %v2671 = vmul.f32 1.0, %v2670
        %v2672 = vrcp.pop %v2520
        %v2673 = vmul.f32 1.0, %v2672
        %v2674 = vrcp.pop %v2521
        %v2675 = vmul.f32 1.0, %v2674
        %v2676 = vrcp.pop %v2522
        %v2677 = vmul.f32 1.0, %v2676
        %v2678 = vrcp.pop %v2523
        %v2679 = vmul.f32 1.0, %v2678
        %v2680 = vrcp.pop %v2524
        %v2681 = vmul.f32 1.0, %v2680
        %v2682 = vrcp.pop %v2525
        %v2683 = vmul.f32 1.0, %v2682
        %v2684 = vrcp.pop %v2526
        %v2685 = vmul.f32 1.0, %v2684
        %v2686 = vrcp.pop %v2527
        %v2687 = vmul.f32 1.0, %v2686
        %v2688 = vrcp.pop %v2528
        %v2689 = vmul.f32 1.0, %v2688
        %v2690 = vrcp.pop %v2529
        %v2691 = vmul.f32 1.0, %v2690
        %v2692 = vrcp.pop %v2530
        %v2693 = vmul.f32 1.0, %v2692
        %v2694 = vrcp.pop %v2531
        %v2695 = vmul.f32 1.0, %v2694
        %v2696 = vrcp.pop %v2532
        %v2697 = vmul.f32 1.0, %v2696
        %v2698 = vrcp.pop %v2533
        %v2699 = vmul.f32 1.0, %v2698
        %v2700 = vrcp.pop %v2534
        %v2701 = vmul.f32 1.0, %v2700
        %v2702 = vrcp.pop %v2535
        %v2703 = vmul.f32 1.0, %v2702
        %v2704 = vrcp.pop %v2536
        %v2705 = vmul.f32 1.0, %v2704
        %v2706 = vrcp.pop %v2537
        %v2707 = vmul.f32 1.0, %v2706
        %v2708 = vrcp.pop %v2538
        %v2709 = vmul.f32 1.0, %v2708
        %v2710 = vrcp.pop %v2539
        %v2711 = vmul.f32 1.0, %v2710
        %v2712 = vrcp.pop %v2540
        %v2713 = vmul.f32 1.0, %v2712
        %v2714 = vrcp.pop %v2541
        %v2715 = vmul.f32 1.0, %v2714
        %v2716 = vrcp.pop %v2542
        %v2717 = vmul.f32 1.0, %v2716
        %v2718 = vrcp.pop %v2543
        %v2719 = vmul.f32 1.0, %v2718
        %v2720 = vrcp.pop %v2544
        %v2721 = vmul.f32 1.0, %v2720
        %v2722 = vrcp.pop %v2545
        %v2723 = vmul.f32 1.0, %v2722
        %v2724 = vrcp.pop %v2546
        %v2725 = vmul.f32 1.0, %v2724
        %v2726 = vrcp.pop %v2547
        %v2727 = vmul.f32 1.0, %v2726
        %v2728 = vrcp.pop %v2548
        %v2729 = vmul.f32 1.0, %v2728
        %v2730 = vrcp.pop %v2549
        %v2731 = vmul.f32 1.0, %v2730
        %v2732 = vrcp.pop %v2550
        %v2733 = vmul.f32 1.0, %v2732
        %v2734 = vrcp.pop %v2551
        %v2735 = vmul.f32 1.0, %v2734
        %v2736 = vrcp.pop %v2552
        %v2737 = vmul.f32 1.0, %v2736
        %v2738 = vrcp.pop %v2553
        %v2739 = vmul.f32 1.0, %v2738
        %v2740 = vrcp.pop %v2554
        %v2741 = vmul.f32 1.0, %v2740
        %v2742 = vrcp.pop %v2555
        %v2743 = vmul.f32 1.0, %v2742
        %v2744 = vrcp.pop %v2556
        %v2745 = vmul.f32 1.0, %v2744
        %v2746 = vrcp.pop %v2557
        %v2747 = vmul.f32 1.0, %v2746
        %v2748 = vrcp.pop %v2558
        %v2749 = vmul.f32 1.0, %v2748
        %v2750 = vrcp.pop %v2559
        %v2751 = vmul.f32 1.0, %v2750
        %v2752 = vrcp.pop %v2560
        %v2753 = vmul.f32 1.0, %v2752
        %v2754 = vrcp.pop %v2561
        %v2755 = vmul.f32 1.0, %v2754
        %v2756 = vrcp.pop %v2562
        %v2757 = vmul.f32 1.0, %v2756
        %v2758 = vrcp.pop %v2563
        %v2759 = vmul.f32 1.0, %v2758
        %v2760 = vrcp.pop %v2564
        %v2761 = vmul.f32 1.0, %v2760
        %v2762 = vrcp.pop %v2565
        %v2763 = vmul.f32 1.0, %v2762
        %v2764 = vrcp.pop %v2566
        %v2765 = vmul.f32 1.0, %v2764
        %v2766 = vrcp.pop %v2567
        %v2767 = vmul.f32 1.0, %v2766
        %v2768 = vrcp.pop %v2568
        %v2769 = vmul.f32 1.0, %v2768
        %v2770 = vrcp.pop %v2569
        %v2771 = vmul.f32 1.0, %v2770
        %v2772 = vrcp.pop %v2570
        %v2773 = vmul.f32 1.0, %v2772
        %v2774 = vrcp.pop %v2571
        %v2775 = vmul.f32 1.0, %v2774
        %v2776 = vrcp.pop %v2572
        %v2777 = vmul.f32 1.0, %v2776
        %v2778 = vrcp.pop %v2573
        %v2779 = vmul.f32 1.0, %v2778
        %v2780 = vrcp.pop %v2574
        %v2781 = vmul.f32 1.0, %v2780
        %v2782 = vrcp.pop %v2575
        %v2783 = vmul.f32 1.0, %v2782
        %v2784 = vrcp.pop %v2576
        %v2785 = vmul.f32 1.0, %v2784
        %v2786 = vrcp.pop %v2577
        %v2787 = vmul.f32 1.0, %v2786
        %v2788 = vrcp.pop %v2578
        %v2789 = vmul.f32 1.0, %v2788
        %v2790 = vrcp.pop %v2579
        %v2791 = vmul.f32 1.0, %v2790
        %v2792 = vrcp.pop %v2580
        %v2793 = vmul.f32 1.0, %v2792
        %v2794 = vrcp.pop %v2581
        %v2795 = vmul.f32 1.0, %v2794
        %v2796 = vrcp.pop %v2582
        %v2797 = vmul.f32 1.0, %v2796
        %v2798 = vrcp.pop %v2583
        %v2799 = vmul.f32 1.0, %v2798
        %v2800 = vrcp.pop %v2584
        %v2801 = vmul.f32 1.0, %v2800
        %v2802 = vrcp.pop %v2585
        %v2803 = vmul.f32 1.0, %v2802
        %v2804 = vrcp.pop %v2586
        %v2805 = vmul.f32 1.0, %v2804
        %v2806 = vrcp.pop %v2587
        %v2807 = vmul.f32 1.0, %v2806
        %v2808 = vrcp.pop %v2588
        %v2809 = vmul.f32 1.0, %v2808
        %v2810 = vrcp.pop %v2589
        %v2811 = vmul.f32 1.0, %v2810
        %v2812 = vrcp.pop %v2590
        %v2813 = vmul.f32 1.0, %v2812
        %v2814 = vrcp.pop %v2591
        %v2815 = vmul.f32 1.0, %v2814
        %v2816 = vrcp.pop %v2592
        %v2817 = vmul.f32 1.0, %v2816
        %v2818 = vrcp.pop %v2593
        %v2819 = vmul.f32 1.0, %v2818
        %v2820 = vrcp.pop %v2594
        %v2821 = vmul.f32 1.0, %v2820
        %v2822 = vrcp.pop %v2595
        %v2823 = vmul.f32 1.0, %v2822
        %v2824 = vrcp.pop %v2596
        %v2825 = vmul.f32 1.0, %v2824
        %v2826 = vrcp.pop %v2597
        %v2827 = vmul.f32 1.0, %v2826
        %v2828 = vrcp.pop %v2598
        %v2829 = vmul.f32 1.0, %v2828
        %v2830 = vrcp.pop %v2599
        %v2831 = vmul.f32 1.0, %v2830
        %v2832 = vrcp.pop %v2600
        %v2833 = vmul.f32 1.0, %v2832
        %v2834 = vrcp.pop %v2601
        %v2835 = vmul.f32 1.0, %v2834
        %v2836 = vrcp.pop %v2602
        %v2837 = vmul.f32 1.0, %v2836
        %v2838 = vrcp.pop %v2603
        %v2839 = vmul.f32 1.0, %v2838
        %v2840 = vrcp.pop %v2604
        %v2841 = vmul.f32 1.0, %v2840
        %v2842 = vrcp.pop %v2605
        %v2843 = vmul.f32 1.0, %v2842
        %v2844 = vrcp.pop %v2606
        %v2845 = vmul.f32 1.0, %v2844
        %v2846 = vrcp.pop %v2607
        %v2847 = vmul.f32 1.0, %v2846
        %v2848 = vrcp.pop %v2608
        %v2849 = vmul.f32 1.0, %v2848
        %v2850 = vrcp.pop %v2609
        %v2851 = vmul.f32 1.0, %v2850
        %v2852 = vrcp.pop %v2610
        %v2853 = vmul.f32 1.0, %v2852
        %v2854 = vrcp.pop %v2611
        %v2855 = vmul.f32 1.0, %v2854
        %v2856 = vrcp.pop %v2612
        %v2857 = vmul.f32 1.0, %v2856
        %v2858 = vrcp.pop %v2613
        %v2859 = vmul.f32 1.0, %v2858
        %v2860 = vrcp.pop %v2614
        %v2861 = vmul.f32 1.0, %v2860
        %v2862 = vrcp.pop %v2615
        %v2863 = vmul.f32 1.0, %v2862
        %v2864 = vrcp.pop %v2616
        %v2865 = vmul.f32 1.0, %v2864
        %v2866 = vrcp.pop %v2617
        %v2867 = vmul.f32 1.0, %v2866
        %v2868 = vrcp.pop %v2618
        %v2869 = vmul.f32 1.0, %v2868
        %v2870 = vrcp.pop %v2619
        %v2871 = vmul.f32 1.0, %v2870
        %v2872 = vrcp.pop %v2620
        %v2873 = vmul.f32 1.0, %v2872
        %v2874 = vrcp.pop %v2621
        %v2875 = vmul.f32 1.0, %v2874
        %v2876 = vrcp.pop %v2622
        %v2877 = vmul.f32 1.0, %v2876
        %v2878 = vrcp.pop %v2623
        %v2879 = vmul.f32 1.0, %v2878
        %v2880 = vmul.f32 %v2625, 1.0614054
        %v2881 = vmul.f32 %v2627, 1.0614054
        %v2882 = vmul.f32 %v2629, 1.0614054
        %v2883 = vmul.f32 %v2631, 1.0614054
        %v2884 = vmul.f32 %v2633, 1.0614054
        %v2885 = vmul.f32 %v2635, 1.0614054
        %v2886 = vmul.f32 %v2637, 1.0614054
        %v2887 = vmul.f32 %v2639, 1.0614054
        %v2888 = vmul.f32 %v2641, 1.0614054
        %v2889 = vmul.f32 %v2643, 1.0614054
        %v2890 = vmul.f32 %v2645, 1.0614054
        %v2891 = vmul.f32 %v2647, 1.0614054
        %v2892 = vmul.f32 %v2649, 1.0614054
        %v2893 = vmul.f32 %v2651, 1.0614054
        %v2894 = vmul.f32 %v2653, 1.0614054
        %v2895 = vmul.f32 %v2655, 1.0614054
        %v2896 = vmul.f32 %v2657, 1.0614054
        %v2897 = vmul.f32 %v2659, 1.0614054
        %v2898 = vmul.f32 %v2661, 1.0614054
        %v2899 = vmul.f32 %v2663, 1.0614054
        %v2900 = vmul.f32 %v2665, 1.0614054
        %v2901 = vmul.f32 %v2667, 1.0614054
        %v2902 = vmul.f32 %v2669, 1.0614054
        %v2903 = vmul.f32 %v2671, 1.0614054
        %v2904 = vmul.f32 %v2673, 1.0614054
        %v2905 = vmul.f32 %v2675, 1.0614054
        %v2906 = vmul.f32 %v2677, 1.0614054
        %v2907 = vmul.f32 %v2679, 1.0614054
        %v2908 = vmul.f32 %v2681, 1.0614054
        %v2909 = vmul.f32 %v2683, 1.0614054
        %v2910 = vmul.f32 %v2685, 1.0614054
        %v2911 = vmul.f32 %v2687, 1.0614054
        %v2912 = vmul.f32 %v2689, 1.0614054
        %v2913 = vmul.f32 %v2691, 1.0614054
        %v2914 = vmul.f32 %v2693, 1.0614054
        %v2915 = vmul.f32 %v2695, 1.0614054
        %v2916 = vmul.f32 %v2697, 1.0614054
        %v2917 = vmul.f32 %v2699, 1.0614054
        %v2918 = vmul.f32 %v2701, 1.0614054
        %v2919 = vmul.f32 %v2703, 1.0614054
        %v2920 = vmul.f32 %v2705, 1.0614054
        %v2921 = vmul.f32 %v2707, 1.0614054
        %v2922 = vmul.f32 %v2709, 1.0614054
        %v2923 = vmul.f32 %v2711, 1.0614054
        %v2924 = vmul.f32 %v2713, 1.0614054
        %v2925 = vmul.f32 %v2715, 1.0614054
        %v2926 = vmul.f32 %v2717, 1.0614054
        %v2927 = vmul.f32 %v2719, 1.0614054
        %v2928 = vmul.f32 %v2721, 1.0614054
        %v2929 = vmul.f32 %v2723, 1.0614054
        %v2930 = vmul.f32 %v2725, 1.0614054
        %v2931 = vmul.f32 %v2727, 1.0614054
        %v2932 = vmul.f32 %v2729, 1.0614054
        %v2933 = vmul.f32 %v2731, 1.0614054
        %v2934 = vmul.f32 %v2733, 1.0614054
        %v2935 = vmul.f32 %v2735, 1.0614054
        %v2936 = vmul.f32 %v2737, 1.0614054
        %v2937 = vmul.f32 %v2739, 1.0614054
        %v2938 = vmul.f32 %v2741, 1.0614054
        %v2939 = vmul.f32 %v2743, 1.0614054
        %v2940 = vmul.f32 %v2745, 1.0614054
        %v2941 = vmul.f32 %v2747, 1.0614054
        %v2942 = vmul.f32 %v2749, 1.0614054
        %v2943 = vmul.f32 %v2751, 1.0614054
        %v2944 = vmul.f32 %v2753, 1.0614054
        %v2945 = vmul.f32 %v2755, 1.0614054
        %v2946 = vmul.f32 %v2757, 1.0614054
        %v2947 = vmul.f32 %v2759, 1.0614054
        %v2948 = vmul.f32 %v2761, 1.0614054
        %v2949 = vmul.f32 %v2763, 1.0614054
        %v2950 = vmul.f32 %v2765, 1.0614054
        %v2951 = vmul.f32 %v2767, 1.0614054
        %v2952 = vmul.f32 %v2769, 1.0614054
        %v2953 = vmul.f32 %v2771, 1.0614054
        %v2954 = vmul.f32 %v2773, 1.0614054
        %v2955 = vmul.f32 %v2775, 1.0614054
        %v2956 = vmul.f32 %v2777, 1.0614054
        %v2957 = vmul.f32 %v2779, 1.0614054
        %v2958 = vmul.f32 %v2781, 1.0614054
        %v2959 = vmul.f32 %v2783, 1.0614054
        %v2960 = vmul.f32 %v2785, 1.0614054
        %v2961 = vmul.f32 %v2787, 1.0614054
        %v2962 = vmul.f32 %v2789, 1.0614054
        %v2963 = vmul.f32 %v2791, 1.0614054
        %v2964 = vmul.f32 %v2793, 1.0614054
        %v2965 = vmul.f32 %v2795, 1.0614054
        %v2966 = vmul.f32 %v2797, 1.0614054
        %v2967 = vmul.f32 %v2799, 1.0614054
        %v2968 = vmul.f32 %v2801, 1.0614054
        %v2969 = vmul.f32 %v2803, 1.0614054
        %v2970 = vmul.f32 %v2805, 1.0614054
        %v2971 = vmul.f32 %v2807, 1.0614054
        %v2972 = vmul.f32 %v2809, 1.0614054
        %v2973 = vmul.f32 %v2811, 1.0614054
        %v2974 = vmul.f32 %v2813, 1.0614054
        %v2975 = vmul.f32 %v2815, 1.0614054
        %v2976 = vmul.f32 %v2817, 1.0614054
        %v2977 = vmul.f32 %v2819, 1.0614054
        %v2978 = vmul.f32 %v2821, 1.0614054
        %v2979 = vmul.f32 %v2823, 1.0614054
        %v2980 = vmul.f32 %v2825, 1.0614054
        %v2981 = vmul.f32 %v2827, 1.0614054
        %v2982 = vmul.f32 %v2829, 1.0614054
        %v2983 = vmul.f32 %v2831, 1.0614054
        %v2984 = vmul.f32 %v2833, 1.0614054
        %v2985 = vmul.f32 %v2835, 1.0614054
        %v2986 = vmul.f32 %v2837, 1.0614054
        %v2987 = vmul.f32 %v2839, 1.0614054
        %v2988 = vmul.f32 %v2841, 1.0614054
        %v2989 = vmul.f32 %v2843, 1.0614054
        %v2990 = vmul.f32 %v2845, 1.0614054
        %v2991 = vmul.f32 %v2847, 1.0614054
        %v2992 = vmul.f32 %v2849, 1.0614054
        %v2993 = vmul.f32 %v2851, 1.0614054
        %v2994 = vmul.f32 %v2853, 1.0614054
        %v2995 = vmul.f32 %v2855, 1.0614054
        %v2996 = vmul.f32 %v2857, 1.0614054
        %v2997 = vmul.f32 %v2859, 1.0614054
        %v2998 = vmul.f32 %v2861, 1.0614054
        %v2999 = vmul.f32 %v2863, 1.0614054
        %v3000 = vmul.f32 %v2865, 1.0614054
        %v3001 = vmul.f32 %v2867, 1.0614054
        %v3002 = vmul.f32 %v2869, 1.0614054
        %v3003 = vmul.f32 %v2871, 1.0614054
        %v3004 = vmul.f32 %v2873, 1.0614054
        %v3005 = vmul.f32 %v2875, 1.0614054
        %v3006 = vmul.f32 %v2877, 1.0614054
        %v3007 = vmul.f32 %v2879, 1.0614054
        %v3008 = vadd.f32 %v2880, -1.4531521
        %v3009 = vadd.f32 %v2881, -1.4531521
        %v3010 = vadd.f32 %v2882, -1.4531521
        %v3011 = vadd.f32 %v2883, -1.4531521
        %v3012 = vadd.f32 %v2884, -1.4531521
        %v3013 = vadd.f32 %v2885, -1.4531521
        %v3014 = vadd.f32 %v2886, -1.4531521
        %v3015 = vadd.f32 %v2887, -1.4531521
        %v3016 = vadd.f32 %v2888, -1.4531521
        %v3017 = vadd.f32 %v2889, -1.4531521
        %v3018 = vadd.f32 %v2890, -1.4531521
        %v3019 = vadd.f32 %v2891, -1.4531521
        %v3020 = vadd.f32 %v2892, -1.4531521
        %v3021 = vadd.f32 %v2893, -1.4531521
        %v3022 = vadd.f32 %v2894, -1.4531521
        %v3023 = vadd.f32 %v2895, -1.4531521
        %v3024 = vadd.f32 %v2896, -1.4531521
        %v3025 = vadd.f32 %v2897, -1.4531521
        %v3026 = vadd.f32 %v2898, -1.4531521
        %v3027 = vadd.f32 %v2899, -1.4531521
        %v3028 = vadd.f32 %v2900, -1.4531521
        %v3029 = vadd.f32 %v2901, -1.4531521
        %v3030 = vadd.f32 %v2902, -1.4531521
        %v3031 = vadd.f32 %v2903, -1.4531521
        %v3032 = vadd.f32 %v2904, -1.4531521
        %v3033 = vadd.f32 %v2905, -1.4531521
        %v3034 = vadd.f32 %v2906, -1.4531521
        %v3035 = vadd.f32 %v2907, -1.4531521
        %v3036 = vadd.f32 %v2908, -1.4531521
        %v3037 = vadd.f32 %v2909, -1.4531521
        %v3038 = vadd.f32 %v2910, -1.4531521
        %v3039 = vadd.f32 %v2911, -1.4531521
        %v3040 = vadd.f32 %v2912, -1.4531521
        %v3041 = vadd.f32 %v2913, -1.4531521
        %v3042 = vadd.f32 %v2914, -1.4531521
        %v3043 = vadd.f32 %v2915, -1.4531521
        %v3044 = vadd.f32 %v2916, -1.4531521
        %v3045 = vadd.f32 %v2917, -1.4531521
        %v3046 = vadd.f32 %v2918, -1.4531521
        %v3047 = vadd.f32 %v2919, -1.4531521
        %v3048 = vadd.f32 %v2920, -1.4531521
        %v3049 = vadd.f32 %v2921, -1.4531521
        %v3050 = vadd.f32 %v2922, -1.4531521
        %v3051 = vadd.f32 %v2923, -1.4531521
        %v3052 = vadd.f32 %v2924, -1.4531521
        %v3053 = vadd.f32 %v2925, -1.4531521
        %v3054 = vadd.f32 %v2926, -1.4531521
        %v3055 = vadd.f32 %v2927, -1.4531521
        %v3056 = vadd.f32 %v2928, -1.4531521
        %v3057 = vadd.f32 %v2929, -1.4531521
        %v3058 = vadd.f32 %v2930, -1.4531521
        %v3059 = vadd.f32 %v2931, -1.4531521
        %v3060 = vadd.f32 %v2932, -1.4531521
        %v3061 = vadd.f32 %v2933, -1.4531521
        %v3062 = vadd.f32 %v2934, -1.4531521
        %v3063 = vadd.f32 %v2935, -1.4531521
        %v3064 = vadd.f32 %v2936, -1.4531521
        %v3065 = vadd.f32 %v2937, -1.4531521
        %v3066 = vadd.f32 %v2938, -1.4531521
        %v3067 = vadd.f32 %v2939, -1.4531521
        %v3068 = vadd.f32 %v2940, -1.4531521
        %v3069 = vadd.f32 %v2941, -1.4531521
        %v3070 = vadd.f32 %v2942, -1.4531521
        %v3071 = vadd.f32 %v2943, -1.4531521
        %v3072 = vadd.f32 %v2944, -1.4531521
        %v3073 = vadd.f32 %v2945, -1.4531521
        %v3074 = vadd.f32 %v2946, -1.4531521
        %v3075 = vadd.f32 %v2947, -1.4531521
        %v3076 = vadd.f32 %v2948, -1.4531521
        %v3077 = vadd.f32 %v2949, -1.4531521
        %v3078 = vadd.f32 %v2950, -1.4531521
        %v3079 = vadd.f32 %v2951, -1.4531521
        %v3080 = vadd.f32 %v2952, -1.4531521
        %v3081 = vadd.f32 %v2953, -1.4531521
        %v3082 = vadd.f32 %v2954, -1.4531521
        %v3083 = vadd.f32 %v2955, -1.4531521
        %v3084 = vadd.f32 %v2956, -1.4531521
        %v3085 = vadd.f32 %v2957, -1.4531521
        %v3086 = vadd.f32 %v2958, -1.4531521
        %v3087 = vadd.f32 %v2959, -1.4531521
        %v3088 = vadd.f32 %v2960, -1.4531521
        %v3089 = vadd.f32 %v2961, -1.4531521
        %v3090 = vadd.f32 %v2962, -1.4531521
        %v3091 = vadd.f32 %v2963, -1.4531521
        %v3092 = vadd.f32 %v2964, -1.4531521
        %v3093 = vadd.f32 %v2965, -1.4531521
        %v3094 = vadd.f32 %v2966, -1.4531521
        %v3095 = vadd.f32 %v2967, -1.4531521
        %v3096 = vadd.f32 %v2968, -1.4531521
        %v3097 = vadd.f32 %v2969, -1.4531521
        %v3098 = vadd.f32 %v2970, -1.4531521
        %v3099 = vadd.f32 %v2971, -1.4531521
        %v3100 = vadd.f32 %v2972, -1.4531521
        %v3101 = vadd.f32 %v2973, -1.4531521
        %v3102 = vadd.f32 %v2974, -1.4531521
        %v3103 = vadd.f32 %v2975, -1.4531521
        %v3104 = vadd.f32 %v2976, -1.4531521
        %v3105 = vadd.f32 %v2977, -1.4531521
        %v3106 = vadd.f32 %v2978, -1.4531521
        %v3107 = vadd.f32 %v2979, -1.4531521
        %v3108 = vadd.f32 %v2980, -1.4531521
        %v3109 = vadd.f32 %v2981, -1.4531521
        %v3110 = vadd.f32 %v2982, -1.4531521
        %v3111 = vadd.f32 %v2983, -1.4531521
        %v3112 = vadd.f32 %v2984, -1.4531521
        %v3113 = vadd.f32 %v2985, -1.4531521
        %v3114 = vadd.f32 %v2986, -1.4531521
        %v3115 = vadd.f32 %v2987, -1.4531521
        %v3116 = vadd.f32 %v2988, -1.4531521
        %v3117 = vadd.f32 %v2989, -1.4531521
        %v3118 = vadd.f32 %v2990, -1.4531521
        %v3119 = vadd.f32 %v2991, -1.4531521
        %v3120 = vadd.f32 %v2992, -1.4531521
        %v3121 = vadd.f32 %v2993, -1.4531521
        %v3122 = vadd.f32 %v2994, -1.4531521
        %v3123 = vadd.f32 %v2995, -1.4531521
        %v3124 = vadd.f32 %v2996, -1.4531521
        %v3125 = vadd.f32 %v2997, -1.4531521
        %v3126 = vadd.f32 %v2998, -1.4531521
        %v3127 = vadd.f32 %v2999, -1.4531521
        %v3128 = vadd.f32 %v3000, -1.4531521
        %v3129 = vadd.f32 %v3001, -1.4531521
        %v3130 = vadd.f32 %v3002, -1.4531521
        %v3131 = vadd.f32 %v3003, -1.4531521
        %v3132 = vadd.f32 %v3004, -1.4531521
        %v3133 = vadd.f32 %v3005, -1.4531521
        %v3134 = vadd.f32 %v3006, -1.4531521
        %v3135 = vadd.f32 %v3007, -1.4531521
        %v3136 = vmul.f32 %v3008, %v2625
        %v3137 = vmul.f32 %v3009, %v2627
        %v3138 = vmul.f32 %v3010, %v2629
        %v3139 = vmul.f32 %v3011, %v2631
        %v3140 = vmul.f32 %v3012, %v2633
        %v3141 = vmul.f32 %v3013, %v2635
        %v3142 = vmul.f32 %v3014, %v2637
        %v3143 = vmul.f32 %v3015, %v2639
        %v3144 = vmul.f32 %v3016, %v2641
        %v3145 = vmul.f32 %v3017, %v2643
        %v3146 = vmul.f32 %v3018, %v2645
        %v3147 = vmul.f32 %v3019, %v2647
        %v3148 = vmul.f32 %v3020, %v2649
        %v3149 = vmul.f32 %v3021, %v2651
        %v3150 = vmul.f32 %v3022, %v2653
        %v3151 = vmul.f32 %v3023, %v2655
        %v3152 = vmul.f32 %v3024, %v2657
        %v3153 = vmul.f32 %v3025, %v2659
        %v3154 = vmul.f32 %v3026, %v2661
        %v3155 = vmul.f32 %v3027, %v2663
        %v3156 = vmul.f32 %v3028, %v2665
        %v3157 = vmul.f32 %v3029, %v2667
        %v3158 = vmul.f32 %v3030, %v2669
        %v3159 = vmul.f32 %v3031, %v2671
        %v3160 = vmul.f32 %v3032, %v2673
        %v3161 = vmul.f32 %v3033, %v2675
        %v3162 = vmul.f32 %v3034, %v2677
        %v3163 = vmul.f32 %v3035, %v2679
        %v3164 = vmul.f32 %v3036, %v2681
        %v3165 = vmul.f32 %v3037, %v2683
        %v3166 = vmul.f32 %v3038, %v2685
        %v3167 = vmul.f32 %v3039, %v2687
        %v3168 = vmul.f32 %v3040, %v2689
        %v3169 = vmul.f32 %v3041, %v2691
        %v3170 = vmul.f32 %v3042, %v2693
        %v3171 = vmul.f32 %v3043, %v2695
        %v3172 = vmul.f32 %v3044, %v2697
        %v3173 = vmul.f32 %v3045, %v2699
        %v3174 = vmul.f32 %v3046, %v2701
        %v3175 = vmul.f32 %v3047, %v2703
        %v3176 = vmul.f32 %v3048, %v2705
        %v3177 = vmul.f32 %v3049, %v2707
        %v3178 = vmul.f32 %v3050, %v2709
        %v3179 = vmul.f32 %v3051, %v2711
        %v3180 = vmul.f32 %v3052, %v2713
        %v3181 = vmul.f32 %v3053, %v2715
        %v3182 = vmul.f32 %v3054, %v2717
        %v3183 = vmul.f32 %v3055, %v2719
        %v3184 = vmul.f32 %v3056, %v2721
        %v3185 = vmul.f32 %v3057, %v2723
        %v3186 = vmul.f32 %v3058, %v2725
        %v3187 = vmul.f32 %v3059, %v2727
        %v3188 = vmul.f32 %v3060, %v2729
        %v3189 = vmul.f32 %v3061, %v2731
        %v3190 = vmul.f32 %v3062, %v2733
        %v3191 = vmul.f32 %v3063, %v2735
        %v3192 = vmul.f32 %v3064, %v2737
        %v3193 = vmul.f32 %v3065, %v2739
        %v3194 = vmul.f32 %v3066, %v2741
        %v3195 = vmul.f32 %v3067, %v2743
        %v3196 = vmul.f32 %v3068, %v2745
        %v3197 = vmul.f32 %v3069, %v2747
        %v3198 = vmul.f32 %v3070, %v2749
        %v3199 = vmul.f32 %v3071, %v2751
        %v3200 = vmul.f32 %v3072, %v2753
        %v3201 = vmul.f32 %v3073, %v2755
        %v3202 = vmul.f32 %v3074, %v2757
        %v3203 = vmul.f32 %v3075, %v2759
        %v3204 = vmul.f32 %v3076, %v2761
        %v3205 = vmul.f32 %v3077, %v2763
        %v3206 = vmul.f32 %v3078, %v2765
        %v3207 = vmul.f32 %v3079, %v2767
        %v3208 = vmul.f32 %v3080, %v2769
        %v3209 = vmul.f32 %v3081, %v2771
        %v3210 = vmul.f32 %v3082, %v2773
        %v3211 = vmul.f32 %v3083, %v2775
        %v3212 = vmul.f32 %v3084, %v2777
        %v3213 = vmul.f32 %v3085, %v2779
        %v3214 = vmul.f32 %v3086, %v2781
        %v3215 = vmul.f32 %v3087, %v2783
        %v3216 = vmul.f32 %v3088, %v2785
        %v3217 = vmul.f32 %v3089, %v2787
        %v3218 = vmul.f32 %v3090, %v2789
        %v3219 = vmul.f32 %v3091, %v2791
        %v3220 = vmul.f32 %v3092, %v2793
        %v3221 = vmul.f32 %v3093, %v2795
        %v3222 = vmul.f32 %v3094, %v2797
        %v3223 = vmul.f32 %v3095, %v2799
        %v3224 = vmul.f32 %v3096, %v2801
        %v3225 = vmul.f32 %v3097, %v2803
        %v3226 = vmul.f32 %v3098, %v2805
        %v3227 = vmul.f32 %v3099, %v2807
        %v3228 = vmul.f32 %v3100, %v2809
        %v3229 = vmul.f32 %v3101, %v2811
        %v3230 = vmul.f32 %v3102, %v2813
        %v3231 = vmul.f32 %v3103, %v2815
        %v3232 = vmul.f32 %v3104, %v2817
        %v3233 = vmul.f32 %v3105, %v2819
        %v3234 = vmul.f32 %v3106, %v2821
        %v3235 = vmul.f32 %v3107, %v2823
        %v3236 = vmul.f32 %v3108, %v2825
        %v3237 = vmul.f32 %v3109, %v2827
        %v3238 = vmul.f32 %v3110, %v2829
        %v3239 = vmul.f32 %v3111, %v2831
        %v3240 = vmul.f32 %v3112, %v2833
        %v3241 = vmul.f32 %v3113, %v2835
        %v3242 = vmul.f32 %v3114, %v2837
        %v3243 = vmul.f32 %v3115, %v2839
        %v3244 = vmul.f32 %v3116, %v2841
        %v3245 = vmul.f32 %v3117, %v2843
        %v3246 = vmul.f32 %v3118, %v2845
        %v3247 = vmul.f32 %v3119, %v2847
        %v3248 = vmul.f32 %v3120, %v2849
        %v3249 = vmul.f32 %v3121, %v2851
        %v3250 = vmul.f32 %v3122, %v2853
        %v3251 = vmul.f32 %v3123, %v2855
        %v3252 = vmul.f32 %v3124, %v2857
        %v3253 = vmul.f32 %v3125, %v2859
        %v3254 = vmul.f32 %v3126, %v2861
        %v3255 = vmul.f32 %v3127, %v2863
        %v3256 = vmul.f32 %v3128, %v2865
        %v3257 = vmul.f32 %v3129, %v2867
        %v3258 = vmul.f32 %v3130, %v2869
        %v3259 = vmul.f32 %v3131, %v2871
        %v3260 = vmul.f32 %v3132, %v2873
        %v3261 = vmul.f32 %v3133, %v2875
        %v3262 = vmul.f32 %v3134, %v2877
        %v3263 = vmul.f32 %v3135, %v2879
        %v3264 = vadd.f32 %v3136, 1.4214138
        %v3265 = vadd.f32 %v3137, 1.4214138
        %v3266 = vadd.f32 %v3138, 1.4214138
        %v3267 = vadd.f32 %v3139, 1.4214138
        %v3268 = vadd.f32 %v3140, 1.4214138
        %v3269 = vadd.f32 %v3141, 1.4214138
        %v3270 = vadd.f32 %v3142, 1.4214138
        %v3271 = vadd.f32 %v3143, 1.4214138
        %v3272 = vadd.f32 %v3144, 1.4214138
        %v3273 = vadd.f32 %v3145, 1.4214138
        %v3274 = vadd.f32 %v3146, 1.4214138
        %v3275 = vadd.f32 %v3147, 1.4214138
        %v3276 = vadd.f32 %v3148, 1.4214138
        %v3277 = vadd.f32 %v3149, 1.4214138
        %v3278 = vadd.f32 %v3150, 1.4214138
        %v3279 = vadd.f32 %v3151, 1.4214138
        %v3280 = vadd.f32 %v3152, 1.4214138
        %v3281 = vadd.f32 %v3153, 1.4214138
        %v3282 = vadd.f32 %v3154, 1.4214138
        %v3283 = vadd.f32 %v3155, 1.4214138
        %v3284 = vadd.f32 %v3156, 1.4214138
        %v3285 = vadd.f32 %v3157, 1.4214138
        %v3286 = vadd.f32 %v3158, 1.4214138
        %v3287 = vadd.f32 %v3159, 1.4214138
        %v3288 = vadd.f32 %v3160, 1.4214138
        %v3289 = vadd.f32 %v3161, 1.4214138
        %v3290 = vadd.f32 %v3162, 1.4214138
        %v3291 = vadd.f32 %v3163, 1.4214138
        %v3292 = vadd.f32 %v3164, 1.4214138
        %v3293 = vadd.f32 %v3165, 1.4214138
        %v3294 = vadd.f32 %v3166, 1.4214138
        %v3295 = vadd.f32 %v3167, 1.4214138
        %v3296 = vadd.f32 %v3168, 1.4214138
        %v3297 = vadd.f32 %v3169, 1.4214138
        %v3298 = vadd.f32 %v3170, 1.4214138
        %v3299 = vadd.f32 %v3171, 1.4214138
        %v3300 = vadd.f32 %v3172, 1.4214138
        %v3301 = vadd.f32 %v3173, 1.4214138
        %v3302 = vadd.f32 %v3174, 1.4214138
        %v3303 = vadd.f32 %v3175, 1.4214138
        %v3304 = vadd.f32 %v3176, 1.4214138
        %v3305 = vadd.f32 %v3177, 1.4214138
        %v3306 = vadd.f32 %v3178, 1.4214138
        %v3307 = vadd.f32 %v3179, 1.4214138
        %v3308 = vadd.f32 %v3180, 1.4214138
        %v3309 = vadd.f32 %v3181, 1.4214138
        %v3310 = vadd.f32 %v3182, 1.4214138
        %v3311 = vadd.f32 %v3183, 1.4214138
        %v3312 = vadd.f32 %v3184, 1.4214138
        %v3313 = vadd.f32 %v3185, 1.4214138
        %v3314 = vadd.f32 %v3186, 1.4214138
        %v3315 = vadd.f32 %v3187, 1.4214138
        %v3316 = vadd.f32 %v3188, 1.4214138
        %v3317 = vadd.f32 %v3189, 1.4214138
        %v3318 = vadd.f32 %v3190, 1.4214138
        %v3319 = vadd.f32 %v3191, 1.4214138
        %v3320 = vadd.f32 %v3192, 1.4214138
        %v3321 = vadd.f32 %v3193, 1.4214138
        %v3322 = vadd.f32 %v3194, 1.4214138
        %v3323 = vadd.f32 %v3195, 1.4214138
        %v3324 = vadd.f32 %v3196, 1.4214138
        %v3325 = vadd.f32 %v3197, 1.4214138
        %v3326 = vadd.f32 %v3198, 1.4214138
        %v3327 = vadd.f32 %v3199, 1.4214138
        %v3328 = vadd.f32 %v3200, 1.4214138
        %v3329 = vadd.f32 %v3201, 1.4214138
        %v3330 = vadd.f32 %v3202, 1.4214138
        %v3331 = vadd.f32 %v3203, 1.4214138
        %v3332 = vadd.f32 %v3204, 1.4214138
        %v3333 = vadd.f32 %v3205, 1.4214138
        %v3334 = vadd.f32 %v3206, 1.4214138
        %v3335 = vadd.f32 %v3207, 1.4214138
        %v3336 = vadd.f32 %v3208, 1.4214138
        %v3337 = vadd.f32 %v3209, 1.4214138
        %v3338 = vadd.f32 %v3210, 1.4214138
        %v3339 = vadd.f32 %v3211, 1.4214138
        %v3340 = vadd.f32 %v3212, 1.4214138
        %v3341 = vadd.f32 %v3213, 1.4214138
        %v3342 = vadd.f32 %v3214, 1.4214138
        %v3343 = vadd.f32 %v3215, 1.4214138
        %v3344 = vadd.f32 %v3216, 1.4214138
        %v3345 = vadd.f32 %v3217, 1.4214138
        %v3346 = vadd.f32 %v3218, 1.4214138
        %v3347 = vadd.f32 %v3219, 1.4214138
        %v3348 = vadd.f32 %v3220, 1.4214138
        %v3349 = vadd.f32 %v3221, 1.4214138
        %v3350 = vadd.f32 %v3222, 1.4214138
        %v3351 = vadd.f32 %v3223, 1.4214138
        %v3352 = vadd.f32 %v3224, 1.4214138
        %v3353 = vadd.f32 %v3225, 1.4214138
        %v3354 = vadd.f32 %v3226, 1.4214138
        %v3355 = vadd.f32 %v3227, 1.4214138
        %v3356 = vadd.f32 %v3228, 1.4214138
        %v3357 = vadd.f32 %v3229, 1.4214138
        %v3358 = vadd.f32 %v3230, 1.4214138
        %v3359 = vadd.f32 %v3231, 1.4214138
        %v3360 = vadd.f32 %v3232, 1.4214138
        %v3361 = vadd.f32 %v3233, 1.4214138
        %v3362 = vadd.f32 %v3234, 1.4214138
        %v3363 = vadd.f32 %v3235, 1.4214138
        %v3364 = vadd.f32 %v3236, 1.4214138
        %v3365 = vadd.f32 %v3237, 1.4214138
        %v3366 = vadd.f32 %v3238, 1.4214138
        %v3367 = vadd.f32 %v3239, 1.4214138
        %v3368 = vadd.f32 %v3240, 1.4214138
        %v3369 = vadd.f32 %v3241, 1.4214138
        %v3370 = vadd.f32 %v3242, 1.4214138
        %v3371 = vadd.f32 %v3243, 1.4214138
        %v3372 = vadd.f32 %v3244, 1.4214138
        %v3373 = vadd.f32 %v3245, 1.4214138
        %v3374 = vadd.f32 %v3246, 1.4214138
        %v3375 = vadd.f32 %v3247, 1.4214138
        %v3376 = vadd.f32 %v3248, 1.4214138
        %v3377 = vadd.f32 %v3249, 1.4214138
        %v3378 = vadd.f32 %v3250, 1.4214138
        %v3379 = vadd.f32 %v3251, 1.4214138
        %v3380 = vadd.f32 %v3252, 1.4214138
        %v3381 = vadd.f32 %v3253, 1.4214138
        %v3382 = vadd.f32 %v3254, 1.4214138
        %v3383 = vadd.f32 %v3255, 1.4214138
        %v3384 = vadd.f32 %v3256, 1.4214138
        %v3385 = vadd.f32 %v3257, 1.4214138
        %v3386 = vadd.f32 %v3258, 1.4214138
        %v3387 = vadd.f32 %v3259, 1.4214138
        %v3388 = vadd.f32 %v3260, 1.4214138
        %v3389 = vadd.f32 %v3261, 1.4214138
        %v3390 = vadd.f32 %v3262, 1.4214138
        %v3391 = vadd.f32 %v3263, 1.4214138
        %v3392 = vmul.f32 %v3264, %v2625
        %v3393 = vmul.f32 %v3265, %v2627
        %v3394 = vmul.f32 %v3266, %v2629
        %v3395 = vmul.f32 %v3267, %v2631
        %v3396 = vmul.f32 %v3268, %v2633
        %v3397 = vmul.f32 %v3269, %v2635
        %v3398 = vmul.f32 %v3270, %v2637
        %v3399 = vmul.f32 %v3271, %v2639
        %v3400 = vmul.f32 %v3272, %v2641
        %v3401 = vmul.f32 %v3273, %v2643
        %v3402 = vmul.f32 %v3274, %v2645
        %v3403 = vmul.f32 %v3275, %v2647
        %v3404 = vmul.f32 %v3276, %v2649
        %v3405 = vmul.f32 %v3277, %v2651
        %v3406 = vmul.f32 %v3278, %v2653
        %v3407 = vmul.f32 %v3279, %v2655
        %v3408 = vmul.f32 %v3280, %v2657
        %v3409 = vmul.f32 %v3281, %v2659
        %v3410 = vmul.f32 %v3282, %v2661
        %v3411 = vmul.f32 %v3283, %v2663
        %v3412 = vmul.f32 %v3284, %v2665
        %v3413 = vmul.f32 %v3285, %v2667
        %v3414 = vmul.f32 %v3286, %v2669
        %v3415 = vmul.f32 %v3287, %v2671
        %v3416 = vmul.f32 %v3288, %v2673
        %v3417 = vmul.f32 %v3289, %v2675
        %v3418 = vmul.f32 %v3290, %v2677
        %v3419 = vmul.f32 %v3291, %v2679
        %v3420 = vmul.f32 %v3292, %v2681
        %v3421 = vmul.f32 %v3293, %v2683
        %v3422 = vmul.f32 %v3294, %v2685
        %v3423 = vmul.f32 %v3295, %v2687
        %v3424 = vmul.f32 %v3296, %v2689
        %v3425 = vmul.f32 %v3297, %v2691
        %v3426 = vmul.f32 %v3298, %v2693
        %v3427 = vmul.f32 %v3299, %v2695
        %v3428 = vmul.f32 %v3300, %v2697
        %v3429 = vmul.f32 %v3301, %v2699
        %v3430 = vmul.f32 %v3302, %v2701
        %v3431 = vmul.f32 %v3303, %v2703
        %v3432 = vmul.f32 %v3304, %v2705
        %v3433 = vmul.f32 %v3305, %v2707
        %v3434 = vmul.f32 %v3306, %v2709
        %v3435 = vmul.f32 %v3307, %v2711
        %v3436 = vmul.f32 %v3308, %v2713
        %v3437 = vmul.f32 %v3309, %v2715
        %v3438 = vmul.f32 %v3310, %v2717
        %v3439 = vmul.f32 %v3311, %v2719
        %v3440 = vmul.f32 %v3312, %v2721
        %v3441 = vmul.f32 %v3313, %v2723
        %v3442 = vmul.f32 %v3314, %v2725
        %v3443 = vmul.f32 %v3315, %v2727
        %v3444 = vmul.f32 %v3316, %v2729
        %v3445 = vmul.f32 %v3317, %v2731
        %v3446 = vmul.f32 %v3318, %v2733
        %v3447 = vmul.f32 %v3319, %v2735
        %v3448 = vmul.f32 %v3320, %v2737
        %v3449 = vmul.f32 %v3321, %v2739
        %v3450 = vmul.f32 %v3322, %v2741
        %v3451 = vmul.f32 %v3323, %v2743
        %v3452 = vmul.f32 %v3324, %v2745
        %v3453 = vmul.f32 %v3325, %v2747
        %v3454 = vmul.f32 %v3326, %v2749
        %v3455 = vmul.f32 %v3327, %v2751
        %v3456 = vmul.f32 %v3328, %v2753
        %v3457 = vmul.f32 %v3329, %v2755
        %v3458 = vmul.f32 %v3330, %v2757
        %v3459 = vmul.f32 %v3331, %v2759
        %v3460 = vmul.f32 %v3332, %v2761
        %v3461 = vmul.f32 %v3333, %v2763
        %v3462 = vmul.f32 %v3334, %v2765
        %v3463 = vmul.f32 %v3335, %v2767
        %v3464 = vmul.f32 %v3336, %v2769
        %v3465 = vmul.f32 %v3337, %v2771
        %v3466 = vmul.f32 %v3338, %v2773
        %v3467 = vmul.f32 %v3339, %v2775
        %v3468 = vmul.f32 %v3340, %v2777
        %v3469 = vmul.f32 %v3341, %v2779
        %v3470 = vmul.f32 %v3342, %v2781
        %v3471 = vmul.f32 %v3343, %v2783
        %v3472 = vmul.f32 %v3344, %v2785
        %v3473 = vmul.f32 %v3345, %v2787
        %v3474 = vmul.f32 %v3346, %v2789
        %v3475 = vmul.f32 %v3347, %v2791
        %v3476 = vmul.f32 %v3348, %v2793
        %v3477 = vmul.f32 %v3349, %v2795
        %v3478 = vmul.f32 %v3350, %v2797
        %v3479 = vmul.f32 %v3351, %v2799
        %v3480 = vmul.f32 %v3352, %v2801
        %v3481 = vmul.f32 %v3353, %v2803
        %v3482 = vmul.f32 %v3354, %v2805
        %v3483 = vmul.f32 %v3355, %v2807
        %v3484 = vmul.f32 %v3356, %v2809
        %v3485 = vmul.f32 %v3357, %v2811
        %v3486 = vmul.f32 %v3358, %v2813
        %v3487 = vmul.f32 %v3359, %v2815
        %v3488 = vmul.f32 %v3360, %v2817
        %v3489 = vmul.f32 %v3361, %v2819
        %v3490 = vmul.f32 %v3362, %v2821
        %v3491 = vmul.f32 %v3363, %v2823
        %v3492 = vmul.f32 %v3364, %v2825
        %v3493 = vmul.f32 %v3365, %v2827
        %v3494 = vmul.f32 %v3366, %v2829
        %v3495 = vmul.f32 %v3367, %v2831
        %v3496 = vmul.f32 %v3368, %v2833
        %v3497 = vmul.f32 %v3369, %v2835
        %v3498 = vmul.f32 %v3370, %v2837
        %v3499 = vmul.f32 %v3371, %v2839
        %v3500 = vmul.f32 %v3372, %v2841
        %v3501 = vmul.f32 %v3373, %v2843
        %v3502 = vmul.f32 %v3374, %v2845
        %v3503 = vmul.f32 %v3375, %v2847
        %v3504 = vmul.f32 %v3376, %v2849
        %v3505 = vmul.f32 %v3377, %v2851
        %v3506 = vmul.f32 %v3378, %v2853
        %v3507 = vmul.f32 %v3379, %v2855
        %v3508 = vmul.f32 %v3380, %v2857
        %v3509 = vmul.f32 %v3381, %v2859
        %v3510 = vmul.f32 %v3382, %v2861
        %v3511 = vmul.f32 %v3383, %v2863
        %v3512 = vmul.f32 %v3384, %v2865
        %v3513 = vmul.f32 %v3385, %v2867
        %v3514 = vmul.f32 %v3386, %v2869
        %v3515 = vmul.f32 %v3387, %v2871
        %v3516 = vmul.f32 %v3388, %v2873
        %v3517 = vmul.f32 %v3389, %v2875
        %v3518 = vmul.f32 %v3390, %v2877
        %v3519 = vmul.f32 %v3391, %v2879
        %v3520 = vadd.f32 %v3392, -0.28449672
        %v3521 = vadd.f32 %v3393, -0.28449672
        %v3522 = vadd.f32 %v3394, -0.28449672
        %v3523 = vadd.f32 %v3395, -0.28449672
        %v3524 = vadd.f32 %v3396, -0.28449672
        %v3525 = vadd.f32 %v3397, -0.28449672
        %v3526 = vadd.f32 %v3398, -0.28449672
        %v3527 = vadd.f32 %v3399, -0.28449672
        %v3528 = vadd.f32 %v3400, -0.28449672
        %v3529 = vadd.f32 %v3401, -0.28449672
        %v3530 = vadd.f32 %v3402, -0.28449672
        %v3531 = vadd.f32 %v3403, -0.28449672
        %v3532 = vadd.f32 %v3404, -0.28449672
        %v3533 = vadd.f32 %v3405, -0.28449672
        %v3534 = vadd.f32 %v3406, -0.28449672
        %v3535 = vadd.f32 %v3407, -0.28449672
        %v3536 = vadd.f32 %v3408, -0.28449672
        %v3537 = vadd.f32 %v3409, -0.28449672
        %v3538 = vadd.f32 %v3410, -0.28449672
        %v3539 = vadd.f32 %v3411, -0.28449672
        %v3540 = vadd.f32 %v3412, -0.28449672
        %v3541 = vadd.f32 %v3413, -0.28449672
        %v3542 = vadd.f32 %v3414, -0.28449672
        %v3543 = vadd.f32 %v3415, -0.28449672
        %v3544 = vadd.f32 %v3416, -0.28449672
        %v3545 = vadd.f32 %v3417, -0.28449672
        %v3546 = vadd.f32 %v3418, -0.28449672
        %v3547 = vadd.f32 %v3419, -0.28449672
        %v3548 = vadd.f32 %v3420, -0.28449672
        %v3549 = vadd.f32 %v3421, -0.28449672
        %v3550 = vadd.f32 %v3422, -0.28449672
        %v3551 = vadd.f32 %v3423, -0.28449672
        %v3552 = vadd.f32 %v3424, -0.28449672
        %v3553 = vadd.f32 %v3425, -0.28449672
        %v3554 = vadd.f32 %v3426, -0.28449672
        %v3555 = vadd.f32 %v3427, -0.28449672
        %v3556 = vadd.f32 %v3428, -0.28449672
        %v3557 = vadd.f32 %v3429, -0.28449672
        %v3558 = vadd.f32 %v3430, -0.28449672
        %v3559 = vadd.f32 %v3431, -0.28449672
        %v3560 = vadd.f32 %v3432, -0.28449672
        %v3561 = vadd.f32 %v3433, -0.28449672
        %v3562 = vadd.f32 %v3434, -0.28449672
        %v3563 = vadd.f32 %v3435, -0.28449672
        %v3564 = vadd.f32 %v3436, -0.28449672
        %v3565 = vadd.f32 %v3437, -0.28449672
        %v3566 = vadd.f32 %v3438, -0.28449672
        %v3567 = vadd.f32 %v3439, -0.28449672
        %v3568 = vadd.f32 %v3440, -0.28449672
        %v3569 = vadd.f32 %v3441, -0.28449672
        %v3570 = vadd.f32 %v3442, -0.28449672
        %v3571 = vadd.f32 %v3443, -0.28449672
        %v3572 = vadd.f32 %v3444, -0.28449672
        %v3573 = vadd.f32 %v3445, -0.28449672
        %v3574 = vadd.f32 %v3446, -0.28449672
        %v3575 = vadd.f32 %v3447, -0.28449672
        %v3576 = vadd.f32 %v3448, -0.28449672
        %v3577 = vadd.f32 %v3449, -0.28449672
        %v3578 = vadd.f32 %v3450, -0.28449672
        %v3579 = vadd.f32 %v3451, -0.28449672
        %v3580 = vadd.f32 %v3452, -0.28449672
        %v3581 = vadd.f32 %v3453, -0.28449672
        %v3582 = vadd.f32 %v3454, -0.28449672
        %v3583 = vadd.f32 %v3455, -0.28449672
        %v3584 = vadd.f32 %v3456, -0.28449672
        %v3585 = vadd.f32 %v3457, -0.28449672
        %v3586 = vadd.f32 %v3458, -0.28449672
        %v3587 = vadd.f32 %v3459, -0.28449672
        %v3588 = vadd.f32 %v3460, -0.28449672
        %v3589 = vadd.f32 %v3461, -0.28449672
        %v3590 = vadd.f32 %v3462, -0.28449672
        %v3591 = vadd.f32 %v3463, -0.28449672
        %v3592 = vadd.f32 %v3464, -0.28449672
        %v3593 = vadd.f32 %v3465, -0.28449672
        %v3594 = vadd.f32 %v3466, -0.28449672
        %v3595 = vadd.f32 %v3467, -0.28449672
        %v3596 = vadd.f32 %v3468, -0.28449672
        %v3597 = vadd.f32 %v3469, -0.28449672
        %v3598 = vadd.f32 %v3470, -0.28449672
        %v3599 = vadd.f32 %v3471, -0.28449672
        %v3600 = vadd.f32 %v3472, -0.28449672
        %v3601 = vadd.f32 %v3473, -0.28449672
        %v3602 = vadd.f32 %v3474, -0.28449672
        %v3603 = vadd.f32 %v3475, -0.28449672
        %v3604 = vadd.f32 %v3476, -0.28449672
        %v3605 = vadd.f32 %v3477, -0.28449672
        %v3606 = vadd.f32 %v3478, -0.28449672
        %v3607 = vadd.f32 %v3479, -0.28449672
        %v3608 = vadd.f32 %v3480, -0.28449672
        %v3609 = vadd.f32 %v3481, -0.28449672
        %v3610 = vadd.f32 %v3482, -0.28449672
        %v3611 = vadd.f32 %v3483, -0.28449672
        %v3612 = vadd.f32 %v3484, -0.28449672
        %v3613 = vadd.f32 %v3485, -0.28449672
        %v3614 = vadd.f32 %v3486, -0.28449672
        %v3615 = vadd.f32 %v3487, -0.28449672
        %v3616 = vadd.f32 %v3488, -0.28449672
        %v3617 = vadd.f32 %v3489, -0.28449672
        %v3618 = vadd.f32 %v3490, -0.28449672
        %v3619 = vadd.f32 %v3491, -0.28449672
        %v3620 = vadd.f32 %v3492, -0.28449672
        %v3621 = vadd.f32 %v3493, -0.28449672
        %v3622 = vadd.f32 %v3494, -0.28449672
        %v3623 = vadd.f32 %v3495, -0.28449672
        %v3624 = vadd.f32 %v3496, -0.28449672
        %v3625 = vadd.f32 %v3497, -0.28449672
        %v3626 = vadd.f32 %v3498, -0.28449672
        %v3627 = vadd.f32 %v3499, -0.28449672
        %v3628 = vadd.f32 %v3500, -0.28449672
        %v3629 = vadd.f32 %v3501, -0.28449672
        %v3630 = vadd.f32 %v3502, -0.28449672
        %v3631 = vadd.f32 %v3503, -0.28449672
        %v3632 = vadd.f32 %v3504, -0.28449672
        %v3633 = vadd.f32 %v3505, -0.28449672
        %v3634 = vadd.f32 %v3506, -0.28449672
        %v3635 = vadd.f32 %v3507, -0.28449672
        %v3636 = vadd.f32 %v3508, -0.28449672
        %v3637 = vadd.f32 %v3509, -0.28449672
        %v3638 = vadd.f32 %v3510, -0.28449672
        %v3639 = vadd.f32 %v3511, -0.28449672
        %v3640 = vadd.f32 %v3512, -0.28449672
        %v3641 = vadd.f32 %v3513, -0.28449672
        %v3642 = vadd.f32 %v3514, -0.28449672
        %v3643 = vadd.f32 %v3515, -0.28449672
        %v3644 = vadd.f32 %v3516, -0.28449672
        %v3645 = vadd.f32 %v3517, -0.28449672
        %v3646 = vadd.f32 %v3518, -0.28449672
        %v3647 = vadd.f32 %v3519, -0.28449672
        %v3648 = vmul.f32 %v3520, %v2625
        %v3649 = vmul.f32 %v3521, %v2627
        %v3650 = vmul.f32 %v3522, %v2629
        %v3651 = vmul.f32 %v3523, %v2631
        %v3652 = vmul.f32 %v3524, %v2633
        %v3653 = vmul.f32 %v3525, %v2635
        %v3654 = vmul.f32 %v3526, %v2637
        %v3655 = vmul.f32 %v3527, %v2639
        %v3656 = vmul.f32 %v3528, %v2641
        %v3657 = vmul.f32 %v3529, %v2643
        %v3658 = vmul.f32 %v3530, %v2645
        %v3659 = vmul.f32 %v3531, %v2647
        %v3660 = vmul.f32 %v3532, %v2649
        %v3661 = vmul.f32 %v3533, %v2651
        %v3662 = vmul.f32 %v3534, %v2653
        %v3663 = vmul.f32 %v3535, %v2655
        %v3664 = vmul.f32 %v3536, %v2657
        %v3665 = vmul.f32 %v3537, %v2659
        %v3666 = vmul.f32 %v3538, %v2661
        %v3667 = vmul.f32 %v3539, %v2663
        %v3668 = vmul.f32 %v3540, %v2665
        %v3669 = vmul.f32 %v3541, %v2667
        %v3670 = vmul.f32 %v3542, %v2669
        %v3671 = vmul.f32 %v3543, %v2671
        %v3672 = vmul.f32 %v3544, %v2673
        %v3673 = vmul.f32 %v3545, %v2675
        %v3674 = vmul.f32 %v3546, %v2677
        %v3675 = vmul.f32 %v3547, %v2679
        %v3676 = vmul.f32 %v3548, %v2681
        %v3677 = vmul.f32 %v3549, %v2683
        %v3678 = vmul.f32 %v3550, %v2685
        %v3679 = vmul.f32 %v3551, %v2687
        %v3680 = vmul.f32 %v3552, %v2689
        %v3681 = vmul.f32 %v3553, %v2691
        %v3682 = vmul.f32 %v3554, %v2693
        %v3683 = vmul.f32 %v3555, %v2695
        %v3684 = vmul.f32 %v3556, %v2697
        %v3685 = vmul.f32 %v3557, %v2699
        %v3686 = vmul.f32 %v3558, %v2701
        %v3687 = vmul.f32 %v3559, %v2703
        %v3688 = vmul.f32 %v3560, %v2705
        %v3689 = vmul.f32 %v3561, %v2707
        %v3690 = vmul.f32 %v3562, %v2709
        %v3691 = vmul.f32 %v3563, %v2711
        %v3692 = vmul.f32 %v3564, %v2713
        %v3693 = vmul.f32 %v3565, %v2715
        %v3694 = vmul.f32 %v3566, %v2717
        %v3695 = vmul.f32 %v3567, %v2719
        %v3696 = vmul.f32 %v3568, %v2721
        %v3697 = vmul.f32 %v3569, %v2723
        %v3698 = vmul.f32 %v3570, %v2725
        %v3699 = vmul.f32 %v3571, %v2727
        %v3700 = vmul.f32 %v3572, %v2729
        %v3701 = vmul.f32 %v3573, %v2731
        %v3702 = vmul.f32 %v3574, %v2733
        %v3703 = vmul.f32 %v3575, %v2735
        %v3704 = vmul.f32 %v3576, %v2737
        %v3705 = vmul.f32 %v3577, %v2739
        %v3706 = vmul.f32 %v3578, %v2741
        %v3707 = vmul.f32 %v3579, %v2743
        %v3708 = vmul.f32 %v3580, %v2745
        %v3709 = vmul.f32 %v3581, %v2747
        %v3710 = vmul.f32 %v3582, %v2749
        %v3711 = vmul.f32 %v3583, %v2751
        %v3712 = vmul.f32 %v3584, %v2753
        %v3713 = vmul.f32 %v3585, %v2755
        %v3714 = vmul.f32 %v3586, %v2757
        %v3715 = vmul.f32 %v3587, %v2759
        %v3716 = vmul.f32 %v3588, %v2761
        %v3717 = vmul.f32 %v3589, %v2763
        %v3718 = vmul.f32 %v3590, %v2765
        %v3719 = vmul.f32 %v3591, %v2767
        %v3720 = vmul.f32 %v3592, %v2769
        %v3721 = vmul.f32 %v3593, %v2771
        %v3722 = vmul.f32 %v3594, %v2773
        %v3723 = vmul.f32 %v3595, %v2775
        %v3724 = vmul.f32 %v3596, %v2777
        %v3725 = vmul.f32 %v3597, %v2779
        %v3726 = vmul.f32 %v3598, %v2781
        %v3727 = vmul.f32 %v3599, %v2783
        %v3728 = vmul.f32 %v3600, %v2785
        %v3729 = vmul.f32 %v3601, %v2787
        %v3730 = vmul.f32 %v3602, %v2789
        %v3731 = vmul.f32 %v3603, %v2791
        %v3732 = vmul.f32 %v3604, %v2793
        %v3733 = vmul.f32 %v3605, %v2795
        %v3734 = vmul.f32 %v3606, %v2797
        %v3735 = vmul.f32 %v3607, %v2799
        %v3736 = vmul.f32 %v3608, %v2801
        %v3737 = vmul.f32 %v3609, %v2803
        %v3738 = vmul.f32 %v3610, %v2805
        %v3739 = vmul.f32 %v3611, %v2807
        %v3740 = vmul.f32 %v3612, %v2809
        %v3741 = vmul.f32 %v3613, %v2811
        %v3742 = vmul.f32 %v3614, %v2813
        %v3743 = vmul.f32 %v3615, %v2815
        %v3744 = vmul.f32 %v3616, %v2817
        %v3745 = vmul.f32 %v3617, %v2819
        %v3746 = vmul.f32 %v3618, %v2821
        %v3747 = vmul.f32 %v3619, %v2823
        %v3748 = vmul.f32 %v3620, %v2825
        %v3749 = vmul.f32 %v3621, %v2827
        %v3750 = vmul.f32 %v3622, %v2829
        %v3751 = vmul.f32 %v3623, %v2831
        %v3752 = vmul.f32 %v3624, %v2833
        %v3753 = vmul.f32 %v3625, %v2835
        %v3754 = vmul.f32 %v3626, %v2837
        %v3755 = vmul.f32 %v3627, %v2839
        %v3756 = vmul.f32 %v3628, %v2841
        %v3757 = vmul.f32 %v3629, %v2843
        %v3758 = vmul.f32 %v3630, %v2845
        %v3759 = vmul.f32 %v3631, %v2847
        %v3760 = vmul.f32 %v3632, %v2849
        %v3761 = vmul.f32 %v3633, %v2851
        %v3762 = vmul.f32 %v3634, %v2853
        %v3763 = vmul.f32 %v3635, %v2855
        %v3764 = vmul.f32 %v3636, %v2857
        %v3765 = vmul.f32 %v3637, %v2859
        %v3766 = vmul.f32 %v3638, %v2861
        %v3767 = vmul.f32 %v3639, %v2863
        %v3768 = vmul.f32 %v3640, %v2865
        %v3769 = vmul.f32 %v3641, %v2867
        %v3770 = vmul.f32 %v3642, %v2869
        %v3771 = vmul.f32 %v3643, %v2871
        %v3772 = vmul.f32 %v3644, %v2873
        %v3773 = vmul.f32 %v3645, %v2875
        %v3774 = vmul.f32 %v3646, %v2877
        %v3775 = vmul.f32 %v3647, %v2879
        %v3776 = vadd.f32 %v3648, 0.2548296
        %v3777 = vadd.f32 %v3649, 0.2548296
        %v3778 = vadd.f32 %v3650, 0.2548296
        %v3779 = vadd.f32 %v3651, 0.2548296
        %v3780 = vadd.f32 %v3652, 0.2548296
        %v3781 = vadd.f32 %v3653, 0.2548296
        %v3782 = vadd.f32 %v3654, 0.2548296
        %v3783 = vadd.f32 %v3655, 0.2548296
        %v3784 = vadd.f32 %v3656, 0.2548296
        %v3785 = vadd.f32 %v3657, 0.2548296
        %v3786 = vadd.f32 %v3658, 0.2548296
        %v3787 = vadd.f32 %v3659, 0.2548296
        %v3788 = vadd.f32 %v3660, 0.2548296
        %v3789 = vadd.f32 %v3661, 0.2548296
        %v3790 = vadd.f32 %v3662, 0.2548296
        %v3791 = vadd.f32 %v3663, 0.2548296
        %v3792 = vadd.f32 %v3664, 0.2548296
        %v3793 = vadd.f32 %v3665, 0.2548296
        %v3794 = vadd.f32 %v3666, 0.2548296
        %v3795 = vadd.f32 %v3667, 0.2548296
        %v3796 = vadd.f32 %v3668, 0.2548296
        %v3797 = vadd.f32 %v3669, 0.2548296
        %v3798 = vadd.f32 %v3670, 0.2548296
        %v3799 = vadd.f32 %v3671, 0.2548296
        %v3800 = vadd.f32 %v3672, 0.2548296
        %v3801 = vadd.f32 %v3673, 0.2548296
        %v3802 = vadd.f32 %v3674, 0.2548296
        %v3803 = vadd.f32 %v3675, 0.2548296
        %v3804 = vadd.f32 %v3676, 0.2548296
        %v3805 = vadd.f32 %v3677, 0.2548296
        %v3806 = vadd.f32 %v3678, 0.2548296
        %v3807 = vadd.f32 %v3679, 0.2548296
        %v3808 = vadd.f32 %v3680, 0.2548296
        %v3809 = vadd.f32 %v3681, 0.2548296
        %v3810 = vadd.f32 %v3682, 0.2548296
        %v3811 = vadd.f32 %v3683, 0.2548296
        %v3812 = vadd.f32 %v3684, 0.2548296
        %v3813 = vadd.f32 %v3685, 0.2548296
        %v3814 = vadd.f32 %v3686, 0.2548296
        %v3815 = vadd.f32 %v3687, 0.2548296
        %v3816 = vadd.f32 %v3688, 0.2548296
        %v3817 = vadd.f32 %v3689, 0.2548296
        %v3818 = vadd.f32 %v3690, 0.2548296
        %v3819 = vadd.f32 %v3691, 0.2548296
        %v3820 = vadd.f32 %v3692, 0.2548296
        %v3821 = vadd.f32 %v3693, 0.2548296
        %v3822 = vadd.f32 %v3694, 0.2548296
        %v3823 = vadd.f32 %v3695, 0.2548296
        %v3824 = vadd.f32 %v3696, 0.2548296
        %v3825 = vadd.f32 %v3697, 0.2548296
        %v3826 = vadd.f32 %v3698, 0.2548296
        %v3827 = vadd.f32 %v3699, 0.2548296
        %v3828 = vadd.f32 %v3700, 0.2548296
        %v3829 = vadd.f32 %v3701, 0.2548296
        %v3830 = vadd.f32 %v3702, 0.2548296
        %v3831 = vadd.f32 %v3703, 0.2548296
        %v3832 = vadd.f32 %v3704, 0.2548296
        %v3833 = vadd.f32 %v3705, 0.2548296
        %v3834 = vadd.f32 %v3706, 0.2548296
        %v3835 = vadd.f32 %v3707, 0.2548296
        %v3836 = vadd.f32 %v3708, 0.2548296
        %v3837 = vadd.f32 %v3709, 0.2548296
        %v3838 = vadd.f32 %v3710, 0.2548296
        %v3839 = vadd.f32 %v3711, 0.2548296
        %v3840 = vadd.f32 %v3712, 0.2548296
        %v3841 = vadd.f32 %v3713, 0.2548296
        %v3842 = vadd.f32 %v3714, 0.2548296
        %v3843 = vadd.f32 %v3715, 0.2548296
        %v3844 = vadd.f32 %v3716, 0.2548296
        %v3845 = vadd.f32 %v3717, 0.2548296
        %v3846 = vadd.f32 %v3718, 0.2548296
        %v3847 = vadd.f32 %v3719, 0.2548296
        %v3848 = vadd.f32 %v3720, 0.2548296
        %v3849 = vadd.f32 %v3721, 0.2548296
        %v3850 = vadd.f32 %v3722, 0.2548296
        %v3851 = vadd.f32 %v3723, 0.2548296
        %v3852 = vadd.f32 %v3724, 0.2548296
        %v3853 = vadd.f32 %v3725, 0.2548296
        %v3854 = vadd.f32 %v3726, 0.2548296
        %v3855 = vadd.f32 %v3727, 0.2548296
        %v3856 = vadd.f32 %v3728, 0.2548296
        %v3857 = vadd.f32 %v3729, 0.2548296
        %v3858 = vadd.f32 %v3730, 0.2548296
        %v3859 = vadd.f32 %v3731, 0.2548296
        %v3860 = vadd.f32 %v3732, 0.2548296
        %v3861 = vadd.f32 %v3733, 0.2548296
        %v3862 = vadd.f32 %v3734, 0.2548296
        %v3863 = vadd.f32 %v3735, 0.2548296
        %v3864 = vadd.f32 %v3736, 0.2548296
        %v3865 = vadd.f32 %v3737, 0.2548296
        %v3866 = vadd.f32 %v3738, 0.2548296
        %v3867 = vadd.f32 %v3739, 0.2548296
        %v3868 = vadd.f32 %v3740, 0.2548296
        %v3869 = vadd.f32 %v3741, 0.2548296
        %v3870 = vadd.f32 %v3742, 0.2548296
        %v3871 = vadd.f32 %v3743, 0.2548296
        %v3872 = vadd.f32 %v3744, 0.2548296
        %v3873 = vadd.f32 %v3745, 0.2548296
        %v3874 = vadd.f32 %v3746, 0.2548296
        %v3875 = vadd.f32 %v3747, 0.2548296
        %v3876 = vadd.f32 %v3748, 0.2548296
        %v3877 = vadd.f32 %v3749, 0.2548296
        %v3878 = vadd.f32 %v3750, 0.2548296
        %v3879 = vadd.f32 %v3751, 0.2548296
        %v3880 = vadd.f32 %v3752, 0.2548296
        %v3881 = vadd.f32 %v3753, 0.2548296
        %v3882 = vadd.f32 %v3754, 0.2548296
        %v3883 = vadd.f32 %v3755, 0.2548296
        %v3884 = vadd.f32 %v3756, 0.2548296
        %v3885 = vadd.f32 %v3757, 0.2548296
        %v3886 = vadd.f32 %v3758, 0.2548296
        %v3887 = vadd.f32 %v3759, 0.2548296
        %v3888 = vadd.f32 %v3760, 0.2548296
        %v3889 = vadd.f32 %v3761, 0.2548296
        %v3890 = vadd.f32 %v3762, 0.2548296
        %v3891 = vadd.f32 %v3763, 0.2548296
        %v3892 = vadd.f32 %v3764, 0.2548296
        %v3893 = vadd.f32 %v3765, 0.2548296
        %v3894 = vadd.f32 %v3766, 0.2548296
        %v3895 = vadd.f32 %v3767, 0.2548296
        %v3896 = vadd.f32 %v3768, 0.2548296
        %v3897 = vadd.f32 %v3769, 0.2548296
        %v3898 = vadd.f32 %v3770, 0.2548296
        %v3899 = vadd.f32 %v3771, 0.2548296
        %v3900 = vadd.f32 %v3772, 0.2548296
        %v3901 = vadd.f32 %v3773, 0.2548296
        %v3902 = vadd.f32 %v3774, 0.2548296
        %v3903 = vadd.f32 %v3775, 0.2548296
        %v3904 = vmul.f32 %v3776, %v2625
        %v3905 = vmul.f32 %v3777, %v2627
        %v3906 = vmul.f32 %v3778, %v2629
        %v3907 = vmul.f32 %v3779, %v2631
        %v3908 = vmul.f32 %v3780, %v2633
        %v3909 = vmul.f32 %v3781, %v2635
        %v3910 = vmul.f32 %v3782, %v2637
        %v3911 = vmul.f32 %v3783, %v2639
        %v3912 = vmul.f32 %v3784, %v2641
        %v3913 = vmul.f32 %v3785, %v2643
        %v3914 = vmul.f32 %v3786, %v2645
        %v3915 = vmul.f32 %v3787, %v2647
        %v3916 = vmul.f32 %v3788, %v2649
        %v3917 = vmul.f32 %v3789, %v2651
        %v3918 = vmul.f32 %v3790, %v2653
        %v3919 = vmul.f32 %v3791, %v2655
        %v3920 = vmul.f32 %v3792, %v2657
        %v3921 = vmul.f32 %v3793, %v2659
        %v3922 = vmul.f32 %v3794, %v2661
        %v3923 = vmul.f32 %v3795, %v2663
        %v3924 = vmul.f32 %v3796, %v2665
        %v3925 = vmul.f32 %v3797, %v2667
        %v3926 = vmul.f32 %v3798, %v2669
        %v3927 = vmul.f32 %v3799, %v2671
        %v3928 = vmul.f32 %v3800, %v2673
        %v3929 = vmul.f32 %v3801, %v2675
        %v3930 = vmul.f32 %v3802, %v2677
        %v3931 = vmul.f32 %v3803, %v2679
        %v3932 = vmul.f32 %v3804, %v2681
        %v3933 = vmul.f32 %v3805, %v2683
        %v3934 = vmul.f32 %v3806, %v2685
        %v3935 = vmul.f32 %v3807, %v2687
        %v3936 = vmul.f32 %v3808, %v2689
        %v3937 = vmul.f32 %v3809, %v2691
        %v3938 = vmul.f32 %v3810, %v2693
        %v3939 = vmul.f32 %v3811, %v2695
        %v3940 = vmul.f32 %v3812, %v2697
        %v3941 = vmul.f32 %v3813, %v2699
        %v3942 = vmul.f32 %v3814, %v2701
        %v3943 = vmul.f32 %v3815, %v2703
        %v3944 = vmul.f32 %v3816, %v2705
        %v3945 = vmul.f32 %v3817, %v2707
        %v3946 = vmul.f32 %v3818, %v2709
        %v3947 = vmul.f32 %v3819, %v2711
        %v3948 = vmul.f32 %v3820, %v2713
        %v3949 = vmul.f32 %v3821, %v2715
        %v3950 = vmul.f32 %v3822, %v2717
        %v3951 = vmul.f32 %v3823, %v2719
        %v3952 = vmul.f32 %v3824, %v2721
        %v3953 = vmul.f32 %v3825, %v2723
        %v3954 = vmul.f32 %v3826, %v2725
        %v3955 = vmul.f32 %v3827, %v2727
        %v3956 = vmul.f32 %v3828, %v2729
        %v3957 = vmul.f32 %v3829, %v2731
        %v3958 = vmul.f32 %v3830, %v2733
        %v3959 = vmul.f32 %v3831, %v2735
        %v3960 = vmul.f32 %v3832, %v2737
        %v3961 = vmul.f32 %v3833, %v2739
        %v3962 = vmul.f32 %v3834, %v2741
        %v3963 = vmul.f32 %v3835, %v2743
        %v3964 = vmul.f32 %v3836, %v2745
        %v3965 = vmul.f32 %v3837, %v2747
        %v3966 = vmul.f32 %v3838, %v2749
        %v3967 = vmul.f32 %v3839, %v2751
        %v3968 = vmul.f32 %v3840, %v2753
        %v3969 = vmul.f32 %v3841, %v2755
        %v3970 = vmul.f32 %v3842, %v2757
        %v3971 = vmul.f32 %v3843, %v2759
        %v3972 = vmul.f32 %v3844, %v2761
        %v3973 = vmul.f32 %v3845, %v2763
        %v3974 = vmul.f32 %v3846, %v2765
        %v3975 = vmul.f32 %v3847, %v2767
        %v3976 = vmul.f32 %v3848, %v2769
        %v3977 = vmul.f32 %v3849, %v2771
        %v3978 = vmul.f32 %v3850, %v2773
        %v3979 = vmul.f32 %v3851, %v2775
        %v3980 = vmul.f32 %v3852, %v2777
        %v3981 = vmul.f32 %v3853, %v2779
        %v3982 = vmul.f32 %v3854, %v2781
        %v3983 = vmul.f32 %v3855, %v2783
        %v3984 = vmul.f32 %v3856, %v2785
        %v3985 = vmul.f32 %v3857, %v2787
        %v3986 = vmul.f32 %v3858, %v2789
        %v3987 = vmul.f32 %v3859, %v2791
        %v3988 = vmul.f32 %v3860, %v2793
        %v3989 = vmul.f32 %v3861, %v2795
        %v3990 = vmul.f32 %v3862, %v2797
        %v3991 = vmul.f32 %v3863, %v2799
        %v3992 = vmul.f32 %v3864, %v2801
        %v3993 = vmul.f32 %v3865, %v2803
        %v3994 = vmul.f32 %v3866, %v2805
        %v3995 = vmul.f32 %v3867, %v2807
        %v3996 = vmul.f32 %v3868, %v2809
        %v3997 = vmul.f32 %v3869, %v2811
        %v3998 = vmul.f32 %v3870, %v2813
        %v3999 = vmul.f32 %v3871, %v2815
        %v4000 = vmul.f32 %v3872, %v2817
        %v4001 = vmul.f32 %v3873, %v2819
        %v4002 = vmul.f32 %v3874, %v2821
        %v4003 = vmul.f32 %v3875, %v2823
        %v4004 = vmul.f32 %v3876, %v2825
        %v4005 = vmul.f32 %v3877, %v2827
        %v4006 = vmul.f32 %v3878, %v2829
        %v4007 = vmul.f32 %v3879, %v2831
        %v4008 = vmul.f32 %v3880, %v2833
        %v4009 = vmul.f32 %v3881, %v2835
        %v4010 = vmul.f32 %v3882, %v2837
        %v4011 = vmul.f32 %v3883, %v2839
        %v4012 = vmul.f32 %v3884, %v2841
        %v4013 = vmul.f32 %v3885, %v2843
        %v4014 = vmul.f32 %v3886, %v2845
        %v4015 = vmul.f32 %v3887, %v2847
        %v4016 = vmul.f32 %v3888, %v2849
        %v4017 = vmul.f32 %v3889, %v2851
        %v4018 = vmul.f32 %v3890, %v2853
        %v4019 = vmul.f32 %v3891, %v2855
        %v4020 = vmul.f32 %v3892, %v2857
        %v4021 = vmul.f32 %v3893, %v2859
        %v4022 = vmul.f32 %v3894, %v2861
        %v4023 = vmul.f32 %v3895, %v2863
        %v4024 = vmul.f32 %v3896, %v2865
        %v4025 = vmul.f32 %v3897, %v2867
        %v4026 = vmul.f32 %v3898, %v2869
        %v4027 = vmul.f32 %v3899, %v2871
        %v4028 = vmul.f32 %v3900, %v2873
        %v4029 = vmul.f32 %v3901, %v2875
        %v4030 = vmul.f32 %v3902, %v2877
        %v4031 = vmul.f32 %v3903, %v2879
        %v4032 = vsub.f32 0.0, %v2240
        %v4033 = vsub.f32 0.0, %v2241
        %v4034 = vsub.f32 0.0, %v2242
        %v4035 = vsub.f32 0.0, %v2243
        %v4036 = vsub.f32 0.0, %v2244
        %v4037 = vsub.f32 0.0, %v2245
        %v4038 = vsub.f32 0.0, %v2246
        %v4039 = vsub.f32 0.0, %v2247
        %v4040 = vsub.f32 0.0, %v2248
        %v4041 = vsub.f32 0.0, %v2249
        %v4042 = vsub.f32 0.0, %v2250
        %v4043 = vsub.f32 0.0, %v2251
        %v4044 = vsub.f32 0.0, %v2252
        %v4045 = vsub.f32 0.0, %v2253
        %v4046 = vsub.f32 0.0, %v2254
        %v4047 = vsub.f32 0.0, %v2255
        %v4048 = vsub.f32 0.0, %v2256
        %v4049 = vsub.f32 0.0, %v2257
        %v4050 = vsub.f32 0.0, %v2258
        %v4051 = vsub.f32 0.0, %v2259
        %v4052 = vsub.f32 0.0, %v2260
        %v4053 = vsub.f32 0.0, %v2261
        %v4054 = vsub.f32 0.0, %v2262
        %v4055 = vsub.f32 0.0, %v2263
        %v4056 = vsub.f32 0.0, %v2264
        %v4057 = vsub.f32 0.0, %v2265
        %v4058 = vsub.f32 0.0, %v2266
        %v4059 = vsub.f32 0.0, %v2267
        %v4060 = vsub.f32 0.0, %v2268
        %v4061 = vsub.f32 0.0, %v2269
        %v4062 = vsub.f32 0.0, %v2270
        %v4063 = vsub.f32 0.0, %v2271
        %v4064 = vsub.f32 0.0, %v2272
        %v4065 = vsub.f32 0.0, %v2273
        %v4066 = vsub.f32 0.0, %v2274
        %v4067 = vsub.f32 0.0, %v2275
        %v4068 = vsub.f32 0.0, %v2276
        %v4069 = vsub.f32 0.0, %v2277
        %v4070 = vsub.f32 0.0, %v2278
        %v4071 = vsub.f32 0.0, %v2279
        %v4072 = vsub.f32 0.0, %v2280
        %v4073 = vsub.f32 0.0, %v2281
        %v4074 = vsub.f32 0.0, %v2282
        %v4075 = vsub.f32 0.0, %v2283
        %v4076 = vsub.f32 0.0, %v2284
        %v4077 = vsub.f32 0.0, %v2285
        %v4078 = vsub.f32 0.0, %v2286
        %v4079 = vsub.f32 0.0, %v2287
        %v4080 = vsub.f32 0.0, %v2288
        %v4081 = vsub.f32 0.0, %v2289
        %v4082 = vsub.f32 0.0, %v2290
        %v4083 = vsub.f32 0.0, %v2291
        %v4084 = vsub.f32 0.0, %v2292
        %v4085 = vsub.f32 0.0, %v2293
        %v4086 = vsub.f32 0.0, %v2294
        %v4087 = vsub.f32 0.0, %v2295
        %v4088 = vsub.f32 0.0, %v2296
        %v4089 = vsub.f32 0.0, %v2297
        %v4090 = vsub.f32 0.0, %v2298
        %v4091 = vsub.f32 0.0, %v2299
        %v4092 = vsub.f32 0.0, %v2300
        %v4093 = vsub.f32 0.0, %v2301
        %v4094 = vsub.f32 0.0, %v2302
        %v4095 = vsub.f32 0.0, %v2303
        %v4096 = vsub.f32 0.0, %v2304
        %v4097 = vsub.f32 0.0, %v2305
        %v4098 = vsub.f32 0.0, %v2306
        %v4099 = vsub.f32 0.0, %v2307
        %v4100 = vsub.f32 0.0, %v2308
        %v4101 = vsub.f32 0.0, %v2309
        %v4102 = vsub.f32 0.0, %v2310
        %v4103 = vsub.f32 0.0, %v2311
        %v4104 = vsub.f32 0.0, %v2312
        %v4105 = vsub.f32 0.0, %v2313
        %v4106 = vsub.f32 0.0, %v2314
        %v4107 = vsub.f32 0.0, %v2315
        %v4108 = vsub.f32 0.0, %v2316
        %v4109 = vsub.f32 0.0, %v2317
        %v4110 = vsub.f32 0.0, %v2318
        %v4111 = vsub.f32 0.0, %v2319
        %v4112 = vsub.f32 0.0, %v2320
        %v4113 = vsub.f32 0.0, %v2321
        %v4114 = vsub.f32 0.0, %v2322
        %v4115 = vsub.f32 0.0, %v2323
        %v4116 = vsub.f32 0.0, %v2324
        %v4117 = vsub.f32 0.0, %v2325
        %v4118 = vsub.f32 0.0, %v2326
        %v4119 = vsub.f32 0.0, %v2327
        %v4120 = vsub.f32 0.0, %v2328
        %v4121 = vsub.f32 0.0, %v2329
        %v4122 = vsub.f32 0.0, %v2330
        %v4123 = vsub.f32 0.0, %v2331
        %v4124 = vsub.f32 0.0, %v2332
        %v4125 = vsub.f32 0.0, %v2333
        %v4126 = vsub.f32 0.0, %v2334
        %v4127 = vsub.f32 0.0, %v2335
        %v4128 = vsub.f32 0.0, %v2336
        %v4129 = vsub.f32 0.0, %v2337
        %v4130 = vsub.f32 0.0, %v2338
        %v4131 = vsub.f32 0.0, %v2339
        %v4132 = vsub.f32 0.0, %v2340
        %v4133 = vsub.f32 0.0, %v2341
        %v4134 = vsub.f32 0.0, %v2342
        %v4135 = vsub.f32 0.0, %v2343
        %v4136 = vsub.f32 0.0, %v2344
        %v4137 = vsub.f32 0.0, %v2345
        %v4138 = vsub.f32 0.0, %v2346
        %v4139 = vsub.f32 0.0, %v2347
        %v4140 = vsub.f32 0.0, %v2348
        %v4141 = vsub.f32 0.0, %v2349
        %v4142 = vsub.f32 0.0, %v2350
        %v4143 = vsub.f32 0.0, %v2351
        %v4144 = vsub.f32 0.0, %v2352
        %v4145 = vsub.f32 0.0, %v2353
        %v4146 = vsub.f32 0.0, %v2354
        %v4147 = vsub.f32 0.0, %v2355
        %v4148 = vsub.f32 0.0, %v2356
        %v4149 = vsub.f32 0.0, %v2357
        %v4150 = vsub.f32 0.0, %v2358
        %v4151 = vsub.f32 0.0, %v2359
        %v4152 = vsub.f32 0.0, %v2360
        %v4153 = vsub.f32 0.0, %v2361
        %v4154 = vsub.f32 0.0, %v2362
        %v4155 = vsub.f32 0.0, %v2363
        %v4156 = vsub.f32 0.0, %v2364
        %v4157 = vsub.f32 0.0, %v2365
        %v4158 = vsub.f32 0.0, %v2366
        %v4159 = vsub.f32 0.0, %v2367
        %v4160 = vmul.f32 %v4032, %v2240
        %v4161 = vmul.f32 %v4033, %v2241
        %v4162 = vmul.f32 %v4034, %v2242
        %v4163 = vmul.f32 %v4035, %v2243
        %v4164 = vmul.f32 %v4036, %v2244
        %v4165 = vmul.f32 %v4037, %v2245
        %v4166 = vmul.f32 %v4038, %v2246
        %v4167 = vmul.f32 %v4039, %v2247
        %v4168 = vmul.f32 %v4040, %v2248
        %v4169 = vmul.f32 %v4041, %v2249
        %v4170 = vmul.f32 %v4042, %v2250
        %v4171 = vmul.f32 %v4043, %v2251
        %v4172 = vmul.f32 %v4044, %v2252
        %v4173 = vmul.f32 %v4045, %v2253
        %v4174 = vmul.f32 %v4046, %v2254
        %v4175 = vmul.f32 %v4047, %v2255
        %v4176 = vmul.f32 %v4048, %v2256
        %v4177 = vmul.f32 %v4049, %v2257
        %v4178 = vmul.f32 %v4050, %v2258
        %v4179 = vmul.f32 %v4051, %v2259
        %v4180 = vmul.f32 %v4052, %v2260
        %v4181 = vmul.f32 %v4053, %v2261
        %v4182 = vmul.f32 %v4054, %v2262
        %v4183 = vmul.f32 %v4055, %v2263
        %v4184 = vmul.f32 %v4056, %v2264
        %v4185 = vmul.f32 %v4057, %v2265
        %v4186 = vmul.f32 %v4058, %v2266
        %v4187 = vmul.f32 %v4059, %v2267
        %v4188 = vmul.f32 %v4060, %v2268
        %v4189 = vmul.f32 %v4061, %v2269
        %v4190 = vmul.f32 %v4062, %v2270
        %v4191 = vmul.f32 %v4063, %v2271
        %v4192 = vmul.f32 %v4064, %v2272
        %v4193 = vmul.f32 %v4065, %v2273
        %v4194 = vmul.f32 %v4066, %v2274
        %v4195 = vmul.f32 %v4067, %v2275
        %v4196 = vmul.f32 %v4068, %v2276
        %v4197 = vmul.f32 %v4069, %v2277
        %v4198 = vmul.f32 %v4070, %v2278
        %v4199 = vmul.f32 %v4071, %v2279
        %v4200 = vmul.f32 %v4072, %v2280
        %v4201 = vmul.f32 %v4073, %v2281
        %v4202 = vmul.f32 %v4074, %v2282
        %v4203 = vmul.f32 %v4075, %v2283
        %v4204 = vmul.f32 %v4076, %v2284
        %v4205 = vmul.f32 %v4077, %v2285
        %v4206 = vmul.f32 %v4078, %v2286
        %v4207 = vmul.f32 %v4079, %v2287
        %v4208 = vmul.f32 %v4080, %v2288
        %v4209 = vmul.f32 %v4081, %v2289
        %v4210 = vmul.f32 %v4082, %v2290
        %v4211 = vmul.f32 %v4083, %v2291
        %v4212 = vmul.f32 %v4084, %v2292
        %v4213 = vmul.f32 %v4085, %v2293
        %v4214 = vmul.f32 %v4086, %v2294
        %v4215 = vmul.f32 %v4087, %v2295
        %v4216 = vmul.f32 %v4088, %v2296
        %v4217 = vmul.f32 %v4089, %v2297
        %v4218 = vmul.f32 %v4090, %v2298
        %v4219 = vmul.f32 %v4091, %v2299
        %v4220 = vmul.f32 %v4092, %v2300
        %v4221 = vmul.f32 %v4093, %v2301
        %v4222 = vmul.f32 %v4094, %v2302
        %v4223 = vmul.f32 %v4095, %v2303
        %v4224 = vmul.f32 %v4096, %v2304
        %v4225 = vmul.f32 %v4097, %v2305
        %v4226 = vmul.f32 %v4098, %v2306
        %v4227 = vmul.f32 %v4099, %v2307
        %v4228 = vmul.f32 %v4100, %v2308
        %v4229 = vmul.f32 %v4101, %v2309
        %v4230 = vmul.f32 %v4102, %v2310
        %v4231 = vmul.f32 %v4103, %v2311
        %v4232 = vmul.f32 %v4104, %v2312
        %v4233 = vmul.f32 %v4105, %v2313
        %v4234 = vmul.f32 %v4106, %v2314
        %v4235 = vmul.f32 %v4107, %v2315
        %v4236 = vmul.f32 %v4108, %v2316
        %v4237 = vmul.f32 %v4109, %v2317
        %v4238 = vmul.f32 %v4110, %v2318
        %v4239 = vmul.f32 %v4111, %v2319
        %v4240 = vmul.f32 %v4112, %v2320
        %v4241 = vmul.f32 %v4113, %v2321
        %v4242 = vmul.f32 %v4114, %v2322
        %v4243 = vmul.f32 %v4115, %v2323
        %v4244 = vmul.f32 %v4116, %v2324
        %v4245 = vmul.f32 %v4117, %v2325
        %v4246 = vmul.f32 %v4118, %v2326
        %v4247 = vmul.f32 %v4119, %v2327
        %v4248 = vmul.f32 %v4120, %v2328
        %v4249 = vmul.f32 %v4121, %v2329
        %v4250 = vmul.f32 %v4122, %v2330
        %v4251 = vmul.f32 %v4123, %v2331
        %v4252 = vmul.f32 %v4124, %v2332
        %v4253 = vmul.f32 %v4125, %v2333
        %v4254 = vmul.f32 %v4126, %v2334
        %v4255 = vmul.f32 %v4127, %v2335
        %v4256 = vmul.f32 %v4128, %v2336
        %v4257 = vmul.f32 %v4129, %v2337
        %v4258 = vmul.f32 %v4130, %v2338
        %v4259 = vmul.f32 %v4131, %v2339
        %v4260 = vmul.f32 %v4132, %v2340
        %v4261 = vmul.f32 %v4133, %v2341
        %v4262 = vmul.f32 %v4134, %v2342
        %v4263 = vmul.f32 %v4135, %v2343
        %v4264 = vmul.f32 %v4136, %v2344
        %v4265 = vmul.f32 %v4137, %v2345
        %v4266 = vmul.f32 %v4138, %v2346
        %v4267 = vmul.f32 %v4139, %v2347
        %v4268 = vmul.f32 %v4140, %v2348
        %v4269 = vmul.f32 %v4141, %v2349
        %v4270 = vmul.f32 %v4142, %v2350
        %v4271 = vmul.f32 %v4143, %v2351
        %v4272 = vmul.f32 %v4144, %v2352
        %v4273 = vmul.f32 %v4145, %v2353
        %v4274 = vmul.f32 %v4146, %v2354
        %v4275 = vmul.f32 %v4147, %v2355
        %v4276 = vmul.f32 %v4148, %v2356
        %v4277 = vmul.f32 %v4149, %v2357
        %v4278 = vmul.f32 %v4150, %v2358
        %v4279 = vmul.f32 %v4151, %v2359
        %v4280 = vmul.f32 %v4152, %v2360
        %v4281 = vmul.f32 %v4153, %v2361
        %v4282 = vmul.f32 %v4154, %v2362
        %v4283 = vmul.f32 %v4155, %v2363
        %v4284 = vmul.f32 %v4156, %v2364
        %v4285 = vmul.f32 %v4157, %v2365
        %v4286 = vmul.f32 %v4158, %v2366
        %v4287 = vmul.f32 %v4159, %v2367
        %v4288 = vmul.f32 %v4160, 1.442695
        %v4289 = vpow.pop %v4288
        %v4290 = vmul.f32 %v4161, 1.442695
        %v4291 = vpow.pop %v4290
        %v4292 = vmul.f32 %v4162, 1.442695
        %v4293 = vpow.pop %v4292
        %v4294 = vmul.f32 %v4163, 1.442695
        %v4295 = vpow.pop %v4294
        %v4296 = vmul.f32 %v4164, 1.442695
        %v4297 = vpow.pop %v4296
        %v4298 = vmul.f32 %v4165, 1.442695
        %v4299 = vpow.pop %v4298
        %v4300 = vmul.f32 %v4166, 1.442695
        %v4301 = vpow.pop %v4300
        %v4302 = vmul.f32 %v4167, 1.442695
        %v4303 = vpow.pop %v4302
        %v4304 = vmul.f32 %v4168, 1.442695
        %v4305 = vpow.pop %v4304
        %v4306 = vmul.f32 %v4169, 1.442695
        %v4307 = vpow.pop %v4306
        %v4308 = vmul.f32 %v4170, 1.442695
        %v4309 = vpow.pop %v4308
        %v4310 = vmul.f32 %v4171, 1.442695
        %v4311 = vpow.pop %v4310
        %v4312 = vmul.f32 %v4172, 1.442695
        %v4313 = vpow.pop %v4312
        %v4314 = vmul.f32 %v4173, 1.442695
        %v4315 = vpow.pop %v4314
        %v4316 = vmul.f32 %v4174, 1.442695
        %v4317 = vpow.pop %v4316
        %v4318 = vmul.f32 %v4175, 1.442695
        %v4319 = vpow.pop %v4318
        %v4320 = vmul.f32 %v4176, 1.442695
        %v4321 = vpow.pop %v4320
        %v4322 = vmul.f32 %v4177, 1.442695
        %v4323 = vpow.pop %v4322
        %v4324 = vmul.f32 %v4178, 1.442695
        %v4325 = vpow.pop %v4324
        %v4326 = vmul.f32 %v4179, 1.442695
        %v4327 = vpow.pop %v4326
        %v4328 = vmul.f32 %v4180, 1.442695
        %v4329 = vpow.pop %v4328
        %v4330 = vmul.f32 %v4181, 1.442695
        %v4331 = vpow.pop %v4330
        %v4332 = vmul.f32 %v4182, 1.442695
        %v4333 = vpow.pop %v4332
        %v4334 = vmul.f32 %v4183, 1.442695
        %v4335 = vpow.pop %v4334
        %v4336 = vmul.f32 %v4184, 1.442695
        %v4337 = vpow.pop %v4336
        %v4338 = vmul.f32 %v4185, 1.442695
        %v4339 = vpow.pop %v4338
        %v4340 = vmul.f32 %v4186, 1.442695
        %v4341 = vpow.pop %v4340
        %v4342 = vmul.f32 %v4187, 1.442695
        %v4343 = vpow.pop %v4342
        %v4344 = vmul.f32 %v4188, 1.442695
        %v4345 = vpow.pop %v4344
        %v4346 = vmul.f32 %v4189, 1.442695
        %v4347 = vpow.pop %v4346
        %v4348 = vmul.f32 %v4190, 1.442695
        %v4349 = vpow.pop %v4348
        %v4350 = vmul.f32 %v4191, 1.442695
        %v4351 = vpow.pop %v4350
        %v4352 = vmul.f32 %v4192, 1.442695
        %v4353 = vpow.pop %v4352
        %v4354 = vmul.f32 %v4193, 1.442695
        %v4355 = vpow.pop %v4354
        %v4356 = vmul.f32 %v4194, 1.442695
        %v4357 = vpow.pop %v4356
        %v4358 = vmul.f32 %v4195, 1.442695
        %v4359 = vpow.pop %v4358
        %v4360 = vmul.f32 %v4196, 1.442695
        %v4361 = vpow.pop %v4360
        %v4362 = vmul.f32 %v4197, 1.442695
        %v4363 = vpow.pop %v4362
        %v4364 = vmul.f32 %v4198, 1.442695
        %v4365 = vpow.pop %v4364
        %v4366 = vmul.f32 %v4199, 1.442695
        %v4367 = vpow.pop %v4366
        %v4368 = vmul.f32 %v4200, 1.442695
        %v4369 = vpow.pop %v4368
        %v4370 = vmul.f32 %v4201, 1.442695
        %v4371 = vpow.pop %v4370
        %v4372 = vmul.f32 %v4202, 1.442695
        %v4373 = vpow.pop %v4372
        %v4374 = vmul.f32 %v4203, 1.442695
        %v4375 = vpow.pop %v4374
        %v4376 = vmul.f32 %v4204, 1.442695
        %v4377 = vpow.pop %v4376
        %v4378 = vmul.f32 %v4205, 1.442695
        %v4379 = vpow.pop %v4378
        %v4380 = vmul.f32 %v4206, 1.442695
        %v4381 = vpow.pop %v4380
        %v4382 = vmul.f32 %v4207, 1.442695
        %v4383 = vpow.pop %v4382
        %v4384 = vmul.f32 %v4208, 1.442695
        %v4385 = vpow.pop %v4384
        %v4386 = vmul.f32 %v4209, 1.442695
        %v4387 = vpow.pop %v4386
        %v4388 = vmul.f32 %v4210, 1.442695
        %v4389 = vpow.pop %v4388
        %v4390 = vmul.f32 %v4211, 1.442695
        %v4391 = vpow.pop %v4390
        %v4392 = vmul.f32 %v4212, 1.442695
        %v4393 = vpow.pop %v4392
        %v4394 = vmul.f32 %v4213, 1.442695
        %v4395 = vpow.pop %v4394
        %v4396 = vmul.f32 %v4214, 1.442695
        %v4397 = vpow.pop %v4396
        %v4398 = vmul.f32 %v4215, 1.442695
        %v4399 = vpow.pop %v4398
        %v4400 = vmul.f32 %v4216, 1.442695
        %v4401 = vpow.pop %v4400
        %v4402 = vmul.f32 %v4217, 1.442695
        %v4403 = vpow.pop %v4402
        %v4404 = vmul.f32 %v4218, 1.442695
        %v4405 = vpow.pop %v4404
        %v4406 = vmul.f32 %v4219, 1.442695
        %v4407 = vpow.pop %v4406
        %v4408 = vmul.f32 %v4220, 1.442695
        %v4409 = vpow.pop %v4408
        %v4410 = vmul.f32 %v4221, 1.442695
        %v4411 = vpow.pop %v4410
        %v4412 = vmul.f32 %v4222, 1.442695
        %v4413 = vpow.pop %v4412
        %v4414 = vmul.f32 %v4223, 1.442695
        %v4415 = vpow.pop %v4414
        %v4416 = vmul.f32 %v4224, 1.442695
        %v4417 = vpow.pop %v4416
        %v4418 = vmul.f32 %v4225, 1.442695
        %v4419 = vpow.pop %v4418
        %v4420 = vmul.f32 %v4226, 1.442695
        %v4421 = vpow.pop %v4420
        %v4422 = vmul.f32 %v4227, 1.442695
        %v4423 = vpow.pop %v4422
        %v4424 = vmul.f32 %v4228, 1.442695
        %v4425 = vpow.pop %v4424
        %v4426 = vmul.f32 %v4229, 1.442695
        %v4427 = vpow.pop %v4426
        %v4428 = vmul.f32 %v4230, 1.442695
        %v4429 = vpow.pop %v4428
        %v4430 = vmul.f32 %v4231, 1.442695
        %v4431 = vpow.pop %v4430
        %v4432 = vmul.f32 %v4232, 1.442695
        %v4433 = vpow.pop %v4432
        %v4434 = vmul.f32 %v4233, 1.442695
        %v4435 = vpow.pop %v4434
        %v4436 = vmul.f32 %v4234, 1.442695
        %v4437 = vpow.pop %v4436
        %v4438 = vmul.f32 %v4235, 1.442695
        %v4439 = vpow.pop %v4438
        %v4440 = vmul.f32 %v4236, 1.442695
        %v4441 = vpow.pop %v4440
        %v4442 = vmul.f32 %v4237, 1.442695
        %v4443 = vpow.pop %v4442
        %v4444 = vmul.f32 %v4238, 1.442695
        %v4445 = vpow.pop %v4444
        %v4446 = vmul.f32 %v4239, 1.442695
        %v4447 = vpow.pop %v4446
        %v4448 = vmul.f32 %v4240, 1.442695
        %v4449 = vpow.pop %v4448
        %v4450 = vmul.f32 %v4241, 1.442695
        %v4451 = vpow.pop %v4450
        %v4452 = vmul.f32 %v4242, 1.442695
        %v4453 = vpow.pop %v4452
        %v4454 = vmul.f32 %v4243, 1.442695
        %v4455 = vpow.pop %v4454
        %v4456 = vmul.f32 %v4244, 1.442695
        %v4457 = vpow.pop %v4456
        %v4458 = vmul.f32 %v4245, 1.442695
        %v4459 = vpow.pop %v4458
        %v4460 = vmul.f32 %v4246, 1.442695
        %v4461 = vpow.pop %v4460
        %v4462 = vmul.f32 %v4247, 1.442695
        %v4463 = vpow.pop %v4462
        %v4464 = vmul.f32 %v4248, 1.442695
        %v4465 = vpow.pop %v4464
        %v4466 = vmul.f32 %v4249, 1.442695
        %v4467 = vpow.pop %v4466
        %v4468 = vmul.f32 %v4250, 1.442695
        %v4469 = vpow.pop %v4468
        %v4470 = vmul.f32 %v4251, 1.442695
        %v4471 = vpow.pop %v4470
        %v4472 = vmul.f32 %v4252, 1.442695
        %v4473 = vpow.pop %v4472
        %v4474 = vmul.f32 %v4253, 1.442695
        %v4475 = vpow.pop %v4474
        %v4476 = vmul.f32 %v4254, 1.442695
        %v4477 = vpow.pop %v4476
        %v4478 = vmul.f32 %v4255, 1.442695
        %v4479 = vpow.pop %v4478
        %v4480 = vmul.f32 %v4256, 1.442695
        %v4481 = vpow.pop %v4480
        %v4482 = vmul.f32 %v4257, 1.442695
        %v4483 = vpow.pop %v4482
        %v4484 = vmul.f32 %v4258, 1.442695
        %v4485 = vpow.pop %v4484
        %v4486 = vmul.f32 %v4259, 1.442695
        %v4487 = vpow.pop %v4486
        %v4488 = vmul.f32 %v4260, 1.442695
        %v4489 = vpow.pop %v4488
        %v4490 = vmul.f32 %v4261, 1.442695
        %v4491 = vpow.pop %v4490
        %v4492 = vmul.f32 %v4262, 1.442695
        %v4493 = vpow.pop %v4492
        %v4494 = vmul.f32 %v4263, 1.442695
        %v4495 = vpow.pop %v4494
        %v4496 = vmul.f32 %v4264, 1.442695
        %v4497 = vpow.pop %v4496
        %v4498 = vmul.f32 %v4265, 1.442695
        %v4499 = vpow.pop %v4498
        %v4500 = vmul.f32 %v4266, 1.442695
        %v4501 = vpow.pop %v4500
        %v4502 = vmul.f32 %v4267, 1.442695
        %v4503 = vpow.pop %v4502
        %v4504 = vmul.f32 %v4268, 1.442695
        %v4505 = vpow.pop %v4504
        %v4506 = vmul.f32 %v4269, 1.442695
        %v4507 = vpow.pop %v4506
        %v4508 = vmul.f32 %v4270, 1.442695
        %v4509 = vpow.pop %v4508
        %v4510 = vmul.f32 %v4271, 1.442695
        %v4511 = vpow.pop %v4510
        %v4512 = vmul.f32 %v4272, 1.442695
        %v4513 = vpow.pop %v4512
        %v4514 = vmul.f32 %v4273, 1.442695
        %v4515 = vpow.pop %v4514
        %v4516 = vmul.f32 %v4274, 1.442695
        %v4517 = vpow.pop %v4516
        %v4518 = vmul.f32 %v4275, 1.442695
        %v4519 = vpow.pop %v4518
        %v4520 = vmul.f32 %v4276, 1.442695
        %v4521 = vpow.pop %v4520
        %v4522 = vmul.f32 %v4277, 1.442695
        %v4523 = vpow.pop %v4522
        %v4524 = vmul.f32 %v4278, 1.442695
        %v4525 = vpow.pop %v4524
        %v4526 = vmul.f32 %v4279, 1.442695
        %v4527 = vpow.pop %v4526
        %v4528 = vmul.f32 %v4280, 1.442695
        %v4529 = vpow.pop %v4528
        %v4530 = vmul.f32 %v4281, 1.442695
        %v4531 = vpow.pop %v4530
        %v4532 = vmul.f32 %v4282, 1.442695
        %v4533 = vpow.pop %v4532
        %v4534 = vmul.f32 %v4283, 1.442695
        %v4535 = vpow.pop %v4534
        %v4536 = vmul.f32 %v4284, 1.442695
        %v4537 = vpow.pop %v4536
        %v4538 = vmul.f32 %v4285, 1.442695
        %v4539 = vpow.pop %v4538
        %v4540 = vmul.f32 %v4286, 1.442695
        %v4541 = vpow.pop %v4540
        %v4542 = vmul.f32 %v4287, 1.442695
        %v4543 = vpow.pop %v4542
        %v4544 = vmul.f32 %v3904, %v4289
        %v4545 = vmul.f32 %v3905, %v4291
        %v4546 = vmul.f32 %v3906, %v4293
        %v4547 = vmul.f32 %v3907, %v4295
        %v4548 = vmul.f32 %v3908, %v4297
        %v4549 = vmul.f32 %v3909, %v4299
        %v4550 = vmul.f32 %v3910, %v4301
        %v4551 = vmul.f32 %v3911, %v4303
        %v4552 = vmul.f32 %v3912, %v4305
        %v4553 = vmul.f32 %v3913, %v4307
        %v4554 = vmul.f32 %v3914, %v4309
        %v4555 = vmul.f32 %v3915, %v4311
        %v4556 = vmul.f32 %v3916, %v4313
        %v4557 = vmul.f32 %v3917, %v4315
        %v4558 = vmul.f32 %v3918, %v4317
        %v4559 = vmul.f32 %v3919, %v4319
        %v4560 = vmul.f32 %v3920, %v4321
        %v4561 = vmul.f32 %v3921, %v4323
        %v4562 = vmul.f32 %v3922, %v4325
        %v4563 = vmul.f32 %v3923, %v4327
        %v4564 = vmul.f32 %v3924, %v4329
        %v4565 = vmul.f32 %v3925, %v4331
        %v4566 = vmul.f32 %v3926, %v4333
        %v4567 = vmul.f32 %v3927, %v4335
        %v4568 = vmul.f32 %v3928, %v4337
        %v4569 = vmul.f32 %v3929, %v4339
        %v4570 = vmul.f32 %v3930, %v4341
        %v4571 = vmul.f32 %v3931, %v4343
        %v4572 = vmul.f32 %v3932, %v4345
        %v4573 = vmul.f32 %v3933, %v4347
        %v4574 = vmul.f32 %v3934, %v4349
        %v4575 = vmul.f32 %v3935, %v4351
        %v4576 = vmul.f32 %v3936, %v4353
        %v4577 = vmul.f32 %v3937, %v4355
        %v4578 = vmul.f32 %v3938, %v4357
        %v4579 = vmul.f32 %v3939, %v4359
        %v4580 = vmul.f32 %v3940, %v4361
        %v4581 = vmul.f32 %v3941, %v4363
        %v4582 = vmul.f32 %v3942, %v4365
        %v4583 = vmul.f32 %v3943, %v4367
        %v4584 = vmul.f32 %v3944, %v4369
        %v4585 = vmul.f32 %v3945, %v4371
        %v4586 = vmul.f32 %v3946, %v4373
        %v4587 = vmul.f32 %v3947, %v4375
        %v4588 = vmul.f32 %v3948, %v4377
        %v4589 = vmul.f32 %v3949, %v4379
        %v4590 = vmul.f32 %v3950, %v4381
        %v4591 = vmul.f32 %v3951, %v4383
        %v4592 = vmul.f32 %v3952, %v4385
        %v4593 = vmul.f32 %v3953, %v4387
        %v4594 = vmul.f32 %v3954, %v4389
        %v4595 = vmul.f32 %v3955, %v4391
        %v4596 = vmul.f32 %v3956, %v4393
        %v4597 = vmul.f32 %v3957, %v4395
        %v4598 = vmul.f32 %v3958, %v4397
        %v4599 = vmul.f32 %v3959, %v4399
        %v4600 = vmul.f32 %v3960, %v4401
        %v4601 = vmul.f32 %v3961, %v4403
        %v4602 = vmul.f32 %v3962, %v4405
        %v4603 = vmul.f32 %v3963, %v4407
        %v4604 = vmul.f32 %v3964, %v4409
        %v4605 = vmul.f32 %v3965, %v4411
        %v4606 = vmul.f32 %v3966, %v4413
        %v4607 = vmul.f32 %v3967, %v4415
        %v4608 = vmul.f32 %v3968, %v4417
        %v4609 = vmul.f32 %v3969, %v4419
        %v4610 = vmul.f32 %v3970, %v4421
        %v4611 = vmul.f32 %v3971, %v4423
        %v4612 = vmul.f32 %v3972, %v4425
        %v4613 = vmul.f32 %v3973, %v4427
        %v4614 = vmul.f32 %v3974, %v4429
        %v4615 = vmul.f32 %v3975, %v4431
        %v4616 = vmul.f32 %v3976, %v4433
        %v4617 = vmul.f32 %v3977, %v4435
        %v4618 = vmul.f32 %v3978, %v4437
        %v4619 = vmul.f32 %v3979, %v4439
        %v4620 = vmul.f32 %v3980, %v4441
        %v4621 = vmul.f32 %v3981, %v4443
        %v4622 = vmul.f32 %v3982, %v4445
        %v4623 = vmul.f32 %v3983, %v4447
        %v4624 = vmul.f32 %v3984, %v4449
        %v4625 = vmul.f32 %v3985, %v4451
        %v4626 = vmul.f32 %v3986, %v4453
        %v4627 = vmul.f32 %v3987, %v4455
        %v4628 = vmul.f32 %v3988, %v4457
        %v4629 = vmul.f32 %v3989, %v4459
        %v4630 = vmul.f32 %v3990, %v4461
        %v4631 = vmul.f32 %v3991, %v4463
        %v4632 = vmul.f32 %v3992, %v4465
        %v4633 = vmul.f32 %v3993, %v4467
        %v4634 = vmul.f32 %v3994, %v4469
        %v4635 = vmul.f32 %v3995, %v4471
        %v4636 = vmul.f32 %v3996, %v4473
        %v4637 = vmul.f32 %v3997, %v4475
        %v4638 = vmul.f32 %v3998, %v4477
        %v4639 = vmul.f32 %v3999, %v4479
        %v4640 = vmul.f32 %v4000, %v4481
        %v4641 = vmul.f32 %v4001, %v4483
        %v4642 = vmul.f32 %v4002, %v4485
        %v4643 = vmul.f32 %v4003, %v4487
        %v4644 = vmul.f32 %v4004, %v4489
        %v4645 = vmul.f32 %v4005, %v4491
        %v4646 = vmul.f32 %v4006, %v4493
        %v4647 = vmul.f32 %v4007, %v4495
        %v4648 = vmul.f32 %v4008, %v4497
        %v4649 = vmul.f32 %v4009, %v4499
        %v4650 = vmul.f32 %v4010, %v4501
        %v4651 = vmul.f32 %v4011, %v4503
        %v4652 = vmul.f32 %v4012, %v4505
        %v4653 = vmul.f32 %v4013, %v4507
        %v4654 = vmul.f32 %v4014, %v4509
        %v4655 = vmul.f32 %v4015, %v4511
        %v4656 = vmul.f32 %v4016, %v4513
        %v4657 = vmul.f32 %v4017, %v4515
        %v4658 = vmul.f32 %v4018, %v4517
        %v4659 = vmul.f32 %v4019, %v4519
        %v4660 = vmul.f32 %v4020, %v4521
        %v4661 = vmul.f32 %v4021, %v4523
        %v4662 = vmul.f32 %v4022, %v4525
        %v4663 = vmul.f32 %v4023, %v4527
        %v4664 = vmul.f32 %v4024, %v4529
        %v4665 = vmul.f32 %v4025, %v4531
        %v4666 = vmul.f32 %v4026, %v4533
        %v4667 = vmul.f32 %v4027, %v4535
        %v4668 = vmul.f32 %v4028, %v4537
        %v4669 = vmul.f32 %v4029, %v4539
        %v4670 = vmul.f32 %v4030, %v4541
        %v4671 = vmul.f32 %v4031, %v4543
        %v4672 = vsub.f32 1.0, %v4544
        %v4673 = vsub.f32 1.0, %v4545
        %v4674 = vsub.f32 1.0, %v4546
        %v4675 = vsub.f32 1.0, %v4547
        %v4676 = vsub.f32 1.0, %v4548
        %v4677 = vsub.f32 1.0, %v4549
        %v4678 = vsub.f32 1.0, %v4550
        %v4679 = vsub.f32 1.0, %v4551
        %v4680 = vsub.f32 1.0, %v4552
        %v4681 = vsub.f32 1.0, %v4553
        %v4682 = vsub.f32 1.0, %v4554
        %v4683 = vsub.f32 1.0, %v4555
        %v4684 = vsub.f32 1.0, %v4556
        %v4685 = vsub.f32 1.0, %v4557
        %v4686 = vsub.f32 1.0, %v4558
        %v4687 = vsub.f32 1.0, %v4559
        %v4688 = vsub.f32 1.0, %v4560
        %v4689 = vsub.f32 1.0, %v4561
        %v4690 = vsub.f32 1.0, %v4562
        %v4691 = vsub.f32 1.0, %v4563
        %v4692 = vsub.f32 1.0, %v4564
        %v4693 = vsub.f32 1.0, %v4565
        %v4694 = vsub.f32 1.0, %v4566
        %v4695 = vsub.f32 1.0, %v4567
        %v4696 = vsub.f32 1.0, %v4568
        %v4697 = vsub.f32 1.0, %v4569
        %v4698 = vsub.f32 1.0, %v4570
        %v4699 = vsub.f32 1.0, %v4571
        %v4700 = vsub.f32 1.0, %v4572
        %v4701 = vsub.f32 1.0, %v4573
        %v4702 = vsub.f32 1.0, %v4574
        %v4703 = vsub.f32 1.0, %v4575
        %v4704 = vsub.f32 1.0, %v4576
        %v4705 = vsub.f32 1.0, %v4577
        %v4706 = vsub.f32 1.0, %v4578
        %v4707 = vsub.f32 1.0, %v4579
        %v4708 = vsub.f32 1.0, %v4580
        %v4709 = vsub.f32 1.0, %v4581
        %v4710 = vsub.f32 1.0, %v4582
        %v4711 = vsub.f32 1.0, %v4583
        %v4712 = vsub.f32 1.0, %v4584
        %v4713 = vsub.f32 1.0, %v4585
        %v4714 = vsub.f32 1.0, %v4586
        %v4715 = vsub.f32 1.0, %v4587
        %v4716 = vsub.f32 1.0, %v4588
        %v4717 = vsub.f32 1.0, %v4589
        %v4718 = vsub.f32 1.0, %v4590
        %v4719 = vsub.f32 1.0, %v4591
        %v4720 = vsub.f32 1.0, %v4592
        %v4721 = vsub.f32 1.0, %v4593
        %v4722 = vsub.f32 1.0, %v4594
        %v4723 = vsub.f32 1.0, %v4595
        %v4724 = vsub.f32 1.0, %v4596
        %v4725 = vsub.f32 1.0, %v4597
        %v4726 = vsub.f32 1.0, %v4598
        %v4727 = vsub.f32 1.0, %v4599
        %v4728 = vsub.f32 1.0, %v4600
        %v4729 = vsub.f32 1.0, %v4601
        %v4730 = vsub.f32 1.0, %v4602
        %v4731 = vsub.f32 1.0, %v4603
        %v4732 = vsub.f32 1.0, %v4604
        %v4733 = vsub.f32 1.0, %v4605
        %v4734 = vsub.f32 1.0, %v4606
        %v4735 = vsub.f32 1.0, %v4607
        %v4736 = vsub.f32 1.0, %v4608
        %v4737 = vsub.f32 1.0, %v4609
        %v4738 = vsub.f32 1.0, %v4610
        %v4739 = vsub.f32 1.0, %v4611
        %v4740 = vsub.f32 1.0, %v4612
        %v4741 = vsub.f32 1.0, %v4613
        %v4742 = vsub.f32 1.0, %v4614
        %v4743 = vsub.f32 1.0, %v4615
        %v4744 = vsub.f32 1.0, %v4616
        %v4745 = vsub.f32 1.0, %v4617
        %v4746 = vsub.f32 1.0, %v4618
        %v4747 = vsub.f32 1.0, %v4619
        %v4748 = vsub.f32 1.0, %v4620
        %v4749 = vsub.f32 1.0, %v4621
        %v4750 = vsub.f32 1.0, %v4622
        %v4751 = vsub.f32 1.0, %v4623
        %v4752 = vsub.f32 1.0, %v4624
        %v4753 = vsub.f32 1.0, %v4625
        %v4754 = vsub.f32 1.0, %v4626
        %v4755 = vsub.f32 1.0, %v4627
        %v4756 = vsub.f32 1.0, %v4628
        %v4757 = vsub.f32 1.0, %v4629
        %v4758 = vsub.f32 1.0, %v4630
        %v4759 = vsub.f32 1.0, %v4631
        %v4760 = vsub.f32 1.0, %v4632
        %v4761 = vsub.f32 1.0, %v4633
        %v4762 = vsub.f32 1.0, %v4634
        %v4763 = vsub.f32 1.0, %v4635
        %v4764 = vsub.f32 1.0, %v4636
        %v4765 = vsub.f32 1.0, %v4637
        %v4766 = vsub.f32 1.0, %v4638
        %v4767 = vsub.f32 1.0, %v4639
        %v4768 = vsub.f32 1.0, %v4640
        %v4769 = vsub.f32 1.0, %v4641
        %v4770 = vsub.f32 1.0, %v4642
        %v4771 = vsub.f32 1.0, %v4643
        %v4772 = vsub.f32 1.0, %v4644
        %v4773 = vsub.f32 1.0, %v4645
        %v4774 = vsub.f32 1.0, %v4646
        %v4775 = vsub.f32 1.0, %v4647
        %v4776 = vsub.f32 1.0, %v4648
        %v4777 = vsub.f32 1.0, %v4649
        %v4778 = vsub.f32 1.0, %v4650
        %v4779 = vsub.f32 1.0, %v4651
        %v4780 = vsub.f32 1.0, %v4652
        %v4781 = vsub.f32 1.0, %v4653
        %v4782 = vsub.f32 1.0, %v4654
        %v4783 = vsub.f32 1.0, %v4655
        %v4784 = vsub.f32 1.0, %v4656
        %v4785 = vsub.f32 1.0, %v4657
        %v4786 = vsub.f32 1.0, %v4658
        %v4787 = vsub.f32 1.0, %v4659
        %v4788 = vsub.f32 1.0, %v4660
        %v4789 = vsub.f32 1.0, %v4661
        %v4790 = vsub.f32 1.0, %v4662
        %v4791 = vsub.f32 1.0, %v4663
        %v4792 = vsub.f32 1.0, %v4664
        %v4793 = vsub.f32 1.0, %v4665
        %v4794 = vsub.f32 1.0, %v4666
        %v4795 = vsub.f32 1.0, %v4667
        %v4796 = vsub.f32 1.0, %v4668
        %v4797 = vsub.f32 1.0, %v4669
        %v4798 = vsub.f32 1.0, %v4670
        %v4799 = vsub.f32 1.0, %v4671
        %vm4800 = vcmp.ge.f32.partialorder %v2112, 0.0
        %vm4801 = vcmp.ge.f32.partialorder %v2113, 0.0
        %vm4802 = vcmp.ge.f32.partialorder %v2114, 0.0
        %vm4803 = vcmp.ge.f32.partialorder %v2115, 0.0
        %vm4804 = vcmp.ge.f32.partialorder %v2116, 0.0
        %vm4805 = vcmp.ge.f32.partialorder %v2117, 0.0
        %vm4806 = vcmp.ge.f32.partialorder %v2118, 0.0
        %vm4807 = vcmp.ge.f32.partialorder %v2119, 0.0
        %vm4808 = vcmp.ge.f32.partialorder %v2120, 0.0
        %vm4809 = vcmp.ge.f32.partialorder %v2121, 0.0
        %vm4810 = vcmp.ge.f32.partialorder %v2122, 0.0
        %vm4811 = vcmp.ge.f32.partialorder %v2123, 0.0
        %vm4812 = vcmp.ge.f32.partialorder %v2124, 0.0
        %vm4813 = vcmp.ge.f32.partialorder %v2125, 0.0
        %vm4814 = vcmp.ge.f32.partialorder %v2126, 0.0
        %vm4815 = vcmp.ge.f32.partialorder %v2127, 0.0
        %vm4816 = vcmp.ge.f32.partialorder %v2128, 0.0
        %vm4817 = vcmp.ge.f32.partialorder %v2129, 0.0
        %vm4818 = vcmp.ge.f32.partialorder %v2130, 0.0
        %vm4819 = vcmp.ge.f32.partialorder %v2131, 0.0
        %vm4820 = vcmp.ge.f32.partialorder %v2132, 0.0
        %vm4821 = vcmp.ge.f32.partialorder %v2133, 0.0
        %vm4822 = vcmp.ge.f32.partialorder %v2134, 0.0
        %vm4823 = vcmp.ge.f32.partialorder %v2135, 0.0
        %vm4824 = vcmp.ge.f32.partialorder %v2136, 0.0
        %vm4825 = vcmp.ge.f32.partialorder %v2137, 0.0
        %vm4826 = vcmp.ge.f32.partialorder %v2138, 0.0
        %vm4827 = vcmp.ge.f32.partialorder %v2139, 0.0
        %vm4828 = vcmp.ge.f32.partialorder %v2140, 0.0
        %vm4829 = vcmp.ge.f32.partialorder %v2141, 0.0
        %vm4830 = vcmp.ge.f32.partialorder %v2142, 0.0
        %vm4831 = vcmp.ge.f32.partialorder %v2143, 0.0
        %vm4832 = vcmp.ge.f32.partialorder %v2144, 0.0
        %vm4833 = vcmp.ge.f32.partialorder %v2145, 0.0
        %vm4834 = vcmp.ge.f32.partialorder %v2146, 0.0
        %vm4835 = vcmp.ge.f32.partialorder %v2147, 0.0
        %vm4836 = vcmp.ge.f32.partialorder %v2148, 0.0
        %vm4837 = vcmp.ge.f32.partialorder %v2149, 0.0
        %vm4838 = vcmp.ge.f32.partialorder %v2150, 0.0
        %vm4839 = vcmp.ge.f32.partialorder %v2151, 0.0
        %vm4840 = vcmp.ge.f32.partialorder %v2152, 0.0
        %vm4841 = vcmp.ge.f32.partialorder %v2153, 0.0
        %vm4842 = vcmp.ge.f32.partialorder %v2154, 0.0
        %vm4843 = vcmp.ge.f32.partialorder %v2155, 0.0
        %vm4844 = vcmp.ge.f32.partialorder %v2156, 0.0
        %vm4845 = vcmp.ge.f32.partialorder %v2157, 0.0
        %vm4846 = vcmp.ge.f32.partialorder %v2158, 0.0
        %vm4847 = vcmp.ge.f32.partialorder %v2159, 0.0
        %vm4848 = vcmp.ge.f32.partialorder %v2160, 0.0
        %vm4849 = vcmp.ge.f32.partialorder %v2161, 0.0
        %vm4850 = vcmp.ge.f32.partialorder %v2162, 0.0
        %vm4851 = vcmp.ge.f32.partialorder %v2163, 0.0
        %vm4852 = vcmp.ge.f32.partialorder %v2164, 0.0
        %vm4853 = vcmp.ge.f32.partialorder %v2165, 0.0
        %vm4854 = vcmp.ge.f32.partialorder %v2166, 0.0
        %vm4855 = vcmp.ge.f32.partialorder %v2167, 0.0
        %vm4856 = vcmp.ge.f32.partialorder %v2168, 0.0
        %vm4857 = vcmp.ge.f32.partialorder %v2169, 0.0
        %vm4858 = vcmp.ge.f32.partialorder %v2170, 0.0
        %vm4859 = vcmp.ge.f32.partialorder %v2171, 0.0
        %vm4860 = vcmp.ge.f32.partialorder %v2172, 0.0
        %vm4861 = vcmp.ge.f32.partialorder %v2173, 0.0
        %vm4862 = vcmp.ge.f32.partialorder %v2174, 0.0
        %vm4863 = vcmp.ge.f32.partialorder %v2175, 0.0
        %vm4864 = vcmp.ge.f32.partialorder %v2176, 0.0
        %vm4865 = vcmp.ge.f32.partialorder %v2177, 0.0
        %vm4866 = vcmp.ge.f32.partialorder %v2178, 0.0
        %vm4867 = vcmp.ge.f32.partialorder %v2179, 0.0
        %vm4868 = vcmp.ge.f32.partialorder %v2180, 0.0
        %vm4869 = vcmp.ge.f32.partialorder %v2181, 0.0
        %vm4870 = vcmp.ge.f32.partialorder %v2182, 0.0
        %vm4871 = vcmp.ge.f32.partialorder %v2183, 0.0
        %vm4872 = vcmp.ge.f32.partialorder %v2184, 0.0
        %vm4873 = vcmp.ge.f32.partialorder %v2185, 0.0
        %vm4874 = vcmp.ge.f32.partialorder %v2186, 0.0
        %vm4875 = vcmp.ge.f32.partialorder %v2187, 0.0
        %vm4876 = vcmp.ge.f32.partialorder %v2188, 0.0
        %vm4877 = vcmp.ge.f32.partialorder %v2189, 0.0
        %vm4878 = vcmp.ge.f32.partialorder %v2190, 0.0
        %vm4879 = vcmp.ge.f32.partialorder %v2191, 0.0
        %vm4880 = vcmp.ge.f32.partialorder %v2192, 0.0
        %vm4881 = vcmp.ge.f32.partialorder %v2193, 0.0
        %vm4882 = vcmp.ge.f32.partialorder %v2194, 0.0
        %vm4883 = vcmp.ge.f32.partialorder %v2195, 0.0
        %vm4884 = vcmp.ge.f32.partialorder %v2196, 0.0
        %vm4885 = vcmp.ge.f32.partialorder %v2197, 0.0
        %vm4886 = vcmp.ge.f32.partialorder %v2198, 0.0
        %vm4887 = vcmp.ge.f32.partialorder %v2199, 0.0
        %vm4888 = vcmp.ge.f32.partialorder %v2200, 0.0
        %vm4889 = vcmp.ge.f32.partialorder %v2201, 0.0
        %vm4890 = vcmp.ge.f32.partialorder %v2202, 0.0
        %vm4891 = vcmp.ge.f32.partialorder %v2203, 0.0
        %vm4892 = vcmp.ge.f32.partialorder %v2204, 0.0
        %vm4893 = vcmp.ge.f32.partialorder %v2205, 0.0
        %vm4894 = vcmp.ge.f32.partialorder %v2206, 0.0
        %vm4895 = vcmp.ge.f32.partialorder %v2207, 0.0
        %vm4896 = vcmp.ge.f32.partialorder %v2208, 0.0
        %vm4897 = vcmp.ge.f32.partialorder %v2209, 0.0
        %vm4898 = vcmp.ge.f32.partialorder %v2210, 0.0
        %vm4899 = vcmp.ge.f32.partialorder %v2211, 0.0
        %vm4900 = vcmp.ge.f32.partialorder %v2212, 0.0
        %vm4901 = vcmp.ge.f32.partialorder %v2213, 0.0
        %vm4902 = vcmp.ge.f32.partialorder %v2214, 0.0
        %vm4903 = vcmp.ge.f32.partialorder %v2215, 0.0
        %vm4904 = vcmp.ge.f32.partialorder %v2216, 0.0
        %vm4905 = vcmp.ge.f32.partialorder %v2217, 0.0
        %vm4906 = vcmp.ge.f32.partialorder %v2218, 0.0
        %vm4907 = vcmp.ge.f32.partialorder %v2219, 0.0
        %vm4908 = vcmp.ge.f32.partialorder %v2220, 0.0
        %vm4909 = vcmp.ge.f32.partialorder %v2221, 0.0
        %vm4910 = vcmp.ge.f32.partialorder %v2222, 0.0
        %vm4911 = vcmp.ge.f32.partialorder %v2223, 0.0
        %vm4912 = vcmp.ge.f32.partialorder %v2224, 0.0
        %vm4913 = vcmp.ge.f32.partialorder %v2225, 0.0
        %vm4914 = vcmp.ge.f32.partialorder %v2226, 0.0
        %vm4915 = vcmp.ge.f32.partialorder %v2227, 0.0
        %vm4916 = vcmp.ge.f32.partialorder %v2228, 0.0
        %vm4917 = vcmp.ge.f32.partialorder %v2229, 0.0
        %vm4918 = vcmp.ge.f32.partialorder %v2230, 0.0
        %vm4919 = vcmp.ge.f32.partialorder %v2231, 0.0
        %vm4920 = vcmp.ge.f32.partialorder %v2232, 0.0
        %vm4921 = vcmp.ge.f32.partialorder %v2233, 0.0
        %vm4922 = vcmp.ge.f32.partialorder %v2234, 0.0
        %vm4923 = vcmp.ge.f32.partialorder %v2235, 0.0
        %vm4924 = vcmp.ge.f32.partialorder %v2236, 0.0
        %vm4925 = vcmp.ge.f32.partialorder %v2237, 0.0
        %vm4926 = vcmp.ge.f32.partialorder %v2238, 0.0
        %vm4927 = vcmp.ge.f32.partialorder %v2239, 0.0
        %v4928 = vsub.f32 0.0, %v4672
        %v4929 = vsub.f32 0.0, %v4673
        %v4930 = vsub.f32 0.0, %v4674
        %v4931 = vsub.f32 0.0, %v4675
        %v4932 = vsub.f32 0.0, %v4676
        %v4933 = vsub.f32 0.0, %v4677
        %v4934 = vsub.f32 0.0, %v4678
        %v4935 = vsub.f32 0.0, %v4679
        %v4936 = vsub.f32 0.0, %v4680
        %v4937 = vsub.f32 0.0, %v4681
        %v4938 = vsub.f32 0.0, %v4682
        %v4939 = vsub.f32 0.0, %v4683
        %v4940 = vsub.f32 0.0, %v4684
        %v4941 = vsub.f32 0.0, %v4685
        %v4942 = vsub.f32 0.0, %v4686
        %v4943 = vsub.f32 0.0, %v4687
        %v4944 = vsub.f32 0.0, %v4688
        %v4945 = vsub.f32 0.0, %v4689
        %v4946 = vsub.f32 0.0, %v4690
        %v4947 = vsub.f32 0.0, %v4691
        %v4948 = vsub.f32 0.0, %v4692
        %v4949 = vsub.f32 0.0, %v4693
        %v4950 = vsub.f32 0.0, %v4694
        %v4951 = vsub.f32 0.0, %v4695
        %v4952 = vsub.f32 0.0, %v4696
        %v4953 = vsub.f32 0.0, %v4697
        %v4954 = vsub.f32 0.0, %v4698
        %v4955 = vsub.f32 0.0, %v4699
        %v4956 = vsub.f32 0.0, %v4700
        %v4957 = vsub.f32 0.0, %v4701
        %v4958 = vsub.f32 0.0, %v4702
        %v4959 = vsub.f32 0.0, %v4703
        %v4960 = vsub.f32 0.0, %v4704
        %v4961 = vsub.f32 0.0, %v4705
        %v4962 = vsub.f32 0.0, %v4706
        %v4963 = vsub.f32 0.0, %v4707
        %v4964 = vsub.f32 0.0, %v4708
        %v4965 = vsub.f32 0.0, %v4709
        %v4966 = vsub.f32 0.0, %v4710
        %v4967 = vsub.f32 0.0, %v4711
        %v4968 = vsub.f32 0.0, %v4712
        %v4969 = vsub.f32 0.0, %v4713
        %v4970 = vsub.f32 0.0, %v4714
        %v4971 = vsub.f32 0.0, %v4715
        %v4972 = vsub.f32 0.0, %v4716
        %v4973 = vsub.f32 0.0, %v4717
        %v4974 = vsub.f32 0.0, %v4718
        %v4975 = vsub.f32 0.0, %v4719
        %v4976 = vsub.f32 0.0, %v4720
        %v4977 = vsub.f32 0.0, %v4721
        %v4978 = vsub.f32 0.0, %v4722
        %v4979 = vsub.f32 0.0, %v4723
        %v4980 = vsub.f32 0.0, %v4724
        %v4981 = vsub.f32 0.0, %v4725
        %v4982 = vsub.f32 0.0, %v4726
        %v4983 = vsub.f32 0.0, %v4727
        %v4984 = vsub.f32 0.0, %v4728
        %v4985 = vsub.f32 0.0, %v4729
        %v4986 = vsub.f32 0.0, %v4730
        %v4987 = vsub.f32 0.0, %v4731
        %v4988 = vsub.f32 0.0, %v4732
        %v4989 = vsub.f32 0.0, %v4733
        %v4990 = vsub.f32 0.0, %v4734
        %v4991 = vsub.f32 0.0, %v4735
        %v4992 = vsub.f32 0.0, %v4736
        %v4993 = vsub.f32 0.0, %v4737
        %v4994 = vsub.f32 0.0, %v4738
        %v4995 = vsub.f32 0.0, %v4739
        %v4996 = vsub.f32 0.0, %v4740
        %v4997 = vsub.f32 0.0, %v4741
        %v4998 = vsub.f32 0.0, %v4742
        %v4999 = vsub.f32 0.0, %v4743
        %v5000 = vsub.f32 0.0, %v4744
        %v5001 = vsub.f32 0.0, %v4745
        %v5002 = vsub.f32 0.0, %v4746
        %v5003 = vsub.f32 0.0, %v4747
        %v5004 = vsub.f32 0.0, %v4748
        %v5005 = vsub.f32 0.0, %v4749
        %v5006 = vsub.f32 0.0, %v4750
        %v5007 = vsub.f32 0.0, %v4751
        %v5008 = vsub.f32 0.0, %v4752
        %v5009 = vsub.f32 0.0, %v4753
        %v5010 = vsub.f32 0.0, %v4754
        %v5011 = vsub.f32 0.0, %v4755
        %v5012 = vsub.f32 0.0, %v4756
        %v5013 = vsub.f32 0.0, %v4757
        %v5014 = vsub.f32 0.0, %v4758
        %v5015 = vsub.f32 0.0, %v4759
        %v5016 = vsub.f32 0.0, %v4760
        %v5017 = vsub.f32 0.0, %v4761
        %v5018 = vsub.f32 0.0, %v4762
        %v5019 = vsub.f32 0.0, %v4763
        %v5020 = vsub.f32 0.0, %v4764
        %v5021 = vsub.f32 0.0, %v4765
        %v5022 = vsub.f32 0.0, %v4766
        %v5023 = vsub.f32 0.0, %v4767
        %v5024 = vsub.f32 0.0, %v4768
        %v5025 = vsub.f32 0.0, %v4769
        %v5026 = vsub.f32 0.0, %v4770
        %v5027 = vsub.f32 0.0, %v4771
        %v5028 = vsub.f32 0.0, %v4772
        %v5029 = vsub.f32 0.0, %v4773
        %v5030 = vsub.f32 0.0, %v4774
        %v5031 = vsub.f32 0.0, %v4775
        %v5032 = vsub.f32 0.0, %v4776
        %v5033 = vsub.f32 0.0, %v4777
        %v5034 = vsub.f32 0.0, %v4778
        %v5035 = vsub.f32 0.0, %v4779
        %v5036 = vsub.f32 0.0, %v4780
        %v5037 = vsub.f32 0.0, %v4781
        %v5038 = vsub.f32 0.0, %v4782
        %v5039 = vsub.f32 0.0, %v4783
        %v5040 = vsub.f32 0.0, %v4784
        %v5041 = vsub.f32 0.0, %v4785
        %v5042 = vsub.f32 0.0, %v4786
        %v5043 = vsub.f32 0.0, %v4787
        %v5044 = vsub.f32 0.0, %v4788
        %v5045 = vsub.f32 0.0, %v4789
        %v5046 = vsub.f32 0.0, %v4790
        %v5047 = vsub.f32 0.0, %v4791
        %v5048 = vsub.f32 0.0, %v4792
        %v5049 = vsub.f32 0.0, %v4793
        %v5050 = vsub.f32 0.0, %v4794
        %v5051 = vsub.f32 0.0, %v4795
        %v5052 = vsub.f32 0.0, %v4796
        %v5053 = vsub.f32 0.0, %v4797
        %v5054 = vsub.f32 0.0, %v4798
        %v5055 = vsub.f32 0.0, %v4799
        %v5056 = vsel %vm4800, %v4672, %v4928
        %v5057 = vsel %vm4801, %v4673, %v4929
        %v5058 = vsel %vm4802, %v4674, %v4930
        %v5059 = vsel %vm4803, %v4675, %v4931
        %v5060 = vsel %vm4804, %v4676, %v4932
        %v5061 = vsel %vm4805, %v4677, %v4933
        %v5062 = vsel %vm4806, %v4678, %v4934
        %v5063 = vsel %vm4807, %v4679, %v4935
        %v5064 = vsel %vm4808, %v4680, %v4936
        %v5065 = vsel %vm4809, %v4681, %v4937
        %v5066 = vsel %vm4810, %v4682, %v4938
        %v5067 = vsel %vm4811, %v4683, %v4939
        %v5068 = vsel %vm4812, %v4684, %v4940
        %v5069 = vsel %vm4813, %v4685, %v4941
        %v5070 = vsel %vm4814, %v4686, %v4942
        %v5071 = vsel %vm4815, %v4687, %v4943
        %v5072 = vsel %vm4816, %v4688, %v4944
        %v5073 = vsel %vm4817, %v4689, %v4945
        %v5074 = vsel %vm4818, %v4690, %v4946
        %v5075 = vsel %vm4819, %v4691, %v4947
        %v5076 = vsel %vm4820, %v4692, %v4948
        %v5077 = vsel %vm4821, %v4693, %v4949
        %v5078 = vsel %vm4822, %v4694, %v4950
        %v5079 = vsel %vm4823, %v4695, %v4951
        %v5080 = vsel %vm4824, %v4696, %v4952
        %v5081 = vsel %vm4825, %v4697, %v4953
        %v5082 = vsel %vm4826, %v4698, %v4954
        %v5083 = vsel %vm4827, %v4699, %v4955
        %v5084 = vsel %vm4828, %v4700, %v4956
        %v5085 = vsel %vm4829, %v4701, %v4957
        %v5086 = vsel %vm4830, %v4702, %v4958
        %v5087 = vsel %vm4831, %v4703, %v4959
        %v5088 = vsel %vm4832, %v4704, %v4960
        %v5089 = vsel %vm4833, %v4705, %v4961
        %v5090 = vsel %vm4834, %v4706, %v4962
        %v5091 = vsel %vm4835, %v4707, %v4963
        %v5092 = vsel %vm4836, %v4708, %v4964
        %v5093 = vsel %vm4837, %v4709, %v4965
        %v5094 = vsel %vm4838, %v4710, %v4966
        %v5095 = vsel %vm4839, %v4711, %v4967
        %v5096 = vsel %vm4840, %v4712, %v4968
        %v5097 = vsel %vm4841, %v4713, %v4969
        %v5098 = vsel %vm4842, %v4714, %v4970
        %v5099 = vsel %vm4843, %v4715, %v4971
        %v5100 = vsel %vm4844, %v4716, %v4972
        %v5101 = vsel %vm4845, %v4717, %v4973
        %v5102 = vsel %vm4846, %v4718, %v4974
        %v5103 = vsel %vm4847, %v4719, %v4975
        %v5104 = vsel %vm4848, %v4720, %v4976
        %v5105 = vsel %vm4849, %v4721, %v4977
        %v5106 = vsel %vm4850, %v4722, %v4978
        %v5107 = vsel %vm4851, %v4723, %v4979
        %v5108 = vsel %vm4852, %v4724, %v4980
        %v5109 = vsel %vm4853, %v4725, %v4981
        %v5110 = vsel %vm4854, %v4726, %v4982
        %v5111 = vsel %vm4855, %v4727, %v4983
        %v5112 = vsel %vm4856, %v4728, %v4984
        %v5113 = vsel %vm4857, %v4729, %v4985
        %v5114 = vsel %vm4858, %v4730, %v4986
        %v5115 = vsel %vm4859, %v4731, %v4987
        %v5116 = vsel %vm4860, %v4732, %v4988
        %v5117 = vsel %vm4861, %v4733, %v4989
        %v5118 = vsel %vm4862, %v4734, %v4990
        %v5119 = vsel %vm4863, %v4735, %v4991
        %v5120 = vsel %vm4864, %v4736, %v4992
        %v5121 = vsel %vm4865, %v4737, %v4993
        %v5122 = vsel %vm4866, %v4738, %v4994
        %v5123 = vsel %vm4867, %v4739, %v4995
        %v5124 = vsel %vm4868, %v4740, %v4996
        %v5125 = vsel %vm4869, %v4741, %v4997
        %v5126 = vsel %vm4870, %v4742, %v4998
        %v5127 = vsel %vm4871, %v4743, %v4999
        %v5128 = vsel %vm4872, %v4744, %v5000
        %v5129 = vsel %vm4873, %v4745, %v5001
        %v5130 = vsel %vm4874, %v4746, %v5002
        %v5131 = vsel %vm4875, %v4747, %v5003
        %v5132 = vsel %vm4876, %v4748, %v5004
        %v5133 = vsel %vm4877, %v4749, %v5005
        %v5134 = vsel %vm4878, %v4750, %v5006
        %v5135 = vsel %vm4879, %v4751, %v5007
        %v5136 = vsel %vm4880, %v4752, %v5008
        %v5137 = vsel %vm4881, %v4753, %v5009
        %v5138 = vsel %vm4882, %v4754, %v5010
        %v5139 = vsel %vm4883, %v4755, %v5011
        %v5140 = vsel %vm4884, %v4756, %v5012
        %v5141 = vsel %vm4885, %v4757, %v5013
        %v5142 = vsel %vm4886, %v4758, %v5014
        %v5143 = vsel %vm4887, %v4759, %v5015
        %v5144 = vsel %vm4888, %v4760, %v5016
        %v5145 = vsel %vm4889, %v4761, %v5017
        %v5146 = vsel %vm4890, %v4762, %v5018
        %v5147 = vsel %vm4891, %v4763, %v5019
        %v5148 = vsel %vm4892, %v4764, %v5020
        %v5149 = vsel %vm4893, %v4765, %v5021
        %v5150 = vsel %vm4894, %v4766, %v5022
        %v5151 = vsel %vm4895, %v4767, %v5023
        %v5152 = vsel %vm4896, %v4768, %v5024
        %v5153 = vsel %vm4897, %v4769, %v5025
        %v5154 = vsel %vm4898, %v4770, %v5026
        %v5155 = vsel %vm4899, %v4771, %v5027
        %v5156 = vsel %vm4900, %v4772, %v5028
        %v5157 = vsel %vm4901, %v4773, %v5029
        %v5158 = vsel %vm4902, %v4774, %v5030
        %v5159 = vsel %vm4903, %v4775, %v5031
        %v5160 = vsel %vm4904, %v4776, %v5032
        %v5161 = vsel %vm4905, %v4777, %v5033
        %v5162 = vsel %vm4906, %v4778, %v5034
        %v5163 = vsel %vm4907, %v4779, %v5035
        %v5164 = vsel %vm4908, %v4780, %v5036
        %v5165 = vsel %vm4909, %v4781, %v5037
        %v5166 = vsel %vm4910, %v4782, %v5038
        %v5167 = vsel %vm4911, %v4783, %v5039
        %v5168 = vsel %vm4912, %v4784, %v5040
        %v5169 = vsel %vm4913, %v4785, %v5041
        %v5170 = vsel %vm4914, %v4786, %v5042
        %v5171 = vsel %vm4915, %v4787, %v5043
        %v5172 = vsel %vm4916, %v4788, %v5044
        %v5173 = vsel %vm4917, %v4789, %v5045
        %v5174 = vsel %vm4918, %v4790, %v5046
        %v5175 = vsel %vm4919, %v4791, %v5047
        %v5176 = vsel %vm4920, %v4792, %v5048
        %v5177 = vsel %vm4921, %v4793, %v5049
        %v5178 = vsel %vm4922, %v4794, %v5050
        %v5179 = vsel %vm4923, %v4795, %v5051
        %v5180 = vsel %vm4924, %v4796, %v5052
        %v5181 = vsel %vm4925, %v4797, %v5053
        %v5182 = vsel %vm4926, %v4798, %v5054
        %v5183 = vsel %vm4927, %v4799, %v5055
        %v5184 = vadd.f32 %v5056, 1.0
        %v5185 = vadd.f32 %v5057, 1.0
        %v5186 = vadd.f32 %v5058, 1.0
        %v5187 = vadd.f32 %v5059, 1.0
        %v5188 = vadd.f32 %v5060, 1.0
        %v5189 = vadd.f32 %v5061, 1.0
        %v5190 = vadd.f32 %v5062, 1.0
        %v5191 = vadd.f32 %v5063, 1.0
        %v5192 = vadd.f32 %v5064, 1.0
        %v5193 = vadd.f32 %v5065, 1.0
        %v5194 = vadd.f32 %v5066, 1.0
        %v5195 = vadd.f32 %v5067, 1.0
        %v5196 = vadd.f32 %v5068, 1.0
        %v5197 = vadd.f32 %v5069, 1.0
        %v5198 = vadd.f32 %v5070, 1.0
        %v5199 = vadd.f32 %v5071, 1.0
        %v5200 = vadd.f32 %v5072, 1.0
        %v5201 = vadd.f32 %v5073, 1.0
        %v5202 = vadd.f32 %v5074, 1.0
        %v5203 = vadd.f32 %v5075, 1.0
        %v5204 = vadd.f32 %v5076, 1.0
        %v5205 = vadd.f32 %v5077, 1.0
        %v5206 = vadd.f32 %v5078, 1.0
        %v5207 = vadd.f32 %v5079, 1.0
        %v5208 = vadd.f32 %v5080, 1.0
        %v5209 = vadd.f32 %v5081, 1.0
        %v5210 = vadd.f32 %v5082, 1.0
        %v5211 = vadd.f32 %v5083, 1.0
        %v5212 = vadd.f32 %v5084, 1.0
        %v5213 = vadd.f32 %v5085, 1.0
        %v5214 = vadd.f32 %v5086, 1.0
        %v5215 = vadd.f32 %v5087, 1.0
        %v5216 = vadd.f32 %v5088, 1.0
        %v5217 = vadd.f32 %v5089, 1.0
        %v5218 = vadd.f32 %v5090, 1.0
        %v5219 = vadd.f32 %v5091, 1.0
        %v5220 = vadd.f32 %v5092, 1.0
        %v5221 = vadd.f32 %v5093, 1.0
        %v5222 = vadd.f32 %v5094, 1.0
        %v5223 = vadd.f32 %v5095, 1.0
        %v5224 = vadd.f32 %v5096, 1.0
        %v5225 = vadd.f32 %v5097, 1.0
        %v5226 = vadd.f32 %v5098, 1.0
        %v5227 = vadd.f32 %v5099, 1.0
        %v5228 = vadd.f32 %v5100, 1.0
        %v5229 = vadd.f32 %v5101, 1.0
        %v5230 = vadd.f32 %v5102, 1.0
        %v5231 = vadd.f32 %v5103, 1.0
        %v5232 = vadd.f32 %v5104, 1.0
        %v5233 = vadd.f32 %v5105, 1.0
        %v5234 = vadd.f32 %v5106, 1.0
        %v5235 = vadd.f32 %v5107, 1.0
        %v5236 = vadd.f32 %v5108, 1.0
        %v5237 = vadd.f32 %v5109, 1.0
        %v5238 = vadd.f32 %v5110, 1.0
        %v5239 = vadd.f32 %v5111, 1.0
        %v5240 = vadd.f32 %v5112, 1.0
        %v5241 = vadd.f32 %v5113, 1.0
        %v5242 = vadd.f32 %v5114, 1.0
        %v5243 = vadd.f32 %v5115, 1.0
        %v5244 = vadd.f32 %v5116, 1.0
        %v5245 = vadd.f32 %v5117, 1.0
        %v5246 = vadd.f32 %v5118, 1.0
        %v5247 = vadd.f32 %v5119, 1.0
        %v5248 = vadd.f32 %v5120, 1.0
        %v5249 = vadd.f32 %v5121, 1.0
        %v5250 = vadd.f32 %v5122, 1.0
        %v5251 = vadd.f32 %v5123, 1.0
        %v5252 = vadd.f32 %v5124, 1.0
        %v5253 = vadd.f32 %v5125, 1.0
        %v5254 = vadd.f32 %v5126, 1.0
        %v5255 = vadd.f32 %v5127, 1.0
        %v5256 = vadd.f32 %v5128, 1.0
        %v5257 = vadd.f32 %v5129, 1.0
        %v5258 = vadd.f32 %v5130, 1.0
        %v5259 = vadd.f32 %v5131, 1.0
        %v5260 = vadd.f32 %v5132, 1.0
        %v5261 = vadd.f32 %v5133, 1.0
        %v5262 = vadd.f32 %v5134, 1.0
        %v5263 = vadd.f32 %v5135, 1.0
        %v5264 = vadd.f32 %v5136, 1.0
        %v5265 = vadd.f32 %v5137, 1.0
        %v5266 = vadd.f32 %v5138, 1.0
        %v5267 = vadd.f32 %v5139, 1.0
        %v5268 = vadd.f32 %v5140, 1.0
        %v5269 = vadd.f32 %v5141, 1.0
        %v5270 = vadd.f32 %v5142, 1.0
        %v5271 = vadd.f32 %v5143, 1.0
        %v5272 = vadd.f32 %v5144, 1.0
        %v5273 = vadd.f32 %v5145, 1.0
        %v5274 = vadd.f32 %v5146, 1.0
        %v5275 = vadd.f32 %v5147, 1.0
        %v5276 = vadd.f32 %v5148, 1.0
        %v5277 = vadd.f32 %v5149, 1.0
        %v5278 = vadd.f32 %v5150, 1.0
        %v5279 = vadd.f32 %v5151, 1.0
        %v5280 = vadd.f32 %v5152, 1.0
        %v5281 = vadd.f32 %v5153, 1.0
        %v5282 = vadd.f32 %v5154, 1.0
        %v5283 = vadd.f32 %v5155, 1.0
        %v5284 = vadd.f32 %v5156, 1.0
        %v5285 = vadd.f32 %v5157, 1.0
        %v5286 = vadd.f32 %v5158, 1.0
        %v5287 = vadd.f32 %v5159, 1.0
        %v5288 = vadd.f32 %v5160, 1.0
        %v5289 = vadd.f32 %v5161, 1.0
        %v5290 = vadd.f32 %v5162, 1.0
        %v5291 = vadd.f32 %v5163, 1.0
        %v5292 = vadd.f32 %v5164, 1.0
        %v5293 = vadd.f32 %v5165, 1.0
        %v5294 = vadd.f32 %v5166, 1.0
        %v5295 = vadd.f32 %v5167, 1.0
        %v5296 = vadd.f32 %v5168, 1.0
        %v5297 = vadd.f32 %v5169, 1.0
        %v5298 = vadd.f32 %v5170, 1.0
        %v5299 = vadd.f32 %v5171, 1.0
        %v5300 = vadd.f32 %v5172, 1.0
        %v5301 = vadd.f32 %v5173, 1.0
        %v5302 = vadd.f32 %v5174, 1.0
        %v5303 = vadd.f32 %v5175, 1.0
        %v5304 = vadd.f32 %v5176, 1.0
        %v5305 = vadd.f32 %v5177, 1.0
        %v5306 = vadd.f32 %v5178, 1.0
        %v5307 = vadd.f32 %v5179, 1.0
        %v5308 = vadd.f32 %v5180, 1.0
        %v5309 = vadd.f32 %v5181, 1.0
        %v5310 = vadd.f32 %v5182, 1.0
        %v5311 = vadd.f32 %v5183, 1.0
        %v5312 = vmul.f32 %v1984, %v5184
        %v5313 = vmul.f32 %v1985, %v5185
        %v5314 = vmul.f32 %v1986, %v5186
        %v5315 = vmul.f32 %v1987, %v5187
        %v5316 = vmul.f32 %v1988, %v5188
        %v5317 = vmul.f32 %v1989, %v5189
        %v5318 = vmul.f32 %v1990, %v5190
        %v5319 = vmul.f32 %v1991, %v5191
        %v5320 = vmul.f32 %v1992, %v5192
        %v5321 = vmul.f32 %v1993, %v5193
        %v5322 = vmul.f32 %v1994, %v5194
        %v5323 = vmul.f32 %v1995, %v5195
        %v5324 = vmul.f32 %v1996, %v5196
        %v5325 = vmul.f32 %v1997, %v5197
        %v5326 = vmul.f32 %v1998, %v5198
        %v5327 = vmul.f32 %v1999, %v5199
        %v5328 = vmul.f32 %v2000, %v5200
        %v5329 = vmul.f32 %v2001, %v5201
        %v5330 = vmul.f32 %v2002, %v5202
        %v5331 = vmul.f32 %v2003, %v5203
        %v5332 = vmul.f32 %v2004, %v5204
        %v5333 = vmul.f32 %v2005, %v5205
        %v5334 = vmul.f32 %v2006, %v5206
        %v5335 = vmul.f32 %v2007, %v5207
        %v5336 = vmul.f32 %v2008, %v5208
        %v5337 = vmul.f32 %v2009, %v5209
        %v5338 = vmul.f32 %v2010, %v5210
        %v5339 = vmul.f32 %v2011, %v5211
        %v5340 = vmul.f32 %v2012, %v5212
        %v5341 = vmul.f32 %v2013, %v5213
        %v5342 = vmul.f32 %v2014, %v5214
        %v5343 = vmul.f32 %v2015, %v5215
        %v5344 = vmul.f32 %v2016, %v5216
        %v5345 = vmul.f32 %v2017, %v5217
        %v5346 = vmul.f32 %v2018, %v5218
        %v5347 = vmul.f32 %v2019, %v5219
        %v5348 = vmul.f32 %v2020, %v5220
        %v5349 = vmul.f32 %v2021, %v5221
        %v5350 = vmul.f32 %v2022, %v5222
        %v5351 = vmul.f32 %v2023, %v5223
        %v5352 = vmul.f32 %v2024, %v5224
        %v5353 = vmul.f32 %v2025, %v5225
        %v5354 = vmul.f32 %v2026, %v5226
        %v5355 = vmul.f32 %v2027, %v5227
        %v5356 = vmul.f32 %v2028, %v5228
        %v5357 = vmul.f32 %v2029, %v5229
        %v5358 = vmul.f32 %v2030, %v5230
        %v5359 = vmul.f32 %v2031, %v5231
        %v5360 = vmul.f32 %v2032, %v5232
        %v5361 = vmul.f32 %v2033, %v5233
        %v5362 = vmul.f32 %v2034, %v5234
        %v5363 = vmul.f32 %v2035, %v5235
        %v5364 = vmul.f32 %v2036, %v5236
        %v5365 = vmul.f32 %v2037, %v5237
        %v5366 = vmul.f32 %v2038, %v5238
        %v5367 = vmul.f32 %v2039, %v5239
        %v5368 = vmul.f32 %v2040, %v5240
        %v5369 = vmul.f32 %v2041, %v5241
        %v5370 = vmul.f32 %v2042, %v5242
        %v5371 = vmul.f32 %v2043, %v5243
        %v5372 = vmul.f32 %v2044, %v5244
        %v5373 = vmul.f32 %v2045, %v5245
        %v5374 = vmul.f32 %v2046, %v5246
        %v5375 = vmul.f32 %v2047, %v5247
        %v5376 = vmul.f32 %v2048, %v5248
        %v5377 = vmul.f32 %v2049, %v5249
        %v5378 = vmul.f32 %v2050, %v5250
        %v5379 = vmul.f32 %v2051, %v5251
        %v5380 = vmul.f32 %v2052, %v5252
        %v5381 = vmul.f32 %v2053, %v5253
        %v5382 = vmul.f32 %v2054, %v5254
        %v5383 = vmul.f32 %v2055, %v5255
        %v5384 = vmul.f32 %v2056, %v5256
        %v5385 = vmul.f32 %v2057, %v5257
        %v5386 = vmul.f32 %v2058, %v5258
        %v5387 = vmul.f32 %v2059, %v5259
        %v5388 = vmul.f32 %v2060, %v5260
        %v5389 = vmul.f32 %v2061, %v5261
        %v5390 = vmul.f32 %v2062, %v5262
        %v5391 = vmul.f32 %v2063, %v5263
        %v5392 = vmul.f32 %v2064, %v5264
        %v5393 = vmul.f32 %v2065, %v5265
        %v5394 = vmul.f32 %v2066, %v5266
        %v5395 = vmul.f32 %v2067, %v5267
        %v5396 = vmul.f32 %v2068, %v5268
        %v5397 = vmul.f32 %v2069, %v5269
        %v5398 = vmul.f32 %v2070, %v5270
        %v5399 = vmul.f32 %v2071, %v5271
        %v5400 = vmul.f32 %v2072, %v5272
        %v5401 = vmul.f32 %v2073, %v5273
        %v5402 = vmul.f32 %v2074, %v5274
        %v5403 = vmul.f32 %v2075, %v5275
        %v5404 = vmul.f32 %v2076, %v5276
        %v5405 = vmul.f32 %v2077, %v5277
        %v5406 = vmul.f32 %v2078, %v5278
        %v5407 = vmul.f32 %v2079, %v5279
        %v5408 = vmul.f32 %v2080, %v5280
        %v5409 = vmul.f32 %v2081, %v5281
        %v5410 = vmul.f32 %v2082, %v5282
        %v5411 = vmul.f32 %v2083, %v5283
        %v5412 = vmul.f32 %v2084, %v5284
        %v5413 = vmul.f32 %v2085, %v5285
        %v5414 = vmul.f32 %v2086, %v5286
        %v5415 = vmul.f32 %v2087, %v5287
        %v5416 = vmul.f32 %v2088, %v5288
        %v5417 = vmul.f32 %v2089, %v5289
        %v5418 = vmul.f32 %v2090, %v5290
        %v5419 = vmul.f32 %v2091, %v5291
        %v5420 = vmul.f32 %v2092, %v5292
        %v5421 = vmul.f32 %v2093, %v5293
        %v5422 = vmul.f32 %v2094, %v5294
        %v5423 = vmul.f32 %v2095, %v5295
        %v5424 = vmul.f32 %v2096, %v5296
        %v5425 = vmul.f32 %v2097, %v5297
        %v5426 = vmul.f32 %v2098, %v5298
        %v5427 = vmul.f32 %v2099, %v5299
        %v5428 = vmul.f32 %v2100, %v5300
        %v5429 = vmul.f32 %v2101, %v5301
        %v5430 = vmul.f32 %v2102, %v5302
        %v5431 = vmul.f32 %v2103, %v5303
        %v5432 = vmul.f32 %v2104, %v5304
        %v5433 = vmul.f32 %v2105, %v5305
        %v5434 = vmul.f32 %v2106, %v5306
        %v5435 = vmul.f32 %v2107, %v5307
        %v5436 = vmul.f32 %v2108, %v5308
        %v5437 = vmul.f32 %v2109, %v5309
        %v5438 = vmul.f32 %v2110, %v5310
        %v5439 = vmul.f32 %v2111, %v5311
        %v5440 = vpack.c.bf16 %v5320, %v5312
        %v5441 = vpack.c.bf16 %v5321, %v5313
        %v5442 = vpack.c.bf16 %v5322, %v5314
        %v5443 = vpack.c.bf16 %v5323, %v5315
        %v5444 = vpack.c.bf16 %v5324, %v5316
        %v5445 = vpack.c.bf16 %v5325, %v5317
        %v5446 = vpack.c.bf16 %v5326, %v5318
        %v5447 = vpack.c.bf16 %v5327, %v5319
        %v5448 = vpack.c.bf16 %v5336, %v5328
        %v5449 = vpack.c.bf16 %v5337, %v5329
        %v5450 = vpack.c.bf16 %v5338, %v5330
        %v5451 = vpack.c.bf16 %v5339, %v5331
        %v5452 = vpack.c.bf16 %v5340, %v5332
        %v5453 = vpack.c.bf16 %v5341, %v5333
        %v5454 = vpack.c.bf16 %v5342, %v5334
        %v5455 = vpack.c.bf16 %v5343, %v5335
        %v5456 = vpack.c.bf16 %v5352, %v5344
        %v5457 = vpack.c.bf16 %v5353, %v5345
        %v5458 = vpack.c.bf16 %v5354, %v5346
        %v5459 = vpack.c.bf16 %v5355, %v5347
        %v5460 = vpack.c.bf16 %v5356, %v5348
        %v5461 = vpack.c.bf16 %v5357, %v5349
        %v5462 = vpack.c.bf16 %v5358, %v5350
        %v5463 = vpack.c.bf16 %v5359, %v5351
        %v5464 = vpack.c.bf16 %v5368, %v5360
        %v5465 = vpack.c.bf16 %v5369, %v5361
        %v5466 = vpack.c.bf16 %v5370, %v5362
        %v5467 = vpack.c.bf16 %v5371, %v5363
        %v5468 = vpack.c.bf16 %v5372, %v5364
        %v5469 = vpack.c.bf16 %v5373, %v5365
        %v5470 = vpack.c.bf16 %v5374, %v5366
        %v5471 = vpack.c.bf16 %v5375, %v5367
        %v5472 = vpack.c.bf16 %v5384, %v5376
        %v5473 = vpack.c.bf16 %v5385, %v5377
        %v5474 = vpack.c.bf16 %v5386, %v5378
        %v5475 = vpack.c.bf16 %v5387, %v5379
        %v5476 = vpack.c.bf16 %v5388, %v5380
        %v5477 = vpack.c.bf16 %v5389, %v5381
        %v5478 = vpack.c.bf16 %v5390, %v5382
        %v5479 = vpack.c.bf16 %v5391, %v5383
        %v5480 = vpack.c.bf16 %v5400, %v5392
        %v5481 = vpack.c.bf16 %v5401, %v5393
        %v5482 = vpack.c.bf16 %v5402, %v5394
        %v5483 = vpack.c.bf16 %v5403, %v5395
        %v5484 = vpack.c.bf16 %v5404, %v5396
        %v5485 = vpack.c.bf16 %v5405, %v5397
        %v5486 = vpack.c.bf16 %v5406, %v5398
        %v5487 = vpack.c.bf16 %v5407, %v5399
        %v5488 = vpack.c.bf16 %v5416, %v5408
        %v5489 = vpack.c.bf16 %v5417, %v5409
        %v5490 = vpack.c.bf16 %v5418, %v5410
        %v5491 = vpack.c.bf16 %v5419, %v5411
        %v5492 = vpack.c.bf16 %v5420, %v5412
        %v5493 = vpack.c.bf16 %v5421, %v5413
        %v5494 = vpack.c.bf16 %v5422, %v5414
        %v5495 = vpack.c.bf16 %v5423, %v5415
        %v5496 = vpack.c.bf16 %v5432, %v5424
        %v5497 = vpack.c.bf16 %v5433, %v5425
        %v5498 = vpack.c.bf16 %v5434, %v5426
        %v5499 = vpack.c.bf16 %v5435, %v5427
        %v5500 = vpack.c.bf16 %v5436, %v5428
        %v5501 = vpack.c.bf16 %v5437, %v5429
        %v5502 = vpack.c.bf16 %v5438, %v5430
        %v5503 = vpack.c.bf16 %v5439, %v5431
        %v5504 = vld [vmem:[#allocation7] sm:$0xff]
        %v5505 = vld [vmem:[#allocation7 + $0x8] sm:$0xff]
        %v5506 = vld [vmem:[#allocation7 + $0x10] sm:$0xff]
        %v5507 = vld [vmem:[#allocation7 + $0x18] sm:$0xff]
        %v5508 = vld [vmem:[#allocation7 + $0x20] sm:$0xff]
        %v5509 = vld [vmem:[#allocation7 + $0x28] sm:$0xff]
        %v5510 = vld [vmem:[#allocation7 + $0x30] sm:$0xff]
        %v5511 = vld [vmem:[#allocation7 + $0x38] sm:$0xff]
        %v5512 = vld [vmem:[#allocation7 + $0x40] sm:$0xff]
        %v5513 = vld [vmem:[#allocation7 + $0x48] sm:$0xff]
        %v5514 = vld [vmem:[#allocation7 + $0x50] sm:$0xff]
        %v5515 = vld [vmem:[#allocation7 + $0x58] sm:$0xff]
        %v5516 = vld [vmem:[#allocation7 + $0x60] sm:$0xff]
        %v5517 = vld [vmem:[#allocation7 + $0x68] sm:$0xff]
        %v5518 = vld [vmem:[#allocation7 + $0x70] sm:$0xff]
        %v5519 = vld [vmem:[#allocation7 + $0x78] sm:$0xff]
        %v5520 = vld [vmem:[#allocation7 + $0x80] sm:$0xff]
        %v5521 = vld [vmem:[#allocation7 + $0x88] sm:$0xff]
        %v5522 = vld [vmem:[#allocation7 + $0x90] sm:$0xff]
        %v5523 = vld [vmem:[#allocation7 + $0x98] sm:$0xff]
        %v5524 = vld [vmem:[#allocation7 + $0xa0] sm:$0xff]
        %v5525 = vld [vmem:[#allocation7 + $0xa8] sm:$0xff]
        %v5526 = vld [vmem:[#allocation7 + $0xb0] sm:$0xff]
        %v5527 = vld [vmem:[#allocation7 + $0xb8] sm:$0xff]
        %v5528 = vld [vmem:[#allocation7 + $0xc0] sm:$0xff]
        %v5529 = vld [vmem:[#allocation7 + $0xc8] sm:$0xff]
        %v5530 = vld [vmem:[#allocation7 + $0xd0] sm:$0xff]
        %v5531 = vld [vmem:[#allocation7 + $0xd8] sm:$0xff]
        %v5532 = vld [vmem:[#allocation7 + $0xe0] sm:$0xff]
        %v5533 = vld [vmem:[#allocation7 + $0xe8] sm:$0xff]
        %v5534 = vld [vmem:[#allocation7 + $0xf0] sm:$0xff]
        %v5535 = vld [vmem:[#allocation7 + $0xf8] sm:$0xff]
        %v5536 = vld [vmem:[#allocation7 + $0x100] sm:$0xff]
        %v5537 = vld [vmem:[#allocation7 + $0x108] sm:$0xff]
        %v5538 = vld [vmem:[#allocation7 + $0x110] sm:$0xff]
        %v5539 = vld [vmem:[#allocation7 + $0x118] sm:$0xff]
        %v5540 = vld [vmem:[#allocation7 + $0x120] sm:$0xff]
        %v5541 = vld [vmem:[#allocation7 + $0x128] sm:$0xff]
        %v5542 = vld [vmem:[#allocation7 + $0x130] sm:$0xff]
        %v5543 = vld [vmem:[#allocation7 + $0x138] sm:$0xff]
        %v5544 = vld [vmem:[#allocation7 + $0x140] sm:$0xff]
        %v5545 = vld [vmem:[#allocation7 + $0x148] sm:$0xff]
        %v5546 = vld [vmem:[#allocation7 + $0x150] sm:$0xff]
        %v5547 = vld [vmem:[#allocation7 + $0x158] sm:$0xff]
        %v5548 = vld [vmem:[#allocation7 + $0x160] sm:$0xff]
        %v5549 = vld [vmem:[#allocation7 + $0x168] sm:$0xff]
        %v5550 = vld [vmem:[#allocation7 + $0x170] sm:$0xff]
        %v5551 = vld [vmem:[#allocation7 + $0x178] sm:$0xff]
        %v5552 = vld [vmem:[#allocation7 + $0x180] sm:$0xff]
        %v5553 = vld [vmem:[#allocation7 + $0x188] sm:$0xff]
        %v5554 = vld [vmem:[#allocation7 + $0x190] sm:$0xff]
        %v5555 = vld [vmem:[#allocation7 + $0x198] sm:$0xff]
        %v5556 = vld [vmem:[#allocation7 + $0x1a0] sm:$0xff]
        %v5557 = vld [vmem:[#allocation7 + $0x1a8] sm:$0xff]
        %v5558 = vld [vmem:[#allocation7 + $0x1b0] sm:$0xff]
        %v5559 = vld [vmem:[#allocation7 + $0x1b8] sm:$0xff]
        %v5560 = vld [vmem:[#allocation7 + $0x1c0] sm:$0xff]
        %v5561 = vld [vmem:[#allocation7 + $0x1c8] sm:$0xff]
        %v5562 = vld [vmem:[#allocation7 + $0x1d0] sm:$0xff]
        %v5563 = vld [vmem:[#allocation7 + $0x1d8] sm:$0xff]
        %v5564 = vld [vmem:[#allocation7 + $0x1e0] sm:$0xff]
        %v5565 = vld [vmem:[#allocation7 + $0x1e8] sm:$0xff]
        %v5566 = vld [vmem:[#allocation7 + $0x1f0] sm:$0xff]
        %v5567 = vld [vmem:[#allocation7 + $0x1f8] sm:$0xff]
        %v5568 = vld [vmem:[#allocation7 + $0x200] sm:$0xff]
        %v5569 = vld [vmem:[#allocation7 + $0x208] sm:$0xff]
        %v5570 = vld [vmem:[#allocation7 + $0x210] sm:$0xff]
        %v5571 = vld [vmem:[#allocation7 + $0x218] sm:$0xff]
        %v5572 = vld [vmem:[#allocation7 + $0x220] sm:$0xff]
        %v5573 = vld [vmem:[#allocation7 + $0x228] sm:$0xff]
        %v5574 = vld [vmem:[#allocation7 + $0x230] sm:$0xff]
        %v5575 = vld [vmem:[#allocation7 + $0x238] sm:$0xff]
        %v5576 = vld [vmem:[#allocation7 + $0x240] sm:$0xff]
        %v5577 = vld [vmem:[#allocation7 + $0x248] sm:$0xff]
        %v5578 = vld [vmem:[#allocation7 + $0x250] sm:$0xff]
        %v5579 = vld [vmem:[#allocation7 + $0x258] sm:$0xff]
        %v5580 = vld [vmem:[#allocation7 + $0x260] sm:$0xff]
        %v5581 = vld [vmem:[#allocation7 + $0x268] sm:$0xff]
        %v5582 = vld [vmem:[#allocation7 + $0x270] sm:$0xff]
        %v5583 = vld [vmem:[#allocation7 + $0x278] sm:$0xff]
        %v5584 = vld [vmem:[#allocation7 + $0x280] sm:$0xff]
        %v5585 = vld [vmem:[#allocation7 + $0x288] sm:$0xff]
        %v5586 = vld [vmem:[#allocation7 + $0x290] sm:$0xff]
        %v5587 = vld [vmem:[#allocation7 + $0x298] sm:$0xff]
        %v5588 = vld [vmem:[#allocation7 + $0x2a0] sm:$0xff]
        %v5589 = vld [vmem:[#allocation7 + $0x2a8] sm:$0xff]
        %v5590 = vld [vmem:[#allocation7 + $0x2b0] sm:$0xff]
        %v5591 = vld [vmem:[#allocation7 + $0x2b8] sm:$0xff]
        %v5592 = vld [vmem:[#allocation7 + $0x2c0] sm:$0xff]
        %v5593 = vld [vmem:[#allocation7 + $0x2c8] sm:$0xff]
        %v5594 = vld [vmem:[#allocation7 + $0x2d0] sm:$0xff]
        %v5595 = vld [vmem:[#allocation7 + $0x2d8] sm:$0xff]
        %v5596 = vld [vmem:[#allocation7 + $0x2e0] sm:$0xff]
        %v5597 = vld [vmem:[#allocation7 + $0x2e8] sm:$0xff]
        %v5598 = vld [vmem:[#allocation7 + $0x2f0] sm:$0xff]
        %v5599 = vld [vmem:[#allocation7 + $0x2f8] sm:$0xff]
        %v5600 = vld [vmem:[#allocation7 + $0x300] sm:$0xff]
        %v5601 = vld [vmem:[#allocation7 + $0x308] sm:$0xff]
        %v5602 = vld [vmem:[#allocation7 + $0x310] sm:$0xff]
        %v5603 = vld [vmem:[#allocation7 + $0x318] sm:$0xff]
        %v5604 = vld [vmem:[#allocation7 + $0x320] sm:$0xff]
        %v5605 = vld [vmem:[#allocation7 + $0x328] sm:$0xff]
        %v5606 = vld [vmem:[#allocation7 + $0x330] sm:$0xff]
        %v5607 = vld [vmem:[#allocation7 + $0x338] sm:$0xff]
        %v5608 = vld [vmem:[#allocation7 + $0x340] sm:$0xff]
        %v5609 = vld [vmem:[#allocation7 + $0x348] sm:$0xff]
        %v5610 = vld [vmem:[#allocation7 + $0x350] sm:$0xff]
        %v5611 = vld [vmem:[#allocation7 + $0x358] sm:$0xff]
        %v5612 = vld [vmem:[#allocation7 + $0x360] sm:$0xff]
        %v5613 = vld [vmem:[#allocation7 + $0x368] sm:$0xff]
        %v5614 = vld [vmem:[#allocation7 + $0x370] sm:$0xff]
        %v5615 = vld [vmem:[#allocation7 + $0x378] sm:$0xff]
        %v5616 = vld [vmem:[#allocation7 + $0x380] sm:$0xff]
        %v5617 = vld [vmem:[#allocation7 + $0x388] sm:$0xff]
        %v5618 = vld [vmem:[#allocation7 + $0x390] sm:$0xff]
        %v5619 = vld [vmem:[#allocation7 + $0x398] sm:$0xff]
        %v5620 = vld [vmem:[#allocation7 + $0x3a0] sm:$0xff]
        %v5621 = vld [vmem:[#allocation7 + $0x3a8] sm:$0xff]
        %v5622 = vld [vmem:[#allocation7 + $0x3b0] sm:$0xff]
        %v5623 = vld [vmem:[#allocation7 + $0x3b8] sm:$0xff]
        %v5624 = vld [vmem:[#allocation7 + $0x3c0] sm:$0xff]
        %v5625 = vld [vmem:[#allocation7 + $0x3c8] sm:$0xff]
        %v5626 = vld [vmem:[#allocation7 + $0x3d0] sm:$0xff]
        %v5627 = vld [vmem:[#allocation7 + $0x3d8] sm:$0xff]
        %v5628 = vld [vmem:[#allocation7 + $0x3e0] sm:$0xff]
        %v5629 = vld [vmem:[#allocation7 + $0x3e8] sm:$0xff]
        %v5630 = vld [vmem:[#allocation7 + $0x3f0] sm:$0xff]
        %v5631 = vld [vmem:[#allocation7 + $0x3f8] sm:$0xff]
        %v5632 = vld [vmem:[%s6] sm:$0x3]
        %v5634 = vlaneseq
        %v5635 = vshrl.u32 %v5634, 7
        %v5636 = vsub.s32 0, %v5635
        %v5637 = vrot.slane %v5632, %v5636
        %v5638 = vlaneseq
        %v5639 = vshrl.u32 %v5638, 7
        %v5640 = vsub.s32 1, %v5639
        %v5641 = vrot.slane %v5632, %v5640
        %v5772 = vunpack.c.l.b16 %v5504
        %v5773 = vunpack.c.h.b16 %v5504
        %v5774 = vunpack.c.l.b16 %v5505
        %v5775 = vunpack.c.h.b16 %v5505
        %v5776 = vunpack.c.l.b16 %v5506
        %v5777 = vunpack.c.h.b16 %v5506
        %v5778 = vunpack.c.l.b16 %v5507
        %v5779 = vunpack.c.h.b16 %v5507
        %v5780 = vunpack.c.l.b16 %v5508
        %v5781 = vunpack.c.h.b16 %v5508
        %v5782 = vunpack.c.l.b16 %v5509
        %v5783 = vunpack.c.h.b16 %v5509
        %v5784 = vunpack.c.l.b16 %v5510
        %v5785 = vunpack.c.h.b16 %v5510
        %v5786 = vunpack.c.l.b16 %v5511
        %v5787 = vunpack.c.h.b16 %v5511
        %v5788 = vunpack.c.l.b16 %v5512
        %v5789 = vunpack.c.h.b16 %v5512
        %v5790 = vunpack.c.l.b16 %v5513
        %v5791 = vunpack.c.h.b16 %v5513
        %v5792 = vunpack.c.l.b16 %v5514
        %v5793 = vunpack.c.h.b16 %v5514
        %v5794 = vunpack.c.l.b16 %v5515
        %v5795 = vunpack.c.h.b16 %v5515
        %v5796 = vunpack.c.l.b16 %v5516
        %v5797 = vunpack.c.h.b16 %v5516
        %v5798 = vunpack.c.l.b16 %v5517
        %v5799 = vunpack.c.h.b16 %v5517
        %v5800 = vunpack.c.l.b16 %v5518
        %v5801 = vunpack.c.h.b16 %v5518
        %v5802 = vunpack.c.l.b16 %v5519
        %v5803 = vunpack.c.h.b16 %v5519
        %v5804 = vunpack.c.l.b16 %v5520
        %v5805 = vunpack.c.h.b16 %v5520
        %v5806 = vunpack.c.l.b16 %v5521
        %v5807 = vunpack.c.h.b16 %v5521
        %v5808 = vunpack.c.l.b16 %v5522
        %v5809 = vunpack.c.h.b16 %v5522
        %v5810 = vunpack.c.l.b16 %v5523
        %v5811 = vunpack.c.h.b16 %v5523
        %v5812 = vunpack.c.l.b16 %v5524
        %v5813 = vunpack.c.h.b16 %v5524
        %v5814 = vunpack.c.l.b16 %v5525
        %v5815 = vunpack.c.h.b16 %v5525
        %v5816 = vunpack.c.l.b16 %v5526
        %v5817 = vunpack.c.h.b16 %v5526
        %v5818 = vunpack.c.l.b16 %v5527
        %v5819 = vunpack.c.h.b16 %v5527
        %v5820 = vunpack.c.l.b16 %v5528
        %v5821 = vunpack.c.h.b16 %v5528
        %v5822 = vunpack.c.l.b16 %v5529
        %v5823 = vunpack.c.h.b16 %v5529
        %v5824 = vunpack.c.l.b16 %v5530
        %v5825 = vunpack.c.h.b16 %v5530
        %v5826 = vunpack.c.l.b16 %v5531
        %v5827 = vunpack.c.h.b16 %v5531
        %v5828 = vunpack.c.l.b16 %v5532
        %v5829 = vunpack.c.h.b16 %v5532
        %v5830 = vunpack.c.l.b16 %v5533
        %v5831 = vunpack.c.h.b16 %v5533
        %v5832 = vunpack.c.l.b16 %v5534
        %v5833 = vunpack.c.h.b16 %v5534
        %v5834 = vunpack.c.l.b16 %v5535
        %v5835 = vunpack.c.h.b16 %v5535
        %v5836 = vunpack.c.l.b16 %v5536
        %v5837 = vunpack.c.h.b16 %v5536
        %v5838 = vunpack.c.l.b16 %v5537
        %v5839 = vunpack.c.h.b16 %v5537
        %v5840 = vunpack.c.l.b16 %v5538
        %v5841 = vunpack.c.h.b16 %v5538
        %v5842 = vunpack.c.l.b16 %v5539
        %v5843 = vunpack.c.h.b16 %v5539
        %v5844 = vunpack.c.l.b16 %v5540
        %v5845 = vunpack.c.h.b16 %v5540
        %v5846 = vunpack.c.l.b16 %v5541
        %v5847 = vunpack.c.h.b16 %v5541
        %v5848 = vunpack.c.l.b16 %v5542
        %v5849 = vunpack.c.h.b16 %v5542
        %v5850 = vunpack.c.l.b16 %v5543
        %v5851 = vunpack.c.h.b16 %v5543
        %v5852 = vunpack.c.l.b16 %v5544
        %v5853 = vunpack.c.h.b16 %v5544
        %v5854 = vunpack.c.l.b16 %v5545
        %v5855 = vunpack.c.h.b16 %v5545
        %v5856 = vunpack.c.l.b16 %v5546
        %v5857 = vunpack.c.h.b16 %v5546
        %v5858 = vunpack.c.l.b16 %v5547
        %v5859 = vunpack.c.h.b16 %v5547
        %v5860 = vunpack.c.l.b16 %v5548
        %v5861 = vunpack.c.h.b16 %v5548
        %v5862 = vunpack.c.l.b16 %v5549
        %v5863 = vunpack.c.h.b16 %v5549
        %v5864 = vunpack.c.l.b16 %v5550
        %v5865 = vunpack.c.h.b16 %v5550
        %v5866 = vunpack.c.l.b16 %v5551
        %v5867 = vunpack.c.h.b16 %v5551
        %v5868 = vunpack.c.l.b16 %v5552
        %v5869 = vunpack.c.h.b16 %v5552
        %v5870 = vunpack.c.l.b16 %v5553
        %v5871 = vunpack.c.h.b16 %v5553
        %v5872 = vunpack.c.l.b16 %v5554
        %v5873 = vunpack.c.h.b16 %v5554
        %v5874 = vunpack.c.l.b16 %v5555
        %v5875 = vunpack.c.h.b16 %v5555
        %v5876 = vunpack.c.l.b16 %v5556
        %v5877 = vunpack.c.h.b16 %v5556
        %v5878 = vunpack.c.l.b16 %v5557
        %v5879 = vunpack.c.h.b16 %v5557
        %v5880 = vunpack.c.l.b16 %v5558
        %v5881 = vunpack.c.h.b16 %v5558
        %v5882 = vunpack.c.l.b16 %v5559
        %v5883 = vunpack.c.h.b16 %v5559
        %v5884 = vunpack.c.l.b16 %v5560
        %v5885 = vunpack.c.h.b16 %v5560
        %v5886 = vunpack.c.l.b16 %v5561
        %v5887 = vunpack.c.h.b16 %v5561
        %v5888 = vunpack.c.l.b16 %v5562
        %v5889 = vunpack.c.h.b16 %v5562
        %v5890 = vunpack.c.l.b16 %v5563
        %v5891 = vunpack.c.h.b16 %v5563
        %v5892 = vunpack.c.l.b16 %v5564
        %v5893 = vunpack.c.h.b16 %v5564
        %v5894 = vunpack.c.l.b16 %v5565
        %v5895 = vunpack.c.h.b16 %v5565
        %v5896 = vunpack.c.l.b16 %v5566
        %v5897 = vunpack.c.h.b16 %v5566
        %v5898 = vunpack.c.l.b16 %v5567
        %v5899 = vunpack.c.h.b16 %v5567
        %v5900 = vunpack.c.l.b16 %v5568
        %v5901 = vunpack.c.h.b16 %v5568
        %v5902 = vunpack.c.l.b16 %v5569
        %v5903 = vunpack.c.h.b16 %v5569
        %v5904 = vunpack.c.l.b16 %v5570
        %v5905 = vunpack.c.h.b16 %v5570
        %v5906 = vunpack.c.l.b16 %v5571
        %v5907 = vunpack.c.h.b16 %v5571
        %v5908 = vunpack.c.l.b16 %v5572
        %v5909 = vunpack.c.h.b16 %v5572
        %v5910 = vunpack.c.l.b16 %v5573
        %v5911 = vunpack.c.h.b16 %v5573
        %v5912 = vunpack.c.l.b16 %v5574
        %v5913 = vunpack.c.h.b16 %v5574
        %v5914 = vunpack.c.l.b16 %v5575
        %v5915 = vunpack.c.h.b16 %v5575
        %v5916 = vunpack.c.l.b16 %v5576
        %v5917 = vunpack.c.h.b16 %v5576
        %v5918 = vunpack.c.l.b16 %v5577
        %v5919 = vunpack.c.h.b16 %v5577
        %v5920 = vunpack.c.l.b16 %v5578
        %v5921 = vunpack.c.h.b16 %v5578
        %v5922 = vunpack.c.l.b16 %v5579
        %v5923 = vunpack.c.h.b16 %v5579
        %v5924 = vunpack.c.l.b16 %v5580
        %v5925 = vunpack.c.h.b16 %v5580
        %v5926 = vunpack.c.l.b16 %v5581
        %v5927 = vunpack.c.h.b16 %v5581
        %v5928 = vunpack.c.l.b16 %v5582
        %v5929 = vunpack.c.h.b16 %v5582
        %v5930 = vunpack.c.l.b16 %v5583
        %v5931 = vunpack.c.h.b16 %v5583
        %v5932 = vunpack.c.l.b16 %v5584
        %v5933 = vunpack.c.h.b16 %v5584
        %v5934 = vunpack.c.l.b16 %v5585
        %v5935 = vunpack.c.h.b16 %v5585
        %v5936 = vunpack.c.l.b16 %v5586
        %v5937 = vunpack.c.h.b16 %v5586
        %v5938 = vunpack.c.l.b16 %v5587
        %v5939 = vunpack.c.h.b16 %v5587
        %v5940 = vunpack.c.l.b16 %v5588
        %v5941 = vunpack.c.h.b16 %v5588
        %v5942 = vunpack.c.l.b16 %v5589
        %v5943 = vunpack.c.h.b16 %v5589
        %v5944 = vunpack.c.l.b16 %v5590
        %v5945 = vunpack.c.h.b16 %v5590
        %v5946 = vunpack.c.l.b16 %v5591
        %v5947 = vunpack.c.h.b16 %v5591
        %v5948 = vunpack.c.l.b16 %v5592
        %v5949 = vunpack.c.h.b16 %v5592
        %v5950 = vunpack.c.l.b16 %v5593
        %v5951 = vunpack.c.h.b16 %v5593
        %v5952 = vunpack.c.l.b16 %v5594
        %v5953 = vunpack.c.h.b16 %v5594
        %v5954 = vunpack.c.l.b16 %v5595
        %v5955 = vunpack.c.h.b16 %v5595
        %v5956 = vunpack.c.l.b16 %v5596
        %v5957 = vunpack.c.h.b16 %v5596
        %v5958 = vunpack.c.l.b16 %v5597
        %v5959 = vunpack.c.h.b16 %v5597
        %v5960 = vunpack.c.l.b16 %v5598
        %v5961 = vunpack.c.h.b16 %v5598
        %v5962 = vunpack.c.l.b16 %v5599
        %v5963 = vunpack.c.h.b16 %v5599
        %v5964 = vunpack.c.l.b16 %v5600
        %v5965 = vunpack.c.h.b16 %v5600
        %v5966 = vunpack.c.l.b16 %v5601
        %v5967 = vunpack.c.h.b16 %v5601
        %v5968 = vunpack.c.l.b16 %v5602
        %v5969 = vunpack.c.h.b16 %v5602
        %v5970 = vunpack.c.l.b16 %v5603
        %v5971 = vunpack.c.h.b16 %v5603
        %v5972 = vunpack.c.l.b16 %v5604
        %v5973 = vunpack.c.h.b16 %v5604
        %v5974 = vunpack.c.l.b16 %v5605
        %v5975 = vunpack.c.h.b16 %v5605
        %v5976 = vunpack.c.l.b16 %v5606
        %v5977 = vunpack.c.h.b16 %v5606
        %v5978 = vunpack.c.l.b16 %v5607
        %v5979 = vunpack.c.h.b16 %v5607
        %v5980 = vunpack.c.l.b16 %v5608
        %v5981 = vunpack.c.h.b16 %v5608
        %v5982 = vunpack.c.l.b16 %v5609
        %v5983 = vunpack.c.h.b16 %v5609
        %v5984 = vunpack.c.l.b16 %v5610
        %v5985 = vunpack.c.h.b16 %v5610
        %v5986 = vunpack.c.l.b16 %v5611
        %v5987 = vunpack.c.h.b16 %v5611
        %v5988 = vunpack.c.l.b16 %v5612
        %v5989 = vunpack.c.h.b16 %v5612
        %v5990 = vunpack.c.l.b16 %v5613
        %v5991 = vunpack.c.h.b16 %v5613
        %v5992 = vunpack.c.l.b16 %v5614
        %v5993 = vunpack.c.h.b16 %v5614
        %v5994 = vunpack.c.l.b16 %v5615
        %v5995 = vunpack.c.h.b16 %v5615
        %v5996 = vunpack.c.l.b16 %v5616
        %v5997 = vunpack.c.h.b16 %v5616
        %v5998 = vunpack.c.l.b16 %v5617
        %v5999 = vunpack.c.h.b16 %v5617
        %v6000 = vunpack.c.l.b16 %v5618
        %v6001 = vunpack.c.h.b16 %v5618
        %v6002 = vunpack.c.l.b16 %v5619
        %v6003 = vunpack.c.h.b16 %v5619
        %v6004 = vunpack.c.l.b16 %v5620
        %v6005 = vunpack.c.h.b16 %v5620
        %v6006 = vunpack.c.l.b16 %v5621
        %v6007 = vunpack.c.h.b16 %v5621
        %v6008 = vunpack.c.l.b16 %v5622
        %v6009 = vunpack.c.h.b16 %v5622
        %v6010 = vunpack.c.l.b16 %v5623
        %v6011 = vunpack.c.h.b16 %v5623
        %v6012 = vunpack.c.l.b16 %v5624
        %v6013 = vunpack.c.h.b16 %v5624
        %v6014 = vunpack.c.l.b16 %v5625
        %v6015 = vunpack.c.h.b16 %v5625
        %v6016 = vunpack.c.l.b16 %v5626
        %v6017 = vunpack.c.h.b16 %v5626
        %v6018 = vunpack.c.l.b16 %v5627
        %v6019 = vunpack.c.h.b16 %v5627
        %v6020 = vunpack.c.l.b16 %v5628
        %v6021 = vunpack.c.h.b16 %v5628
        %v6022 = vunpack.c.l.b16 %v5629
        %v6023 = vunpack.c.h.b16 %v5629
        %v6024 = vunpack.c.l.b16 %v5630
        %v6025 = vunpack.c.h.b16 %v5630
        %v6026 = vunpack.c.l.b16 %v5631
        %v6027 = vunpack.c.h.b16 %v5631
        %v6028 = vpack.c.b16 %v5774, %v5772
        %v6029 = vpack.c.b16 %v5775, %v5773
        %v6030 = vpack.c.b16 %v5778, %v5776
        %v6031 = vpack.c.b16 %v5779, %v5777
        %v6032 = vpack.c.b16 %v5782, %v5780
        %v6033 = vpack.c.b16 %v5783, %v5781
        %v6034 = vpack.c.b16 %v5786, %v5784
        %v6035 = vpack.c.b16 %v5787, %v5785
        %v6036 = vpack.c.b16 %v5790, %v5788
        %v6037 = vpack.c.b16 %v5791, %v5789
        %v6038 = vpack.c.b16 %v5794, %v5792
        %v6039 = vpack.c.b16 %v5795, %v5793
        %v6040 = vpack.c.b16 %v5798, %v5796
        %v6041 = vpack.c.b16 %v5799, %v5797
        %v6042 = vpack.c.b16 %v5802, %v5800
        %v6043 = vpack.c.b16 %v5803, %v5801
        %v6044 = vpack.c.b16 %v5806, %v5804
        %v6045 = vpack.c.b16 %v5807, %v5805
        %v6046 = vpack.c.b16 %v5810, %v5808
        %v6047 = vpack.c.b16 %v5811, %v5809
        %v6048 = vpack.c.b16 %v5814, %v5812
        %v6049 = vpack.c.b16 %v5815, %v5813
        %v6050 = vpack.c.b16 %v5818, %v5816
        %v6051 = vpack.c.b16 %v5819, %v5817
        %v6052 = vpack.c.b16 %v5822, %v5820
        %v6053 = vpack.c.b16 %v5823, %v5821
        %v6054 = vpack.c.b16 %v5826, %v5824
        %v6055 = vpack.c.b16 %v5827, %v5825
        %v6056 = vpack.c.b16 %v5830, %v5828
        %v6057 = vpack.c.b16 %v5831, %v5829
        %v6058 = vpack.c.b16 %v5834, %v5832
        %v6059 = vpack.c.b16 %v5835, %v5833
        %v6060 = vpack.c.b16 %v5838, %v5836
        %v6061 = vpack.c.b16 %v5839, %v5837
        %v6062 = vpack.c.b16 %v5842, %v5840
        %v6063 = vpack.c.b16 %v5843, %v5841
        %v6064 = vpack.c.b16 %v5846, %v5844
        %v6065 = vpack.c.b16 %v5847, %v5845
        %v6066 = vpack.c.b16 %v5850, %v5848
        %v6067 = vpack.c.b16 %v5851, %v5849
        %v6068 = vpack.c.b16 %v5854, %v5852
        %v6069 = vpack.c.b16 %v5855, %v5853
        %v6070 = vpack.c.b16 %v5858, %v5856
        %v6071 = vpack.c.b16 %v5859, %v5857
        %v6072 = vpack.c.b16 %v5862, %v5860
        %v6073 = vpack.c.b16 %v5863, %v5861
        %v6074 = vpack.c.b16 %v5866, %v5864
        %v6075 = vpack.c.b16 %v5867, %v5865
        %v6076 = vpack.c.b16 %v5870, %v5868
        %v6077 = vpack.c.b16 %v5871, %v5869
        %v6078 = vpack.c.b16 %v5874, %v5872
        %v6079 = vpack.c.b16 %v5875, %v5873
        %v6080 = vpack.c.b16 %v5878, %v5876
        %v6081 = vpack.c.b16 %v5879, %v5877
        %v6082 = vpack.c.b16 %v5882, %v5880
        %v6083 = vpack.c.b16 %v5883, %v5881
        %v6084 = vpack.c.b16 %v5886, %v5884
        %v6085 = vpack.c.b16 %v5887, %v5885
        %v6086 = vpack.c.b16 %v5890, %v5888
        %v6087 = vpack.c.b16 %v5891, %v5889
        %v6088 = vpack.c.b16 %v5894, %v5892
        %v6089 = vpack.c.b16 %v5895, %v5893
        %v6090 = vpack.c.b16 %v5898, %v5896
        %v6091 = vpack.c.b16 %v5899, %v5897
        %v6092 = vpack.c.b16 %v5902, %v5900
        %v6093 = vpack.c.b16 %v5903, %v5901
        %v6094 = vpack.c.b16 %v5906, %v5904
        %v6095 = vpack.c.b16 %v5907, %v5905
        %v6096 = vpack.c.b16 %v5910, %v5908
        %v6097 = vpack.c.b16 %v5911, %v5909
        %v6098 = vpack.c.b16 %v5914, %v5912
        %v6099 = vpack.c.b16 %v5915, %v5913
        %v6100 = vpack.c.b16 %v5918, %v5916
        %v6101 = vpack.c.b16 %v5919, %v5917
        %v6102 = vpack.c.b16 %v5922, %v5920
        %v6103 = vpack.c.b16 %v5923, %v5921
        %v6104 = vpack.c.b16 %v5926, %v5924
        %v6105 = vpack.c.b16 %v5927, %v5925
        %v6106 = vpack.c.b16 %v5930, %v5928
        %v6107 = vpack.c.b16 %v5931, %v5929
        %v6108 = vpack.c.b16 %v5934, %v5932
        %v6109 = vpack.c.b16 %v5935, %v5933
        %v6110 = vpack.c.b16 %v5938, %v5936
        %v6111 = vpack.c.b16 %v5939, %v5937
        %v6112 = vpack.c.b16 %v5942, %v5940
        %v6113 = vpack.c.b16 %v5943, %v5941
        %v6114 = vpack.c.b16 %v5946, %v5944
        %v6115 = vpack.c.b16 %v5947, %v5945
        %v6116 = vpack.c.b16 %v5950, %v5948
        %v6117 = vpack.c.b16 %v5951, %v5949
        %v6118 = vpack.c.b16 %v5954, %v5952
        %v6119 = vpack.c.b16 %v5955, %v5953
        %v6120 = vpack.c.b16 %v5958, %v5956
        %v6121 = vpack.c.b16 %v5959, %v5957
        %v6122 = vpack.c.b16 %v5962, %v5960
        %v6123 = vpack.c.b16 %v5963, %v5961
        %v6124 = vpack.c.b16 %v5966, %v5964
        %v6125 = vpack.c.b16 %v5967, %v5965
        %v6126 = vpack.c.b16 %v5970, %v5968
        %v6127 = vpack.c.b16 %v5971, %v5969
        %v6128 = vpack.c.b16 %v5974, %v5972
        %v6129 = vpack.c.b16 %v5975, %v5973
        %v6130 = vpack.c.b16 %v5978, %v5976
        %v6131 = vpack.c.b16 %v5979, %v5977
        %v6132 = vpack.c.b16 %v5982, %v5980
        %v6133 = vpack.c.b16 %v5983, %v5981
        %v6134 = vpack.c.b16 %v5986, %v5984
        %v6135 = vpack.c.b16 %v5987, %v5985
        %v6136 = vpack.c.b16 %v5990, %v5988
        %v6137 = vpack.c.b16 %v5991, %v5989
        %v6138 = vpack.c.b16 %v5994, %v5992
        %v6139 = vpack.c.b16 %v5995, %v5993
        %v6140 = vpack.c.b16 %v5998, %v5996
        %v6141 = vpack.c.b16 %v5999, %v5997
        %v6142 = vpack.c.b16 %v6002, %v6000
        %v6143 = vpack.c.b16 %v6003, %v6001
        %v6144 = vpack.c.b16 %v6006, %v6004
        %v6145 = vpack.c.b16 %v6007, %v6005
        %v6146 = vpack.c.b16 %v6010, %v6008
        %v6147 = vpack.c.b16 %v6011, %v6009
        %v6148 = vpack.c.b16 %v6014, %v6012
        %v6149 = vpack.c.b16 %v6015, %v6013
        %v6150 = vpack.c.b16 %v6018, %v6016
        %v6151 = vpack.c.b16 %v6019, %v6017
        %v6152 = vpack.c.b16 %v6022, %v6020
        %v6153 = vpack.c.b16 %v6023, %v6021
        %v6154 = vpack.c.b16 %v6026, %v6024
        %v6155 = vpack.c.b16 %v6027, %v6025
        %6284 = vmatprep.subr.bf16.mxu0 %v6029
        %6285 = vmatpush1.bf16.msra.mxu0 %v6028
        %6286 = vmatprep.subr.bf16.mxu0 %v6031
        %6287 = vmatpush1.bf16.msra.mxu0 %v6030
        %6288 = vmatprep.subr.bf16.mxu0 %v6033
        %6289 = vmatpush1.bf16.msra.mxu0 %v6032
        %6290 = vmatprep.subr.bf16.mxu0 %v6035
        %6291 = vmatpush1.bf16.msra.mxu0 %v6034
        %6292 = vmatprep.subr.bf16.mxu0 %v6037
        %6293 = vmatpush1.bf16.msra.mxu0 %v6036
        %6294 = vmatprep.subr.bf16.mxu0 %v6039
        %6295 = vmatpush1.bf16.msra.mxu0 %v6038
        %6296 = vmatprep.subr.bf16.mxu0 %v6041
        %6297 = vmatpush1.bf16.msra.mxu0 %v6040
        %6298 = vmatprep.subr.bf16.mxu0 %v6043
        %6299 = vmatpush1.bf16.msra.mxu0 %v6042
        %6300 = vmatprep.subr.bf16.mxu0 %v6045
        %6301 = vmatpush1.bf16.msra.mxu0 %v6044
        %6302 = vmatprep.subr.bf16.mxu0 %v6047
        %6303 = vmatpush1.bf16.msra.mxu0 %v6046
        %6304 = vmatprep.subr.bf16.mxu0 %v6049
        %6305 = vmatpush1.bf16.msra.mxu0 %v6048
        %6306 = vmatprep.subr.bf16.mxu0 %v6051
        %6307 = vmatpush1.bf16.msra.mxu0 %v6050
        %6308 = vmatprep.subr.bf16.mxu0 %v6053
        %6309 = vmatpush1.bf16.msra.mxu0 %v6052
        %6310 = vmatprep.subr.bf16.mxu0 %v6055
        %6311 = vmatpush1.bf16.msra.mxu0 %v6054
        %6312 = vmatprep.subr.bf16.mxu0 %v6057
        %6313 = vmatpush1.bf16.msra.mxu0 %v6056
        %6314 = vmatprep.subr.bf16.mxu0 %v6059
        %6315 = vmatpush1.bf16.msra.mxu0 %v6058
        %6316 = vmatprep.mubr.bf16.mxu0 %v5441
        %6317 = vmatmul.mubr.bf16.gmra.mrb[0].mxu0 %v5440
        %v6318 = vpop.f32.mrb[0].mxu0
        %v6319 = vadd.f32 %v5637, %v6318
        %v6320 = vpop.f32.mrb[0].mxu0
        %v6321 = vadd.f32 %v5641, %v6320
        %v6322 = vpop.f32.mrb[0].mxu0
        %v6323 = vadd.f32 %v5637, %v6322
        %v6324 = vpop.f32.mrb[0].mxu0
        %v6325 = vadd.f32 %v5641, %v6324
        %6326 = vmatprep.mubr.bf16.mxu0 %v5449
        %6327 = vmatmul.mubr.bf16.gmra.mrb[0].mxu0 %v5448
        %v6328 = vpop.f32.mrb[0].mxu0
        %v6329 = vadd.f32 %v5637, %v6328
        %v6330 = vpop.f32.mrb[0].mxu0
        %v6331 = vadd.f32 %v5641, %v6330
        %v6332 = vpop.f32.mrb[0].mxu0
        %v6333 = vadd.f32 %v5637, %v6332
        %v6334 = vpop.f32.mrb[0].mxu0
        %v6335 = vadd.f32 %v5641, %v6334
        %6336 = vmatprep.mubr.bf16.mxu0 %v5457
        %6337 = vmatmul.mubr.bf16.gmra.mrb[0].mxu0 %v5456
        %v6338 = vpop.f32.mrb[0].mxu0
        %v6339 = vadd.f32 %v5637, %v6338
        %v6340 = vpop.f32.mrb[0].mxu0
        %v6341 = vadd.f32 %v5641, %v6340
        %v6342 = vpop.f32.mrb[0].mxu0
        %v6343 = vadd.f32 %v5637, %v6342
        %v6344 = vpop.f32.mrb[0].mxu0
        %v6345 = vadd.f32 %v5641, %v6344
        %6346 = vmatprep.mubr.bf16.mxu0 %v5465
        %6347 = vmatmul.mubr.bf16.gmra.mrb[0].mxu0 %v5464
        %v6348 = vpop.f32.mrb[0].mxu0
        %v6349 = vadd.f32 %v5637, %v6348
        %v6350 = vpop.f32.mrb[0].mxu0
        %v6351 = vadd.f32 %v5641, %v6350
        %v6352 = vpop.f32.mrb[0].mxu0
        %v6353 = vadd.f32 %v5637, %v6352
        %v6354 = vpop.f32.mrb[0].mxu0
        %v6355 = vadd.f32 %v5641, %v6354
        %6356 = vmatprep.mubr.bf16.mxu0 %v5473
        %6357 = vmatmul.mubr.bf16.gmra.mrb[0].mxu0 %v5472
        %v6358 = vpop.f32.mrb[0].mxu0
        %v6359 = vadd.f32 %v5637, %v6358
        %v6360 = vpop.f32.mrb[0].mxu0
        %v6361 = vadd.f32 %v5641, %v6360
        %v6362 = vpop.f32.mrb[0].mxu0
        %v6363 = vadd.f32 %v5637, %v6362
        %v6364 = vpop.f32.mrb[0].mxu0
        %v6365 = vadd.f32 %v5641, %v6364
        %6366 = vmatprep.mubr.bf16.mxu0 %v5481
        %6367 = vmatmul.mubr.bf16.gmra.mrb[0].mxu0 %v5480
        %v6368 = vpop.f32.mrb[0].mxu0
        %v6369 = vadd.f32 %v5637, %v6368
        %v6370 = vpop.f32.mrb[0].mxu0
        %v6371 = vadd.f32 %v5641, %v6370
        %v6372 = vpop.f32.mrb[0].mxu0
        %v6373 = vadd.f32 %v5637, %v6372
        %v6374 = vpop.f32.mrb[0].mxu0
        %v6375 = vadd.f32 %v5641, %v6374
        %6376 = vmatprep.mubr.bf16.mxu0 %v5489
        %6377 = vmatmul.mubr.bf16.gmra.mrb[0].mxu0 %v5488
        %v6378 = vpop.f32.mrb[0].mxu0
        %v6379 = vadd.f32 %v5637, %v6378
        %v6380 = vpop.f32.mrb[0].mxu0
        %v6381 = vadd.f32 %v5641, %v6380
        %v6382 = vpop.f32.mrb[0].mxu0
        %v6383 = vadd.f32 %v5637, %v6382
        %v6384 = vpop.f32.mrb[0].mxu0
        %v6385 = vadd.f32 %v5641, %v6384
        %6386 = vmatprep.mubr.bf16.mxu0 %v5497
        %6387 = vmatmul.mubr.bf16.gmra.mrb[0].mxu0 %v5496
        %v6388 = vpop.f32.mrb[0].mxu0
        %v6389 = vadd.f32 %v5637, %v6388
        %v6390 = vpop.f32.mrb[0].mxu0
        %v6391 = vadd.f32 %v5641, %v6390
        %v6392 = vpop.f32.mrb[0].mxu0
        %v6393 = vadd.f32 %v5637, %v6392
        %v6394 = vpop.f32.mrb[0].mxu0
        %v6395 = vadd.f32 %v5641, %v6394
        %6396 = vdwg.mxu0
        %6397 = vmatprep.subr.bf16.mxu0 %v6061
        %6398 = vmatpush1.bf16.msra.mxu0 %v6060
        %6399 = vmatprep.subr.bf16.mxu0 %v6063
        %6400 = vmatpush1.bf16.msra.mxu0 %v6062
        %6401 = vmatprep.subr.bf16.mxu0 %v6065
        %6402 = vmatpush1.bf16.msra.mxu0 %v6064
        %6403 = vmatprep.subr.bf16.mxu0 %v6067
        %6404 = vmatpush1.bf16.msra.mxu0 %v6066
        %6405 = vmatprep.subr.bf16.mxu0 %v6069
        %6406 = vmatpush1.bf16.msra.mxu0 %v6068
        %6407 = vmatprep.subr.bf16.mxu0 %v6071
        %6408 = vmatpush1.bf16.msra.mxu0 %v6070
        %6409 = vmatprep.subr.bf16.mxu0 %v6073
        %6410 = vmatpush1.bf16.msra.mxu0 %v6072
        %6411 = vmatprep.subr.bf16.mxu0 %v6075
        %6412 = vmatpush1.bf16.msra.mxu0 %v6074
        %6413 = vmatprep.subr.bf16.mxu0 %v6077
        %6414 = vmatpush1.bf16.msra.mxu0 %v6076
        %6415 = vmatprep.subr.bf16.mxu0 %v6079
        %6416 = vmatpush1.bf16.msra.mxu0 %v6078
        %6417 = vmatprep.subr.bf16.mxu0 %v6081
        %6418 = vmatpush1.bf16.msra.mxu0 %v6080
        %6419 = vmatprep.subr.bf16.mxu0 %v6083
        %6420 = vmatpush1.bf16.msra.mxu0 %v6082
        %6421 = vmatprep.subr.bf16.mxu0 %v6085
        %6422 = vmatpush1.bf16.msra.mxu0 %v6084
        %6423 = vmatprep.subr.bf16.mxu0 %v6087
        %6424 = vmatpush1.bf16.msra.mxu0 %v6086
        %6425 = vmatprep.subr.bf16.mxu0 %v6089
        %6426 = vmatpush1.bf16.msra.mxu0 %v6088
        %6427 = vmatprep.subr.bf16.mxu0 %v6091
        %6428 = vmatpush1.bf16.msra.mxu0 %v6090
        %6429 = vmatprep.mubr.bf16.mxu0 %v5443
        %6430 = vmatmul.mubr.bf16.gmra.mrb[0].mxu0 %v5442
        %v6431 = vpop.f32.mrb[0].mxu0
        %v6432 = vadd.f32 %v6319, %v6431
        %v6433 = vpop.f32.mrb[0].mxu0
        %v6434 = vadd.f32 %v6321, %v6433
        %v6435 = vpop.f32.mrb[0].mxu0
        %v6436 = vadd.f32 %v6323, %v6435
        %v6437 = vpop.f32.mrb[0].mxu0
        %v6438 = vadd.f32 %v6325, %v6437
        %6439 = vmatprep.mubr.bf16.mxu0 %v5451
        %6440 = vmatmul.mubr.bf16.gmra.mrb[0].mxu0 %v5450
        %v6441 = vpop.f32.mrb[0].mxu0
        %v6442 = vadd.f32 %v6329, %v6441
        %v6443 = vpop.f32.mrb[0].mxu0
        %v6444 = vadd.f32 %v6331, %v6443
        %v6445 = vpop.f32.mrb[0].mxu0
        %v6446 = vadd.f32 %v6333, %v6445
        %v6447 = vpop.f32.mrb[0].mxu0
        %v6448 = vadd.f32 %v6335, %v6447
        %6449 = vmatprep.mubr.bf16.mxu0 %v5459
        %6450 = vmatmul.mubr.bf16.gmra.mrb[0].mxu0 %v5458
        %v6451 = vpop.f32.mrb[0].mxu0
        %v6452 = vadd.f32 %v6339, %v6451
        %v6453 = vpop.f32.mrb[0].mxu0
        %v6454 = vadd.f32 %v6341, %v6453
        %v6455 = vpop.f32.mrb[0].mxu0
        %v6456 = vadd.f32 %v6343, %v6455
        %v6457 = vpop.f32.mrb[0].mxu0
        %v6458 = vadd.f32 %v6345, %v6457
        %6459 = vmatprep.mubr.bf16.mxu0 %v5467
        %6460 = vmatmul.mubr.bf16.gmra.mrb[0].mxu0 %v5466
        %v6461 = vpop.f32.mrb[0].mxu0
        %v6462 = vadd.f32 %v6349, %v6461
        %v6463 = vpop.f32.mrb[0].mxu0
        %v6464 = vadd.f32 %v6351, %v6463
        %v6465 = vpop.f32.mrb[0].mxu0
        %v6466 = vadd.f32 %v6353, %v6465
        %v6467 = vpop.f32.mrb[0].mxu0
        %v6468 = vadd.f32 %v6355, %v6467
        %6469 = vmatprep.mubr.bf16.mxu0 %v5475
        %6470 = vmatmul.mubr.bf16.gmra.mrb[0].mxu0 %v5474
        %v6471 = vpop.f32.mrb[0].mxu0
        %v6472 = vadd.f32 %v6359, %v6471
        %v6473 = vpop.f32.mrb[0].mxu0
        %v6474 = vadd.f32 %v6361, %v6473
        %v6475 = vpop.f32.mrb[0].mxu0
        %v6476 = vadd.f32 %v6363, %v6475
        %v6477 = vpop.f32.mrb[0].mxu0
        %v6478 = vadd.f32 %v6365, %v6477
        %6479 = vmatprep.mubr.bf16.mxu0 %v5483
        %6480 = vmatmul.mubr.bf16.gmra.mrb[0].mxu0 %v5482
        %v6481 = vpop.f32.mrb[0].mxu0
        %v6482 = vadd.f32 %v6369, %v6481
        %v6483 = vpop.f32.mrb[0].mxu0
        %v6484 = vadd.f32 %v6371, %v6483
        %v6485 = vpop.f32.mrb[0].mxu0
        %v6486 = vadd.f32 %v6373, %v6485
        %v6487 = vpop.f32.mrb[0].mxu0
        %v6488 = vadd.f32 %v6375, %v6487
        %6489 = vmatprep.mubr.bf16.mxu0 %v5491
        %6490 = vmatmul.mubr.bf16.gmra.mrb[0].mxu0 %v5490
        %v6491 = vpop.f32.mrb[0].mxu0
        %v6492 = vadd.f32 %v6379, %v6491
        %v6493 = vpop.f32.mrb[0].mxu0
        %v6494 = vadd.f32 %v6381, %v6493
        %v6495 = vpop.f32.mrb[0].mxu0
        %v6496 = vadd.f32 %v6383, %v6495
        %v6497 = vpop.f32.mrb[0].mxu0
        %v6498 = vadd.f32 %v6385, %v6497
        %6499 = vmatprep.mubr.bf16.mxu0 %v5499
        %6500 = vmatmul.mubr.bf16.gmra.mrb[0].mxu0 %v5498
        %v6501 = vpop.f32.mrb[0].mxu0
        %v6502 = vadd.f32 %v6389, %v6501
        %v6503 = vpop.f32.mrb[0].mxu0
        %v6504 = vadd.f32 %v6391, %v6503
        %v6505 = vpop.f32.mrb[0].mxu0
        %v6506 = vadd.f32 %v6393, %v6505
        %v6507 = vpop.f32.mrb[0].mxu0
        %v6508 = vadd.f32 %v6395, %v6507
        %6509 = vdwg.mxu0
        %6510 = vmatprep.subr.bf16.mxu0 %v6093
        %6511 = vmatpush1.bf16.msra.mxu0 %v6092
        %6512 = vmatprep.subr.bf16.mxu0 %v6095
        %6513 = vmatpush1.bf16.msra.mxu0 %v6094
        %6514 = vmatprep.subr.bf16.mxu0 %v6097
        %6515 = vmatpush1.bf16.msra.mxu0 %v6096
        %6516 = vmatprep.subr.bf16.mxu0 %v6099
        %6517 = vmatpush1.bf16.msra.mxu0 %v6098
        %6518 = vmatprep.subr.bf16.mxu0 %v6101
        %6519 = vmatpush1.bf16.msra.mxu0 %v6100
        %6520 = vmatprep.subr.bf16.mxu0 %v6103
        %6521 = vmatpush1.bf16.msra.mxu0 %v6102
        %6522 = vmatprep.subr.bf16.mxu0 %v6105
        %6523 = vmatpush1.bf16.msra.mxu0 %v6104
        %6524 = vmatprep.subr.bf16.mxu0 %v6107
        %6525 = vmatpush1.bf16.msra.mxu0 %v6106
        %6526 = vmatprep.subr.bf16.mxu0 %v6109
        %6527 = vmatpush1.bf16.msra.mxu0 %v6108
        %6528 = vmatprep.subr.bf16.mxu0 %v6111
        %6529 = vmatpush1.bf16.msra.mxu0 %v6110
        %6530 = vmatprep.subr.bf16.mxu0 %v6113
        %6531 = vmatpush1.bf16.msra.mxu0 %v6112
        %6532 = vmatprep.subr.bf16.mxu0 %v6115
        %6533 = vmatpush1.bf16.msra.mxu0 %v6114
        %6534 = vmatprep.subr.bf16.mxu0 %v6117
        %6535 = vmatpush1.bf16.msra.mxu0 %v6116
        %6536 = vmatprep.subr.bf16.mxu0 %v6119
        %6537 = vmatpush1.bf16.msra.mxu0 %v6118
        %6538 = vmatprep.subr.bf16.mxu0 %v6121
        %6539 = vmatpush1.bf16.msra.mxu0 %v6120
        %6540 = vmatprep.subr.bf16.mxu0 %v6123
        %6541 = vmatpush1.bf16.msra.mxu0 %v6122
        %6542 = vmatprep.mubr.bf16.mxu0 %v5445
        %6543 = vmatmul.mubr.bf16.gmra.mrb[0].mxu0 %v5444
        %v6544 = vpop.f32.mrb[0].mxu0
        %v6545 = vadd.f32 %v6432, %v6544
        %v6546 = vpop.f32.mrb[0].mxu0
        %v6547 = vadd.f32 %v6434, %v6546
        %v6548 = vpop.f32.mrb[0].mxu0
        %v6549 = vadd.f32 %v6436, %v6548
        %v6550 = vpop.f32.mrb[0].mxu0
        %v6551 = vadd.f32 %v6438, %v6550
        %6552 = vmatprep.mubr.bf16.mxu0 %v5453
        %6553 = vmatmul.mubr.bf16.gmra.mrb[0].mxu0 %v5452
        %v6554 = vpop.f32.mrb[0].mxu0
        %v6555 = vadd.f32 %v6442, %v6554
        %v6556 = vpop.f32.mrb[0].mxu0
        %v6557 = vadd.f32 %v6444, %v6556
        %v6558 = vpop.f32.mrb[0].mxu0
        %v6559 = vadd.f32 %v6446, %v6558
        %v6560 = vpop.f32.mrb[0].mxu0
        %v6561 = vadd.f32 %v6448, %v6560
        %6562 = vmatprep.mubr.bf16.mxu0 %v5461
        %6563 = vmatmul.mubr.bf16.gmra.mrb[0].mxu0 %v5460
        %v6564 = vpop.f32.mrb[0].mxu0
        %v6565 = vadd.f32 %v6452, %v6564
        %v6566 = vpop.f32.mrb[0].mxu0
        %v6567 = vadd.f32 %v6454, %v6566
        %v6568 = vpop.f32.mrb[0].mxu0
        %v6569 = vadd.f32 %v6456, %v6568
        %v6570 = vpop.f32.mrb[0].mxu0
        %v6571 = vadd.f32 %v6458, %v6570
        %6572 = vmatprep.mubr.bf16.mxu0 %v5469
        %6573 = vmatmul.mubr.bf16.gmra.mrb[0].mxu0 %v5468
        %v6574 = vpop.f32.mrb[0].mxu0
        %v6575 = vadd.f32 %v6462, %v6574
        %v6576 = vpop.f32.mrb[0].mxu0
        %v6577 = vadd.f32 %v6464, %v6576
        %v6578 = vpop.f32.mrb[0].mxu0
        %v6579 = vadd.f32 %v6466, %v6578
        %v6580 = vpop.f32.mrb[0].mxu0
        %v6581 = vadd.f32 %v6468, %v6580
        %6582 = vmatprep.mubr.bf16.mxu0 %v5477
        %6583 = vmatmul.mubr.bf16.gmra.mrb[0].mxu0 %v5476
        %v6584 = vpop.f32.mrb[0].mxu0
        %v6585 = vadd.f32 %v6472, %v6584
        %v6586 = vpop.f32.mrb[0].mxu0
        %v6587 = vadd.f32 %v6474, %v6586
        %v6588 = vpop.f32.mrb[0].mxu0
        %v6589 = vadd.f32 %v6476, %v6588
        %v6590 = vpop.f32.mrb[0].mxu0
        %v6591 = vadd.f32 %v6478, %v6590
        %6592 = vmatprep.mubr.bf16.mxu0 %v5485
        %6593 = vmatmul.mubr.bf16.gmra.mrb[0].mxu0 %v5484
        %v6594 = vpop.f32.mrb[0].mxu0
        %v6595 = vadd.f32 %v6482, %v6594
        %v6596 = vpop.f32.mrb[0].mxu0
        %v6597 = vadd.f32 %v6484, %v6596
        %v6598 = vpop.f32.mrb[0].mxu0
        %v6599 = vadd.f32 %v6486, %v6598
        %v6600 = vpop.f32.mrb[0].mxu0
        %v6601 = vadd.f32 %v6488, %v6600
        %6602 = vmatprep.mubr.bf16.mxu0 %v5493
        %6603 = vmatmul.mubr.bf16.gmra.mrb[0].mxu0 %v5492
        %v6604 = vpop.f32.mrb[0].mxu0
        %v6605 = vadd.f32 %v6492, %v6604
        %v6606 = vpop.f32.mrb[0].mxu0
        %v6607 = vadd.f32 %v6494, %v6606
        %v6608 = vpop.f32.mrb[0].mxu0
        %v6609 = vadd.f32 %v6496, %v6608
        %v6610 = vpop.f32.mrb[0].mxu0
        %v6611 = vadd.f32 %v6498, %v6610
        %6612 = vmatprep.mubr.bf16.mxu0 %v5501
        %6613 = vmatmul.mubr.bf16.gmra.mrb[0].mxu0 %v5500
        %v6614 = vpop.f32.mrb[0].mxu0
        %v6615 = vadd.f32 %v6502, %v6614
        %v6616 = vpop.f32.mrb[0].mxu0
        %v6617 = vadd.f32 %v6504, %v6616
        %v6618 = vpop.f32.mrb[0].mxu0
        %v6619 = vadd.f32 %v6506, %v6618
        %v6620 = vpop.f32.mrb[0].mxu0
        %v6621 = vadd.f32 %v6508, %v6620
        %6622 = vdwg.mxu0
        %6623 = vmatprep.subr.bf16.mxu0 %v6125
        %6624 = vmatpush1.bf16.msra.mxu0 %v6124
        %6625 = vmatprep.subr.bf16.mxu0 %v6127
        %6626 = vmatpush1.bf16.msra.mxu0 %v6126
        %6627 = vmatprep.subr.bf16.mxu0 %v6129
        %6628 = vmatpush1.bf16.msra.mxu0 %v6128
        %6629 = vmatprep.subr.bf16.mxu0 %v6131
        %6630 = vmatpush1.bf16.msra.mxu0 %v6130
        %6631 = vmatprep.subr.bf16.mxu0 %v6133
        %6632 = vmatpush1.bf16.msra.mxu0 %v6132
        %6633 = vmatprep.subr.bf16.mxu0 %v6135
        %6634 = vmatpush1.bf16.msra.mxu0 %v6134
        %6635 = vmatprep.subr.bf16.mxu0 %v6137
        %6636 = vmatpush1.bf16.msra.mxu0 %v6136
        %6637 = vmatprep.subr.bf16.mxu0 %v6139
        %6638 = vmatpush1.bf16.msra.mxu0 %v6138
        %6639 = vmatprep.subr.bf16.mxu0 %v6141
        %6640 = vmatpush1.bf16.msra.mxu0 %v6140
        %6641 = vmatprep.subr.bf16.mxu0 %v6143
        %6642 = vmatpush1.bf16.msra.mxu0 %v6142
        %6643 = vmatprep.subr.bf16.mxu0 %v6145
        %6644 = vmatpush1.bf16.msra.mxu0 %v6144
        %6645 = vmatprep.subr.bf16.mxu0 %v6147
        %6646 = vmatpush1.bf16.msra.mxu0 %v6146
        %6647 = vmatprep.subr.bf16.mxu0 %v6149
        %6648 = vmatpush1.bf16.msra.mxu0 %v6148
        %6649 = vmatprep.subr.bf16.mxu0 %v6151
        %6650 = vmatpush1.bf16.msra.mxu0 %v6150
        %6651 = vmatprep.subr.bf16.mxu0 %v6153
        %6652 = vmatpush1.bf16.msra.mxu0 %v6152
        %6653 = vmatprep.subr.bf16.mxu0 %v6155
        %6654 = vmatpush1.bf16.msra.mxu0 %v6154
        %6655 = vmatprep.mubr.bf16.mxu0 %v5447
        %6656 = vmatmul.mubr.bf16.gmra.mrb[0].mxu0 %v5446
        %v6657 = vpop.f32.mrb[0].mxu0
        %v6658 = vadd.f32 %v6545, %v6657
        %v6659 = vpop.f32.mrb[0].mxu0
        %v6660 = vadd.f32 %v6547, %v6659
        %v6661 = vpop.f32.mrb[0].mxu0
        %v6662 = vadd.f32 %v6549, %v6661
        %v6663 = vpop.f32.mrb[0].mxu0
        %v6664 = vadd.f32 %v6551, %v6663
        %6665 = vmatprep.mubr.bf16.mxu0 %v5455
        %6666 = vmatmul.mubr.bf16.gmra.mrb[0].mxu0 %v5454
        %v6667 = vpop.f32.mrb[0].mxu0
        %v6668 = vadd.f32 %v6555, %v6667
        %v6669 = vpop.f32.mrb[0].mxu0
        %v6670 = vadd.f32 %v6557, %v6669
        %v6671 = vpop.f32.mrb[0].mxu0
        %v6672 = vadd.f32 %v6559, %v6671
        %v6673 = vpop.f32.mrb[0].mxu0
        %v6674 = vadd.f32 %v6561, %v6673
        %6675 = vmatprep.mubr.bf16.mxu0 %v5463
        %6676 = vmatmul.mubr.bf16.gmra.mrb[0].mxu0 %v5462
        %v6677 = vpop.f32.mrb[0].mxu0
        %v6678 = vadd.f32 %v6565, %v6677
        %v6679 = vpop.f32.mrb[0].mxu0
        %v6680 = vadd.f32 %v6567, %v6679
        %v6681 = vpop.f32.mrb[0].mxu0
        %v6682 = vadd.f32 %v6569, %v6681
        %v6683 = vpop.f32.mrb[0].mxu0
        %v6684 = vadd.f32 %v6571, %v6683
        %6685 = vmatprep.mubr.bf16.mxu0 %v5471
        %6686 = vmatmul.mubr.bf16.gmra.mrb[0].mxu0 %v5470
        %v6687 = vpop.f32.mrb[0].mxu0
        %v6688 = vadd.f32 %v6575, %v6687
        %v6689 = vpop.f32.mrb[0].mxu0
        %v6690 = vadd.f32 %v6577, %v6689
        %v6691 = vpop.f32.mrb[0].mxu0
        %v6692 = vadd.f32 %v6579, %v6691
        %v6693 = vpop.f32.mrb[0].mxu0
        %v6694 = vadd.f32 %v6581, %v6693
        %6695 = vmatprep.mubr.bf16.mxu0 %v5479
        %6696 = vmatmul.mubr.bf16.gmra.mrb[0].mxu0 %v5478
        %v6697 = vpop.f32.mrb[0].mxu0
        %v6698 = vadd.f32 %v6585, %v6697
        %v6699 = vpop.f32.mrb[0].mxu0
        %v6700 = vadd.f32 %v6587, %v6699
        %v6701 = vpop.f32.mrb[0].mxu0
        %v6702 = vadd.f32 %v6589, %v6701
        %v6703 = vpop.f32.mrb[0].mxu0
        %v6704 = vadd.f32 %v6591, %v6703
        %6705 = vmatprep.mubr.bf16.mxu0 %v5487
        %6706 = vmatmul.mubr.bf16.gmra.mrb[0].mxu0 %v5486
        %v6707 = vpop.f32.mrb[0].mxu0
        %v6708 = vadd.f32 %v6595, %v6707
        %v6709 = vpop.f32.mrb[0].mxu0
        %v6710 = vadd.f32 %v6597, %v6709
        %v6711 = vpop.f32.mrb[0].mxu0
        %v6712 = vadd.f32 %v6599, %v6711
        %v6713 = vpop.f32.mrb[0].mxu0
        %v6714 = vadd.f32 %v6601, %v6713
        %6715 = vmatprep.mubr.bf16.mxu0 %v5495
        %6716 = vmatmul.mubr.bf16.gmra.mrb[0].mxu0 %v5494
        %v6717 = vpop.f32.mrb[0].mxu0
        %v6718 = vadd.f32 %v6605, %v6717
        %v6719 = vpop.f32.mrb[0].mxu0
        %v6720 = vadd.f32 %v6607, %v6719
        %v6721 = vpop.f32.mrb[0].mxu0
        %v6722 = vadd.f32 %v6609, %v6721
        %v6723 = vpop.f32.mrb[0].mxu0
        %v6724 = vadd.f32 %v6611, %v6723
        %6725 = vmatprep.mubr.bf16.mxu0 %v5503
        %6726 = vmatmul.mubr.bf16.gmra.mrb[0].mxu0 %v5502
        %v6727 = vpop.f32.mrb[0].mxu0
        %v6728 = vadd.f32 %v6615, %v6727
        %v6729 = vpop.f32.mrb[0].mxu0
        %v6730 = vadd.f32 %v6617, %v6729
        %v6731 = vpop.f32.mrb[0].mxu0
        %v6732 = vadd.f32 %v6619, %v6731
        %v6733 = vpop.f32.mrb[0].mxu0
        %v6734 = vadd.f32 %v6621, %v6733
        %6735 = vdwg.mxu0
        %6736 = vst [vmem:[%s326] sm:$0xff] %v6658
        %6737 = vst [vmem:[%s326 + $0x8] sm:$0xff] %v6660
        %6738 = vst [vmem:[%s326 + $0x10] sm:$0xff] %v6662
        %6739 = vst [vmem:[%s326 + $0x18] sm:$0xff] %v6664
        %6740 = vst [vmem:[%s326 + $0x20] sm:$0xff] %v6668
        %6741 = vst [vmem:[%s326 + $0x28] sm:$0xff] %v6670
        %6742 = vst [vmem:[%s326 + $0x30] sm:$0xff] %v6672
        %6743 = vst [vmem:[%s326 + $0x38] sm:$0xff] %v6674
        %6744 = vst [vmem:[%s326 + $0x40] sm:$0xff] %v6678
        %6745 = vst [vmem:[%s326 + $0x48] sm:$0xff] %v6680
        %6746 = vst [vmem:[%s326 + $0x50] sm:$0xff] %v6682
        %6747 = vst [vmem:[%s326 + $0x58] sm:$0xff] %v6684
        %6748 = vst [vmem:[%s326 + $0x60] sm:$0xff] %v6688
        %6749 = vst [vmem:[%s326 + $0x68] sm:$0xff] %v6690
        %6750 = vst [vmem:[%s326 + $0x70] sm:$0xff] %v6692
        %6751 = vst [vmem:[%s326 + $0x78] sm:$0xff] %v6694
        %6752 = vst [vmem:[%s326 + $0x80] sm:$0xff] %v6698
        %6753 = vst [vmem:[%s326 + $0x88] sm:$0xff] %v6700
        %6754 = vst [vmem:[%s326 + $0x90] sm:$0xff] %v6702
        %6755 = vst [vmem:[%s326 + $0x98] sm:$0xff] %v6704
        %6756 = vst [vmem:[%s326 + $0xa0] sm:$0xff] %v6708
        %6757 = vst [vmem:[%s326 + $0xa8] sm:$0xff] %v6710
        %6758 = vst [vmem:[%s326 + $0xb0] sm:$0xff] %v6712
        %6759 = vst [vmem:[%s326 + $0xb8] sm:$0xff] %v6714
        %6760 = vst [vmem:[%s326 + $0xc0] sm:$0xff] %v6718
        %6761 = vst [vmem:[%s326 + $0xc8] sm:$0xff] %v6720
        %6762 = vst [vmem:[%s326 + $0xd0] sm:$0xff] %v6722
        %6763 = vst [vmem:[%s326 + $0xd8] sm:$0xff] %v6724
        %6764 = vst [vmem:[%s326 + $0xe0] sm:$0xff] %v6728
        %6765 = vst [vmem:[%s326 + $0xe8] sm:$0xff] %v6730
        %6766 = vst [vmem:[%s326 + $0xf0] sm:$0xff] %v6732
        %6767 = vst [vmem:[%s326 + $0xf8] sm:$0xff] %v6734
        %s6768 = sand.u32 %s185, 1
        %s6769 = scalar_lea.sflag [#allocation4], %s6768
        %s6770 = sand.u32 %s185, 1
        %s6771 = smul.addr %s6770, 256
        %s6772 = scalar_lea.vmem [#allocation8], %s6771
        // Predicated region
        $region61: #{tpu_custom_call.1} parent=47 // pred_check
          %p6773 = pneg %p195
        $region62: #{tpu_custom_call.1} parent=47 // pred_check_branch
          %6775 = sbr.rel (%p6773) target = $region64
        $region63: #{tpu_custom_call.1} parent=47 // pred_region
          %s6776 = smul.u32 16, %s25
          %s6778 = ssub.s32 4096, 4096
          %6779 = vsyncadd %s6769, %s6778
          %s6780 = smul.addr %s6776, 2
          %s6781 = smul.addr %s6780, 128
          %s6782 = scalar_lea.hbm %s7, %s6781
          %s6783 = sshll.u32 %s6772, 4
          %s6784 = int_to_ptr.vmem [resolvable:$true] %s6783
          %6789 = dma.vmem_to_hbm [thread:$0]  %s6784, 4096, %s6782, %s6769, 256, 256, 16
        $region64: #{tpu_custom_call.1} parent=47 // pred_fallthru
          _
      $region48: #{tpu_custom_call.1} parent=5 // pred_fallthru
        _
      %p6790 = scmp.le.s32.totalorder 2, %s20
      // Predicated region
      $region65: #{tpu_custom_call.1} parent=5 // pred_check
        %p6791 = pneg %p6790
      $region66: #{tpu_custom_call.1} parent=5 // pred_check_branch
        %6793 = sbr.rel (%p6791) target = $region68
      $region67: #{tpu_custom_call.1} parent=5 // pred_region
        %s6794 = ssub.s32 %s20, 2
        // Predicated region
        $region69: #{tpu_custom_call.1} parent=67 // pred_check
          %p6795 = pneg %p201
        $region70: #{tpu_custom_call.1} parent=67 // pred_check_branch
          %6797 = sbr.rel (%p6795) target = $region72
        $region71: #{tpu_custom_call.1} parent=67 // pred_region
          %s6798 = sand.u32 %s186, 1
          %s6799 = scalar_lea.sflag [#allocation4], %s6798
          %s6800 = sand.u32 %s186, 1
          %s6801 = smul.addr %s6800, 256
          %s6802 = scalar_lea.vmem [#allocation8], %s6801
          %6803 = dma.done %s6799, 4096
        $region72: #{tpu_custom_call.1} parent=67 // pred_fallthru
          _
      $region68: #{tpu_custom_call.1} parent=5 // pred_fallthru
        _
    $region6: #{tpu_custom_call.1} parent=1 // loop_footer
      %s24 = sadd.s32 1, %s20
    $region7: #{tpu_custom_call.1} parent=1 // loop_footer_branch
      %19 = sbr.rel target = $region3
    $region8: #{tpu_custom_call.1} parent=1 // loop_exit
      _
    %6804 = vsyncpa [#allocation3], 1
    %s6805 = scalar_lea.sflag [#allocation3], 1
    %6806 = vsyncpa %s6805, 1
    %6807 = vsyncpa [#allocation6], 1
    %6808 = vsyncpa [#allocation4], 1
    %s6809 = scalar_lea.sflag [#allocation4], 1
    %6810 = vsyncpa %s6809, 1

</llo_original>
